<compile_context>
chip_gen: v6e
topology: v6e:2x2x1
jax: 0.10.0
libtpu: 0.0.40
codegen_flags: <defaults>
</compile_context>

<pallas_src>
import math

import jax
import jax.numpy as jnp
from jax.experimental import pallas as pl
from jax.experimental.pallas import tpu as pltpu

_DIMS = [3, 32, 64, 128, 64, 32, 1]
_OUT_DIMS = _DIMS[1:]
# static, sublane-aligned offsets of each bias inside the packed (321, 1) slab
_B_OFFSETS = [0]
for _d in _OUT_DIMS[:-1]:
    _B_OFFSETS.append(_B_OFFSETS[-1] + _d)

_TILE_B_MAX = 4096  # lanes per grid step; multiple of 128


def _round_up(n, m):
    return ((n + m - 1) // m) * m


def _snake(x):
    # snake activation: x + sin(x)^2
    s = jnp.sin(x)
    return x + s * s


def pinn_mlp_kernel(
    x_ref,
    w1_ref, w2_ref, w3_ref, w4_ref, w5_ref, w6_ref,
    b_ref,
    o_ref,
):
    # Activations are (features, TILE_B): batch on the lane axis.
    def bias(layer):
        # static slice of the packed bias slab; offsets are multiples of 8
        return b_ref[pl.ds(_B_OFFSETS[layer], _OUT_DIMS[layer]), :]

    h = x_ref[...]  # (3, TILE_B), already f32
    h = _snake(jnp.dot(w1_ref[...], h, preferred_element_type=jnp.float32) + bias(0))
    h = _snake(jnp.dot(w2_ref[...], h, preferred_element_type=jnp.float32) + bias(1))
    h = _snake(jnp.dot(w3_ref[...], h, preferred_element_type=jnp.float32) + bias(2))
    h = _snake(jnp.dot(w4_ref[...], h, preferred_element_type=jnp.float32) + bias(3))
    h = _snake(jnp.dot(w5_ref[...], h, preferred_element_type=jnp.float32) + bias(4))
    out = jnp.dot(w6_ref[...], h, preferred_element_type=jnp.float32) + bias(5)
    # angle_in_radians = pi * tanh(output); (1, TILE_B) lane-dense store.
    o_ref[...] = (math.pi * jnp.tanh(out)).astype(o_ref.dtype)


def init_params(key):
    """Deterministic init matching torch.nn.Linear default: U(-1/sqrt(in), 1/sqrt(in)).

    Stored in torch layout: w (in, out), b (1, out). Transposition / packing for
    the kernel happens once in the wrapper.
    """
    params = []
    for i in range(len(_DIMS) - 1):
        fan_in, fan_out = _DIMS[i], _DIMS[i + 1]
        key, kw, kb = jax.random.split(key, 3)
        bound = 1.0 / math.sqrt(fan_in)
        w = jax.random.uniform(kw, (fan_in, fan_out), jnp.float32, -bound, bound)
        b = jax.random.uniform(kb, (1, fan_out), jnp.float32, -bound, bound)
        params.append((w, b))
    return params


@jax.jit
def neural_network_forward(x, params):
    batch = x.shape[0]

    # Lane tiling: 128 is the hardware minimum; for >= 256 padded lanes make
    # sure the grid has at least 2 steps so v7x can shard across TensorCores.
    b_min = _round_up(batch, 128)
    if b_min >= 256:
        tile_b = min(_TILE_B_MAX, _round_up(pl.cdiv(b_min, 2), 128))
    else:
        tile_b = b_min
    b_pad = _round_up(batch, tile_b)

    # Layout plumbing in the wrapper (runs once, never inside the kernel):
    # pad batch to a tile multiple and put it on the lane axis.
    x_t = jnp.pad(x.astype(jnp.float32), ((0, b_pad - batch), (0, 0))).T  # (3, B_pad)

    ws = [w.T for w, _ in params]                                  # (out, in)
    b_all = jnp.concatenate([b.T for _, b in params], axis=0)      # (321, 1)

    def const_spec(arr):
        # Parameters: full-array block, same block every grid step -> stays
        # resident in VMEM across the whole grid.
        return pl.BlockSpec(arr.shape, lambda i: (0, 0))

    in_specs = [pl.BlockSpec((_DIMS[0], tile_b), lambda i: (0, i))]
    in_specs += [const_spec(w) for w in ws]
    in_specs += [const_spec(b_all)]

    out_t = pl.pallas_call(
        pinn_mlp_kernel,
        out_shape=jax.ShapeDtypeStruct((1, b_pad), jnp.float32),
        grid=(b_pad // tile_b,),
        in_specs=in_specs,
        out_specs=pl.BlockSpec((1, tile_b), lambda i: (0, i)),
        compiler_params=pltpu.CompilerParams(
            dimension_semantics=("parallel",),
            vmem_limit_bytes=32 * 1024 * 1024,
        ),
    )(x_t, *ws, b_all)

    # Back to the module's (batch, 1) API shape; drop padding rows.
    return out_t.T[:batch]


def reference_forward(x, params):
    h = x
    for i, (w, b) in enumerate(params):
        h = h @ w + b
        if i < len(params) - 1:
            h = h + jnp.sin(h) ** 2
    return math.pi * jnp.tanh(h)


if __name__ == "__main__":
    key = jax.random.PRNGKey(0)
    key_x, key_x2, key_p = jax.random.split(key, 3)

    params = init_params(key_p)

    # Small batch (single 128-lane tile, grid=(1,)).
    batch = 8
    x = jax.random.normal(key_x, (batch, 3), jnp.float32)
    out = jax.block_until_ready(neural_network_forward(x, params))
    ref = reference_forward(x, params)
    assert out.shape == (batch, 1), out.shape
    assert jnp.allclose(out, ref, atol=1e-5, rtol=1e-5), (out, ref)

    # Larger, non-multiple batch (exercises the multi-step grid + padding path).
    batch2 = 300
    x2 = jax.random.normal(key_x2, (batch2, 3), jnp.float32)
    out2 = jax.block_until_ready(neural_network_forward(x2, params))
    ref2 = reference_forward(x2, params)
    assert out2.shape == (batch2, 1), out2.shape
    assert jnp.allclose(out2, ref2, atol=1e-5, rtol=1e-5)

    print("KERNEL_OK")
</pallas_src>

<mosaic_0001>
module attributes {stable_mosaic.version = 11 : i64} {
  func.func @pinn_mlp_kernel(%arg0: i32, %arg1: memref<3x128xf32, #tpu.memory_space<vmem>>, %arg2: memref<32x3xf32, #tpu.memory_space<vmem>>, %arg3: memref<64x32xf32, #tpu.memory_space<vmem>>, %arg4: memref<128x64xf32, #tpu.memory_space<vmem>>, %arg5: memref<64x128xf32, #tpu.memory_space<vmem>>, %arg6: memref<32x64xf32, #tpu.memory_space<vmem>>, %arg7: memref<1x32xf32, #tpu.memory_space<vmem>>, %arg8: memref<321x1xf32, #tpu.memory_space<vmem>>, %arg9: memref<1x128xf32, #tpu.memory_space<vmem>>) attributes {dimension_semantics = [#tpu.dimension_semantics<parallel>], iteration_bounds = array<i64: 1>, scalar_prefetch = 0 : i64, scratch_operands = 0 : i64, tpu.core_type = #tpu.core_type<tc>, window_params = [{transform_indices = @transform_0, window_bounds = array<i64: 3, 128>}, {pipeline_mode = #tpu.pipeline_mode<synchronous>, transform_indices = @transform_1, window_bounds = array<i64: 32, 3>}, {pipeline_mode = #tpu.pipeline_mode<synchronous>, transform_indices = @transform_2, window_bounds = array<i64: 64, 32>}, {pipeline_mode = #tpu.pipeline_mode<synchronous>, transform_indices = @transform_3, window_bounds = array<i64: 128, 64>}, {pipeline_mode = #tpu.pipeline_mode<synchronous>, transform_indices = @transform_4, window_bounds = array<i64: 64, 128>}, {pipeline_mode = #tpu.pipeline_mode<synchronous>, transform_indices = @transform_5, window_bounds = array<i64: 32, 64>}, {pipeline_mode = #tpu.pipeline_mode<synchronous>, transform_indices = @transform_6, window_bounds = array<i64: 1, 32>}, {pipeline_mode = #tpu.pipeline_mode<synchronous>, transform_indices = @transform_7, window_bounds = array<i64: 321, 1>}, {transform_indices = @transform_8, window_bounds = array<i64: 1, 128>}]} {
    %c0 = arith.constant 0 : index
    %c0_0 = arith.constant 0 : index
    %0 = vector.load %arg1[%c0, %c0_0] : memref<3x128xf32, #tpu.memory_space<vmem>>, vector<3x128xf32>
    %c0_1 = arith.constant 0 : index
    %c0_2 = arith.constant 0 : index
    %1 = vector.load %arg2[%c0_1, %c0_2] : memref<32x3xf32, #tpu.memory_space<vmem>>, vector<32x3xf32>
    %cst = arith.constant dense<0.000000e+00> : vector<32x128xf32>
    %2 = tpu.matmul %1, %0, %cst {dimension_numbers = #tpu.dot_dimension_numbers<[1], [0], [0], [1], [0, 0, 1, 1], [], []>} : vector<32x3xf32>, vector<3x128xf32>, vector<32x128xf32> -> vector<32x128xf32>
    %c0_3 = arith.constant 0 : index
    %c0_4 = arith.constant 0 : index
    %3 = vector.load %arg8[%c0_3, %c0_4] : memref<321x1xf32, #tpu.memory_space<vmem>>, vector<32x1xf32>
    %4 = vector.broadcast %3 : vector<32x1xf32> to vector<32x128xf32>
    %5 = arith.addf %2, %4 : vector<32x128xf32>
    %6 = math.sin %5 : vector<32x128xf32>
    %7 = arith.mulf %6, %6 : vector<32x128xf32>
    %8 = arith.addf %5, %7 : vector<32x128xf32>
    %c0_5 = arith.constant 0 : index
    %c0_6 = arith.constant 0 : index
    %9 = vector.load %arg3[%c0_5, %c0_6] : memref<64x32xf32, #tpu.memory_space<vmem>>, vector<64x32xf32>
    %cst_7 = arith.constant dense<0.000000e+00> : vector<64x128xf32>
    %10 = tpu.matmul %9, %8, %cst_7 {dimension_numbers = #tpu.dot_dimension_numbers<[1], [0], [0], [1], [0, 0, 1, 1], [], []>} : vector<64x32xf32>, vector<32x128xf32>, vector<64x128xf32> -> vector<64x128xf32>
    %c32 = arith.constant 32 : index
    %c0_8 = arith.constant 0 : index
    %11 = vector.load %arg8[%c32, %c0_8] : memref<321x1xf32, #tpu.memory_space<vmem>>, vector<64x1xf32>
    %12 = vector.broadcast %11 : vector<64x1xf32> to vector<64x128xf32>
    %13 = arith.addf %10, %12 : vector<64x128xf32>
    %14 = math.sin %13 : vector<64x128xf32>
    %15 = arith.mulf %14, %14 : vector<64x128xf32>
    %16 = arith.addf %13, %15 : vector<64x128xf32>
    %c0_9 = arith.constant 0 : index
    %c0_10 = arith.constant 0 : index
    %17 = vector.load %arg4[%c0_9, %c0_10] : memref<128x64xf32, #tpu.memory_space<vmem>>, vector<128x64xf32>
    %cst_11 = arith.constant dense<0.000000e+00> : vector<128x128xf32>
    %18 = tpu.matmul %17, %16, %cst_11 {dimension_numbers = #tpu.dot_dimension_numbers<[1], [0], [0], [1], [0, 0, 1, 1], [], []>} : vector<128x64xf32>, vector<64x128xf32>, vector<128x128xf32> -> vector<128x128xf32>
    %c96 = arith.constant 96 : index
    %c0_12 = arith.constant 0 : index
    %19 = vector.load %arg8[%c96, %c0_12] : memref<321x1xf32, #tpu.memory_space<vmem>>, vector<128x1xf32>
    %20 = vector.broadcast %19 : vector<128x1xf32> to vector<128x128xf32>
    %21 = arith.addf %18, %20 : vector<128x128xf32>
    %22 = math.sin %21 : vector<128x128xf32>
    %23 = arith.mulf %22, %22 : vector<128x128xf32>
    %24 = arith.addf %21, %23 : vector<128x128xf32>
    %c0_13 = arith.constant 0 : index
    %c0_14 = arith.constant 0 : index
    %25 = vector.load %arg5[%c0_13, %c0_14] : memref<64x128xf32, #tpu.memory_space<vmem>>, vector<64x128xf32>
    %cst_15 = arith.constant dense<0.000000e+00> : vector<64x128xf32>
    %26 = tpu.matmul %25, %24, %cst_15 {dimension_numbers = #tpu.dot_dimension_numbers<[1], [0], [0], [1], [0, 0, 1, 1], [], []>} : vector<64x128xf32>, vector<128x128xf32>, vector<64x128xf32> -> vector<64x128xf32>
    %c224 = arith.constant 224 : index
    %c0_16 = arith.constant 0 : index
    %27 = vector.load %arg8[%c224, %c0_16] : memref<321x1xf32, #tpu.memory_space<vmem>>, vector<64x1xf32>
    %28 = vector.broadcast %27 : vector<64x1xf32> to vector<64x128xf32>
    %29 = arith.addf %26, %28 : vector<64x128xf32>
    %30 = math.sin %29 : vector<64x128xf32>
    %31 = arith.mulf %30, %30 : vector<64x128xf32>
    %32 = arith.addf %29, %31 : vector<64x128xf32>
    %c0_17 = arith.constant 0 : index
    %c0_18 = arith.constant 0 : index
    %33 = vector.load %arg6[%c0_17, %c0_18] : memref<32x64xf32, #tpu.memory_space<vmem>>, vector<32x64xf32>
    %cst_19 = arith.constant dense<0.000000e+00> : vector<32x128xf32>
    %34 = tpu.matmul %33, %32, %cst_19 {dimension_numbers = #tpu.dot_dimension_numbers<[1], [0], [0], [1], [0, 0, 1, 1], [], []>} : vector<32x64xf32>, vector<64x128xf32>, vector<32x128xf32> -> vector<32x128xf32>
    %c288 = arith.constant 288 : index
    %c0_20 = arith.constant 0 : index
    %35 = vector.load %arg8[%c288, %c0_20] : memref<321x1xf32, #tpu.memory_space<vmem>>, vector<32x1xf32>
    %36 = vector.broadcast %35 : vector<32x1xf32> to vector<32x128xf32>
    %37 = arith.addf %34, %36 : vector<32x128xf32>
    %38 = math.sin %37 : vector<32x128xf32>
    %39 = arith.mulf %38, %38 : vector<32x128xf32>
    %40 = arith.addf %37, %39 : vector<32x128xf32>
    %c0_21 = arith.constant 0 : index
    %c0_22 = arith.constant 0 : index
    %41 = vector.load %arg7[%c0_21, %c0_22] : memref<1x32xf32, #tpu.memory_space<vmem>>, vector<1x32xf32>
    %cst_23 = arith.constant dense<0.000000e+00> : vector<1x128xf32>
    %42 = tpu.matmul %41, %40, %cst_23 {dimension_numbers = #tpu.dot_dimension_numbers<[1], [0], [0], [1], [0, 0, 1, 1], [], []>} : vector<1x32xf32>, vector<32x128xf32>, vector<1x128xf32> -> vector<1x128xf32>
    %c320 = arith.constant 320 : index
    %c0_24 = arith.constant 0 : index
    %43 = vector.load %arg8[%c320, %c0_24] : memref<321x1xf32, #tpu.memory_space<vmem>>, vector<1x1xf32>
    %44 = vector.broadcast %43 : vector<1x1xf32> to vector<1x128xf32>
    %45 = arith.addf %42, %44 : vector<1x128xf32>
    %46 = math.tanh %45 : vector<1x128xf32>
    %cst_25 = arith.constant 3.14159274 : f32
    %47 = vector.broadcast %cst_25 : f32 to vector<1x128xf32>
    %48 = arith.mulf %47, %46 : vector<1x128xf32>
    %c0_26 = arith.constant 0 : index
    %c0_27 = arith.constant 0 : index
    %49 = vector.load %arg9[%c0_26, %c0_27] : memref<1x128xf32, #tpu.memory_space<vmem>>, vector<1x128xf32>
    tpu.vector_store %arg9[%c0_26, %c0_27], %48 {strides = array<i32>} : memref<1x128xf32, #tpu.memory_space<vmem>>, vector<1x128xf32>,
    return
  }
  func.func @transform_0(%arg0: i32) -> (i32, i32) {
    %c0_i32 = arith.constant 0 : i32
    %c0_i32_0 = arith.constant 0 : i32
    return %c0_i32, %arg0 : i32, i32
  }
  func.func @transform_1(%arg0: i32) -> (i32, i32) {
    %c0_i32 = arith.constant 0 : i32
    %c0_i32_0 = arith.constant 0 : i32
    %c0_i32_1 = arith.constant 0 : i32
    return %c0_i32, %c0_i32_0 : i32, i32
  }
  func.func @transform_2(%arg0: i32) -> (i32, i32) {
    %c0_i32 = arith.constant 0 : i32
    %c0_i32_0 = arith.constant 0 : i32
    %c0_i32_1 = arith.constant 0 : i32
    return %c0_i32, %c0_i32_0 : i32, i32
  }
  func.func @transform_3(%arg0: i32) -> (i32, i32) {
    %c0_i32 = arith.constant 0 : i32
    %c0_i32_0 = arith.constant 0 : i32
    %c0_i32_1 = arith.constant 0 : i32
    return %c0_i32, %c0_i32_0 : i32, i32
  }
  func.func @transform_4(%arg0: i32) -> (i32, i32) {
    %c0_i32 = arith.constant 0 : i32
    %c0_i32_0 = arith.constant 0 : i32
    %c0_i32_1 = arith.constant 0 : i32
    return %c0_i32, %c0_i32_0 : i32, i32
  }
  func.func @transform_5(%arg0: i32) -> (i32, i32) {
    %c0_i32 = arith.constant 0 : i32
    %c0_i32_0 = arith.constant 0 : i32
    %c0_i32_1 = arith.constant 0 : i32
    return %c0_i32, %c0_i32_0 : i32, i32
  }
  func.func @transform_6(%arg0: i32) -> (i32, i32) {
    %c0_i32 = arith.constant 0 : i32
    %c0_i32_0 = arith.constant 0 : i32
    %c0_i32_1 = arith.constant 0 : i32
    return %c0_i32, %c0_i32_0 : i32, i32
  }
  func.func @transform_7(%arg0: i32) -> (i32, i32) {
    %c0_i32 = arith.constant 0 : i32
    %c0_i32_0 = arith.constant 0 : i32
    %c0_i32_1 = arith.constant 0 : i32
    return %c0_i32, %c0_i32_0 : i32, i32
  }
  func.func @transform_8(%arg0: i32) -> (i32, i32) {
    %c0_i32 = arith.constant 0 : i32
    %c0_i32_0 = arith.constant 0 : i32
    return %c0_i32, %arg0 : i32, i32
  }
}

</mosaic_0001>

<llo_original>
// kernel: neural_network_forward.1
$region0: #{neural_network_forward.1}
  #allocation0 [shape = 'u32[]', space=smem, size = 0x4, offset = 0x4, fixed_abs, tag = 'smem constant byte address 0x4 - core index']
  #allocation1 [shape = 'u32[144,128]{1,0:T(1,128)}', space=vmem, size = 0x12000, scoped, tag = 'internal scratch']
  %s0 = inlined_call_operand.vmem [shape: f32[3,128], index: 0, kind: input, shape index: {}]
  %s1 = inlined_call_operand.vmem [shape: f32[32,3], index: 1, kind: input, shape index: {}]
  %s2 = inlined_call_operand.vmem [shape: f32[64,32], index: 2, kind: input, shape index: {}]
  %s3 = inlined_call_operand.vmem [shape: f32[128,64], index: 3, kind: input, shape index: {}]
  %s4 = inlined_call_operand.vmem [shape: f32[64,128], index: 4, kind: input, shape index: {}]
  %s5 = inlined_call_operand.vmem [shape: f32[32,64], index: 5, kind: input, shape index: {}]
  %s6 = inlined_call_operand.vmem [shape: f32[1,32], index: 6, kind: input, shape index: {}]
  %s7 = inlined_call_operand.vmem [shape: f32[321,1], index: 7, kind: input, shape index: {}]
  %s8 = inlined_call_operand.vmem [shape: f32[1,128], index: 8, kind: output, shape index: {}]
  %s9 = sld [smem:[#allocation0]]
  $region42: #{neural_network_forward.1} parent=0
    _
  %s11 = ssub.s32 1, %s9
  %s12 = scalar_select 0, %s11, %s9
  // Predicated region
  $region2: #{neural_network_forward.1} parent=0 // pred_check
    _
  $region3: #{neural_network_forward.1} parent=0 // pred_check_branch
    %14 = sbr.rel (0) target = $region5
  $region4: #{neural_network_forward.1} parent=0 // pred_region
    _
  $region5: #{neural_network_forward.1} parent=0 // pred_fallthru
    _
  // Predicated region
  $region6: #{neural_network_forward.1} parent=0 // pred_check
    _
  $region7: #{neural_network_forward.1} parent=0 // pred_check_branch
    %16 = sbr.rel (0) target = $region9
  $region8: #{neural_network_forward.1} parent=0 // pred_region
    _
  $region9: #{neural_network_forward.1} parent=0 // pred_fallthru
    _
  // Predicated region
  $region10: #{neural_network_forward.1} parent=0 // pred_check
    _
  $region11: #{neural_network_forward.1} parent=0 // pred_check_branch
    %18 = sbr.rel (0) target = $region13
  $region12: #{neural_network_forward.1} parent=0 // pred_region
    _
  $region13: #{neural_network_forward.1} parent=0 // pred_fallthru
    _
  // Predicated region
  $region14: #{neural_network_forward.1} parent=0 // pred_check
    _
  $region15: #{neural_network_forward.1} parent=0 // pred_check_branch
    %20 = sbr.rel (0) target = $region17
  $region16: #{neural_network_forward.1} parent=0 // pred_region
    _
  $region17: #{neural_network_forward.1} parent=0 // pred_fallthru
    _
  // Predicated region
  $region18: #{neural_network_forward.1} parent=0 // pred_check
    _
  $region19: #{neural_network_forward.1} parent=0 // pred_check_branch
    %22 = sbr.rel (0) target = $region21
  $region20: #{neural_network_forward.1} parent=0 // pred_region
    _
  $region21: #{neural_network_forward.1} parent=0 // pred_fallthru
    _
  // Predicated region
  $region22: #{neural_network_forward.1} parent=0 // pred_check
    _
  $region23: #{neural_network_forward.1} parent=0 // pred_check_branch
    %24 = sbr.rel (0) target = $region25
  $region24: #{neural_network_forward.1} parent=0 // pred_region
    _
  $region25: #{neural_network_forward.1} parent=0 // pred_fallthru
    _
  // Predicated region
  $region26: #{neural_network_forward.1} parent=0 // pred_check
    _
  $region27: #{neural_network_forward.1} parent=0 // pred_check_branch
    %26 = sbr.rel (0) target = $region29
  $region28: #{neural_network_forward.1} parent=0 // pred_region
    _
  $region29: #{neural_network_forward.1} parent=0 // pred_fallthru
    _
  // Predicated region
  $region30: #{neural_network_forward.1} parent=0 // pred_check
    _
  $region31: #{neural_network_forward.1} parent=0 // pred_check_branch
    %28 = sbr.rel (0) target = $region33
  $region32: #{neural_network_forward.1} parent=0 // pred_region
    _
  $region33: #{neural_network_forward.1} parent=0 // pred_fallthru
    _
  %v29 = vld [vmem:[%s0] sm:$0x7]
  %v30 = vld [vmem:[%s1] sm:$0xff]
  %v31 = vld [vmem:[%s1 + $0x8] sm:$0xff]
  %v32 = vld [vmem:[%s1 + $0x10] sm:$0xff]
  %v33 = vld [vmem:[%s1 + $0x18] sm:$0xff]
  %v34 = vld [vmem:[%s7] sm:$0xff]
  %v35 = vld [vmem:[%s7 + $0x8] sm:$0xff]
  %v36 = vld [vmem:[%s7 + $0x10] sm:$0xff]
  %v37 = vld [vmem:[%s7 + $0x18] sm:$0xff]
  %39 = vset.pattern.permute.xlu0 0
  %40 = vperm.xlu0 %39, %v34
  %v41 = vpop.permute.xlu0 %40
  %44 = vset.pattern.permute.xlu0 0
  %45 = vperm.xlu0 %44, %v35
  %v46 = vpop.permute.xlu0 %45
  %49 = vset.pattern.permute.xlu0 0
  %50 = vperm.xlu0 %49, %v36
  %v51 = vpop.permute.xlu0 %50
  %54 = vset.pattern.permute.xlu0 0
  %55 = vperm.xlu0 %54, %v37
  %v56 = vpop.permute.xlu0 %55
  %vm58 = vcmask 23552
  %v60 = vsel %vm58, %v30, 0
  %v63 = vsel %vm58, %v31, 0
  %v66 = vsel %vm58, %v32, 0
  %v69 = vsel %vm58, %v33, 0
  %vm71 = vcmask 1042432
  %v73 = vsel %vm71, %v29, 0
  %75 = vmatprep.subr.mxu0 0.0
  %76 = vmatpush1.msra.mxu0 0.0
  %77 = vmatprep.subr.mxu0 0.0
  %78 = vmatpush1.msra.mxu0 0.0
  %79 = vmatprep.subr.mxu0 0.0
  %80 = vmatpush1.msra.mxu0 0.0
  %81 = vmatprep.subr.mxu0 0.0
  %82 = vmatpush1.msra.mxu0 0.0
  %83 = vmatprep.subr.mxu0 0.0
  %84 = vmatpush1.msra.mxu0 0.0
  %85 = vmatprep.subr.mxu0 0.0
  %86 = vmatpush1.msra.mxu0 0.0
  %87 = vmatprep.subr.mxu0 0.0
  %88 = vmatpush1.msra.mxu0 0.0
  %89 = vmatprep.subr.mxu0 0.0
  %90 = vmatpush1.msra.mxu0 0.0
  %91 = vmatprep.subr.mxu0 0.0
  %92 = vmatpush1.msra.mxu0 0.0
  %93 = vmatprep.subr.mxu0 0.0
  %94 = vmatpush1.msra.mxu0 0.0
  %95 = vmatprep.subr.mxu0 0.0
  %96 = vmatpush1.msra.mxu0 0.0
  %97 = vmatprep.subr.mxu0 0.0
  %98 = vmatpush1.msra.mxu0 0.0
  %99 = vmatprep.subr.mxu0 0.0
  %100 = vmatpush1.msra.mxu0 0.0
  %101 = vmatprep.subr.mxu0 0.0
  %102 = vmatpush1.msra.mxu0 0.0
  %103 = vmatprep.subr.mxu0 0.0
  %104 = vmatpush1.msra.mxu0 0.0
  %105 = vmatprep.subr.mxu0 0.0
  %106 = vmatpush1.msra.mxu0 %v73
  %107 = vmatprep.subr.mxu0 0.0
  %108 = vmatpush2.msra.mxu0 0.0
  %109 = vmatprep.subr.mxu0 0.0
  %110 = vmatpush2.msra.mxu0 0.0
  %111 = vmatprep.subr.mxu0 0.0
  %112 = vmatpush2.msra.mxu0 0.0
  %113 = vmatprep.subr.mxu0 0.0
  %114 = vmatpush2.msra.mxu0 0.0
  %115 = vmatprep.subr.mxu0 0.0
  %116 = vmatpush2.msra.mxu0 0.0
  %117 = vmatprep.subr.mxu0 0.0
  %118 = vmatpush2.msra.mxu0 0.0
  %119 = vmatprep.subr.mxu0 0.0
  %120 = vmatpush2.msra.mxu0 0.0
  %121 = vmatprep.subr.mxu0 0.0
  %122 = vmatpush2.msra.mxu0 0.0
  %123 = vmatprep.subr.mxu0 0.0
  %124 = vmatpush2.msra.mxu0 0.0
  %125 = vmatprep.subr.mxu0 0.0
  %126 = vmatpush2.msra.mxu0 0.0
  %127 = vmatprep.subr.mxu0 0.0
  %128 = vmatpush2.msra.mxu0 0.0
  %129 = vmatprep.subr.mxu0 0.0
  %130 = vmatpush2.msra.mxu0 0.0
  %131 = vmatprep.subr.mxu0 0.0
  %132 = vmatpush2.msra.mxu0 0.0
  %133 = vmatprep.subr.mxu0 0.0
  %134 = vmatpush2.msra.mxu0 0.0
  %135 = vmatprep.subr.mxu0 0.0
  %136 = vmatpush2.msra.mxu0 0.0
  %137 = vmatprep.subr.mxu0 0.0
  %138 = vmatpush2.msra.mxu0 0.0
  %139 = vmatprep.mubr.f32.mxu0 0.0
  %140 = vmatmul.mubr.f32.gmra.mxu0 %v60
  %v141 = vpop.f32.mrf.mxu0
  %v142 = vadd.f32 %v41, %v141
  %v143 = vpop.f32.mrf.mxu0
  %144 = vmatprep.mubr.f32.mxu0 0.0
  %145 = vmatmul.mubr.f32.gmra.mxu0 %v63
  %v146 = vpop.f32.mrf.mxu0
  %v147 = vadd.f32 %v46, %v146
  %v148 = vpop.f32.mrf.mxu0
  %149 = vmatprep.mubr.f32.mxu0 0.0
  %150 = vmatmul.mubr.f32.gmra.mxu0 %v66
  %v151 = vpop.f32.mrf.mxu0
  %v152 = vadd.f32 %v51, %v151
  %v153 = vpop.f32.mrf.mxu0
  %154 = vmatprep.mubr.f32.mxu0 0.0
  %155 = vmatmul.mubr.f32.gmra.mxu0 %v69
  %v156 = vpop.f32.mrf.mxu0
  %v157 = vadd.f32 %v56, %v156
  %v158 = vpop.f32.mrf.mxu0
  %159 = vdwg.mxu0
  %v160 = vand.u32 2147483647, %v142
  %vm161 = vcmp.le.f32.partialorder %v160, 0.7853982
  %vm162 = vcmp.lt.s32.totalorder %v142, 0
  %v163 = vand.u32 %v142, 2139095040
  %v164 = vshrl.u32 %v163, 23
  %v165 = vsub.s32 %v164, 127
  %v166 = vand.u32 2147483647, %v142
  %v167 = vand.u32 %v166, 8388607
  %v168 = vor.u32 %v167, 8388608
  %v169 = vsub.s32 0, %v168
  %v170 = vadd.s32 %v165, 1
  %vm171 = vcmp.gt.s32.totalorder %v170, 0
  %v172 = vsel %vm171, %v170, 0
  %v173 = vshrl.u32 %v172, 5
  %v174 = vand.u32 %v172, 31
  %v175 = vsub.s32 32, %v174
  %v176 = vshrl.u32 683565275, %v175
  %v177 = vshll.u32 683565275, %v174
  %v178 = vshrl.u32 2475754826, %v175
  %v179 = vor.u32 %v177, %v178
  %v180 = vshll.u32 2475754826, %v174
  %v181 = vshrl.u32 2131351028, %v175
  %v182 = vor.u32 %v180, %v181
  %v183 = vshll.u32 2131351028, %v174
  %v184 = vshrl.u32 2102212464, %v175
  %v185 = vor.u32 %v183, %v184
  %v186 = vshll.u32 2102212464, %v174
  %v187 = vshrl.u32 920167782, %v175
  %v188 = vor.u32 %v186, %v187
  %v189 = vshll.u32 920167782, %v174
  %v190 = vshrl.u32 1326507024, %v175
  %v191 = vor.u32 %v189, %v190
  %vm192 = vcmp.lt.s32.totalorder %v173, 1
  %vm193 = vcmp.lt.s32.totalorder %v173, 2
  %vm194 = vcmp.lt.s32.totalorder %v173, 3
  %vm195 = vcmp.lt.s32.totalorder %v173, 4
  %v196 = vsel %vm192, %v176, %v179
  %v197 = vsel %vm195, %v185, 2102212464
  %v198 = vsel %vm194, %v182, %v197
  %v199 = vsel %vm193, %v196, %v198
  %v200 = vsel %vm192, %v179, %v182
  %v201 = vsel %vm195, %v188, 920167782
  %v202 = vsel %vm194, %v185, %v201
  %v203 = vsel %vm193, %v200, %v202
  %v204 = vsel %vm192, %v182, %v185
  %v205 = vsel %vm195, %v191, 1326507024
  %v206 = vsel %vm194, %v188, %v205
  %v207 = vsel %vm193, %v204, %v206
  %v208 = vshll.u32 %v168, 8
  %v209 = vmul.u32.u64.compose %v208, %v207
  %v210 = vextract.low.u32 %v209
  %v211 = vextract.high.u32 %v209
  %v212 = vmul.u32.u64.compose %v208, %v203
  %v213 = vextract.low.u32 %v212
  %v214 = vextract.high.u32 %v212
  %v215 = vmul.u32 %v208, %v199
  %v216 = vadd.s32 %v211, %v213
  %vm217 = vc.u32 %v211, %v213
  %v218 = vadd.s32 %v214, 1
  %v219 = vsel %vm217, %v218, %v214
  %v220 = vadd.s32 %v215, %v219
  %v221 = vadd.s32 %v220, 536870912
  %v222 = vshrl.u32 %v221, 30
  %v223 = vshll.u32 %v222, 30
  %v224 = vsub.s32 %v220, %v223
  %vm225 = vcmp.lt.s32.totalorder %v224, 0
  %v226 = vsub.s32 0, %v224
  %v227 = vsel %vm225, %v226, %v224
  %v228 = vclz %v227
  %v229 = vsub.s32 %v228, 2
  %vm230 = vcmp.gt.s32.totalorder 0, %v229
  %v231 = vsel %vm230, 0, %v229
  %v232 = vsub.s32 32, %v231
  %v233 = vshll.u32 %v224, %v231
  %v234 = vshrl.u32 %v216, %v232
  %v235 = vor.u32 %v233, %v234
  %v236 = vsub.s32 4294967266, %v231
  %v237 = vadd.s32 %v236, 127
  %v238 = vshll.u32 %v237, 23
  %v239 = vor.u32 4788187, %v238
  %v240 = vand.u32 2147483647, %v239
  %v242 = vcvt.s32.f32 %v235
  %v243 = vmul.f32 %v242, %v240
  %v244 = vxor.u32 %v243, 2147483648
  %v245 = vsel %vm162, %v244, %v243
  %v246 = vsub.s32 4, %v222
  %v247 = vsel %vm162, %v246, %v222
  %v248 = vsel %vm161, %v142, %v245
  %v249 = vsel %vm161, 0, %v247
  %v250 = vcosq.f32.pop %v248
  %v251 = vsinq.f32.pop %v248
  %vm252 = vweird.f32 %v142
  %v253 = vadd.s32 %v249, 3
  %v254 = vand.u32 %v253, 3
  %vm255 = vcmp.lt.s32.totalorder %v254, 2
  %vm256 = vcmp.eq.s32.totalorder %v254, 0
  %v257 = vxor.u32 %v251, 2147483648
  %v258 = vsel %vm256, %v250, %v257
  %vm259 = vcmp.eq.s32.totalorder %v254, 2
  %v260 = vxor.u32 %v250, 2147483648
  %v261 = vsel %vm259, %v260, %v251
  %v262 = vsel %vm255, %v258, %v261
  %v263 = vsel %vm252, nan, %v262
  %v264 = vand.u32 2147483647, %v147
  %vm265 = vcmp.le.f32.partialorder %v264, 0.7853982
  %vm266 = vcmp.lt.s32.totalorder %v147, 0
  %v267 = vand.u32 %v147, 2139095040
  %v268 = vshrl.u32 %v267, 23
  %v269 = vsub.s32 %v268, 127
  %v270 = vand.u32 2147483647, %v147
  %v271 = vand.u32 %v270, 8388607
  %v272 = vor.u32 %v271, 8388608
  %v273 = vsub.s32 0, %v272
  %v274 = vadd.s32 %v269, 1
  %vm275 = vcmp.gt.s32.totalorder %v274, 0
  %v276 = vsel %vm275, %v274, 0
  %v277 = vshrl.u32 %v276, 5
  %v278 = vand.u32 %v276, 31
  %v279 = vsub.s32 32, %v278
  %v280 = vshrl.u32 683565275, %v279
  %v281 = vshll.u32 683565275, %v278
  %v282 = vshrl.u32 2475754826, %v279
  %v283 = vor.u32 %v281, %v282
  %v284 = vshll.u32 2475754826, %v278
  %v285 = vshrl.u32 2131351028, %v279
  %v286 = vor.u32 %v284, %v285
  %v287 = vshll.u32 2131351028, %v278
  %v288 = vshrl.u32 2102212464, %v279
  %v289 = vor.u32 %v287, %v288
  %v290 = vshll.u32 2102212464, %v278
  %v291 = vshrl.u32 920167782, %v279
  %v292 = vor.u32 %v290, %v291
  %v293 = vshll.u32 920167782, %v278
  %v294 = vshrl.u32 1326507024, %v279
  %v295 = vor.u32 %v293, %v294
  %vm296 = vcmp.lt.s32.totalorder %v277, 1
  %vm297 = vcmp.lt.s32.totalorder %v277, 2
  %vm298 = vcmp.lt.s32.totalorder %v277, 3
  %vm299 = vcmp.lt.s32.totalorder %v277, 4
  %v300 = vsel %vm296, %v280, %v283
  %v301 = vsel %vm299, %v289, 2102212464
  %v302 = vsel %vm298, %v286, %v301
  %v303 = vsel %vm297, %v300, %v302
  %v304 = vsel %vm296, %v283, %v286
  %v305 = vsel %vm299, %v292, 920167782
  %v306 = vsel %vm298, %v289, %v305
  %v307 = vsel %vm297, %v304, %v306
  %v308 = vsel %vm296, %v286, %v289
  %v309 = vsel %vm299, %v295, 1326507024
  %v310 = vsel %vm298, %v292, %v309
  %v311 = vsel %vm297, %v308, %v310
  %v312 = vshll.u32 %v272, 8
  %v313 = vmul.u32.u64.compose %v312, %v311
  %v314 = vextract.low.u32 %v313
  %v315 = vextract.high.u32 %v313
  %v316 = vmul.u32.u64.compose %v312, %v307
  %v317 = vextract.low.u32 %v316
  %v318 = vextract.high.u32 %v316
  %v319 = vmul.u32 %v312, %v303
  %v320 = vadd.s32 %v315, %v317
  %vm321 = vc.u32 %v315, %v317
  %v322 = vadd.s32 %v318, 1
  %v323 = vsel %vm321, %v322, %v318
  %v324 = vadd.s32 %v319, %v323
  %v325 = vadd.s32 %v324, 536870912
  %v326 = vshrl.u32 %v325, 30
  %v327 = vshll.u32 %v326, 30
  %v328 = vsub.s32 %v324, %v327
  %vm329 = vcmp.lt.s32.totalorder %v328, 0
  %v330 = vsub.s32 0, %v328
  %v331 = vsel %vm329, %v330, %v328
  %v332 = vclz %v331
  %v333 = vsub.s32 %v332, 2
  %vm334 = vcmp.gt.s32.totalorder 0, %v333
  %v335 = vsel %vm334, 0, %v333
  %v336 = vsub.s32 32, %v335
  %v337 = vshll.u32 %v328, %v335
  %v338 = vshrl.u32 %v320, %v336
  %v339 = vor.u32 %v337, %v338
  %v340 = vsub.s32 4294967266, %v335
  %v341 = vadd.s32 %v340, 127
  %v342 = vshll.u32 %v341, 23
  %v343 = vor.u32 4788187, %v342
  %v344 = vand.u32 2147483647, %v343
  %v346 = vcvt.s32.f32 %v339
  %v347 = vmul.f32 %v346, %v344
  %v348 = vxor.u32 %v347, 2147483648
  %v349 = vsel %vm266, %v348, %v347
  %v350 = vsub.s32 4, %v326
  %v351 = vsel %vm266, %v350, %v326
  %v352 = vsel %vm265, %v147, %v349
  %v353 = vsel %vm265, 0, %v351
  %v354 = vcosq.f32.pop %v352
  %v355 = vsinq.f32.pop %v352
  %vm356 = vweird.f32 %v147
  %v357 = vadd.s32 %v353, 3
  %v358 = vand.u32 %v357, 3
  %vm359 = vcmp.lt.s32.totalorder %v358, 2
  %vm360 = vcmp.eq.s32.totalorder %v358, 0
  %v361 = vxor.u32 %v355, 2147483648
  %v362 = vsel %vm360, %v354, %v361
  %vm363 = vcmp.eq.s32.totalorder %v358, 2
  %v364 = vxor.u32 %v354, 2147483648
  %v365 = vsel %vm363, %v364, %v355
  %v366 = vsel %vm359, %v362, %v365
  %v367 = vsel %vm356, nan, %v366
  %v368 = vand.u32 2147483647, %v152
  %vm369 = vcmp.le.f32.partialorder %v368, 0.7853982
  %vm370 = vcmp.lt.s32.totalorder %v152, 0
  %v371 = vand.u32 %v152, 2139095040
  %v372 = vshrl.u32 %v371, 23
  %v373 = vsub.s32 %v372, 127
  %v374 = vand.u32 2147483647, %v152
  %v375 = vand.u32 %v374, 8388607
  %v376 = vor.u32 %v375, 8388608
  %v377 = vsub.s32 0, %v376
  %v378 = vadd.s32 %v373, 1
  %vm379 = vcmp.gt.s32.totalorder %v378, 0
  %v380 = vsel %vm379, %v378, 0
  %v381 = vshrl.u32 %v380, 5
  %v382 = vand.u32 %v380, 31
  %v383 = vsub.s32 32, %v382
  %v384 = vshrl.u32 683565275, %v383
  %v385 = vshll.u32 683565275, %v382
  %v386 = vshrl.u32 2475754826, %v383
  %v387 = vor.u32 %v385, %v386
  %v388 = vshll.u32 2475754826, %v382
  %v389 = vshrl.u32 2131351028, %v383
  %v390 = vor.u32 %v388, %v389
  %v391 = vshll.u32 2131351028, %v382
  %v392 = vshrl.u32 2102212464, %v383
  %v393 = vor.u32 %v391, %v392
  %v394 = vshll.u32 2102212464, %v382
  %v395 = vshrl.u32 920167782, %v383
  %v396 = vor.u32 %v394, %v395
  %v397 = vshll.u32 920167782, %v382
  %v398 = vshrl.u32 1326507024, %v383
  %v399 = vor.u32 %v397, %v398
  %vm400 = vcmp.lt.s32.totalorder %v381, 1
  %vm401 = vcmp.lt.s32.totalorder %v381, 2
  %vm402 = vcmp.lt.s32.totalorder %v381, 3
  %vm403 = vcmp.lt.s32.totalorder %v381, 4
  %v404 = vsel %vm400, %v384, %v387
  %v405 = vsel %vm403, %v393, 2102212464
  %v406 = vsel %vm402, %v390, %v405
  %v407 = vsel %vm401, %v404, %v406
  %v408 = vsel %vm400, %v387, %v390
  %v409 = vsel %vm403, %v396, 920167782
  %v410 = vsel %vm402, %v393, %v409
  %v411 = vsel %vm401, %v408, %v410
  %v412 = vsel %vm400, %v390, %v393
  %v413 = vsel %vm403, %v399, 1326507024
  %v414 = vsel %vm402, %v396, %v413
  %v415 = vsel %vm401, %v412, %v414
  %v416 = vshll.u32 %v376, 8
  %v417 = vmul.u32.u64.compose %v416, %v415
  %v418 = vextract.low.u32 %v417
  %v419 = vextract.high.u32 %v417
  %v420 = vmul.u32.u64.compose %v416, %v411
  %v421 = vextract.low.u32 %v420
  %v422 = vextract.high.u32 %v420
  %v423 = vmul.u32 %v416, %v407
  %v424 = vadd.s32 %v419, %v421
  %vm425 = vc.u32 %v419, %v421
  %v426 = vadd.s32 %v422, 1
  %v427 = vsel %vm425, %v426, %v422
  %v428 = vadd.s32 %v423, %v427
  %v429 = vadd.s32 %v428, 536870912
  %v430 = vshrl.u32 %v429, 30
  %v431 = vshll.u32 %v430, 30
  %v432 = vsub.s32 %v428, %v431
  %vm433 = vcmp.lt.s32.totalorder %v432, 0
  %v434 = vsub.s32 0, %v432
  %v435 = vsel %vm433, %v434, %v432
  %v436 = vclz %v435
  %v437 = vsub.s32 %v436, 2
  %vm438 = vcmp.gt.s32.totalorder 0, %v437
  %v439 = vsel %vm438, 0, %v437
  %v440 = vsub.s32 32, %v439
  %v441 = vshll.u32 %v432, %v439
  %v442 = vshrl.u32 %v424, %v440
  %v443 = vor.u32 %v441, %v442
  %v444 = vsub.s32 4294967266, %v439
  %v445 = vadd.s32 %v444, 127
  %v446 = vshll.u32 %v445, 23
  %v447 = vor.u32 4788187, %v446
  %v448 = vand.u32 2147483647, %v447
  %v450 = vcvt.s32.f32 %v443
  %v451 = vmul.f32 %v450, %v448
  %v452 = vxor.u32 %v451, 2147483648
  %v453 = vsel %vm370, %v452, %v451
  %v454 = vsub.s32 4, %v430
  %v455 = vsel %vm370, %v454, %v430
  %v456 = vsel %vm369, %v152, %v453
  %v457 = vsel %vm369, 0, %v455
  %v458 = vcosq.f32.pop %v456
  %v459 = vsinq.f32.pop %v456
  %vm460 = vweird.f32 %v152
  %v461 = vadd.s32 %v457, 3
  %v462 = vand.u32 %v461, 3
  %vm463 = vcmp.lt.s32.totalorder %v462, 2
  %vm464 = vcmp.eq.s32.totalorder %v462, 0
  %v465 = vxor.u32 %v459, 2147483648
  %v466 = vsel %vm464, %v458, %v465
  %vm467 = vcmp.eq.s32.totalorder %v462, 2
  %v468 = vxor.u32 %v458, 2147483648
  %v469 = vsel %vm467, %v468, %v459
  %v470 = vsel %vm463, %v466, %v469
  %v471 = vsel %vm460, nan, %v470
  %v472 = vand.u32 2147483647, %v157
  %vm473 = vcmp.le.f32.partialorder %v472, 0.7853982
  %vm474 = vcmp.lt.s32.totalorder %v157, 0
  %v475 = vand.u32 %v157, 2139095040
  %v476 = vshrl.u32 %v475, 23
  %v477 = vsub.s32 %v476, 127
  %v478 = vand.u32 2147483647, %v157
  %v479 = vand.u32 %v478, 8388607
  %v480 = vor.u32 %v479, 8388608
  %v481 = vsub.s32 0, %v480
  %v482 = vadd.s32 %v477, 1
  %vm483 = vcmp.gt.s32.totalorder %v482, 0
  %v484 = vsel %vm483, %v482, 0
  %v485 = vshrl.u32 %v484, 5
  %v486 = vand.u32 %v484, 31
  %v487 = vsub.s32 32, %v486
  %v488 = vshrl.u32 683565275, %v487
  %v489 = vshll.u32 683565275, %v486
  %v490 = vshrl.u32 2475754826, %v487
  %v491 = vor.u32 %v489, %v490
  %v492 = vshll.u32 2475754826, %v486
  %v493 = vshrl.u32 2131351028, %v487
  %v494 = vor.u32 %v492, %v493
  %v495 = vshll.u32 2131351028, %v486
  %v496 = vshrl.u32 2102212464, %v487
  %v497 = vor.u32 %v495, %v496
  %v498 = vshll.u32 2102212464, %v486
  %v499 = vshrl.u32 920167782, %v487
  %v500 = vor.u32 %v498, %v499
  %v501 = vshll.u32 920167782, %v486
  %v502 = vshrl.u32 1326507024, %v487
  %v503 = vor.u32 %v501, %v502
  %vm504 = vcmp.lt.s32.totalorder %v485, 1
  %vm505 = vcmp.lt.s32.totalorder %v485, 2
  %vm506 = vcmp.lt.s32.totalorder %v485, 3
  %vm507 = vcmp.lt.s32.totalorder %v485, 4
  %v508 = vsel %vm504, %v488, %v491
  %v509 = vsel %vm507, %v497, 2102212464
  %v510 = vsel %vm506, %v494, %v509
  %v511 = vsel %vm505, %v508, %v510
  %v512 = vsel %vm504, %v491, %v494
  %v513 = vsel %vm507, %v500, 920167782
  %v514 = vsel %vm506, %v497, %v513
  %v515 = vsel %vm505, %v512, %v514
  %v516 = vsel %vm504, %v494, %v497
  %v517 = vsel %vm507, %v503, 1326507024
  %v518 = vsel %vm506, %v500, %v517
  %v519 = vsel %vm505, %v516, %v518
  %v520 = vshll.u32 %v480, 8
  %v521 = vmul.u32.u64.compose %v520, %v519
  %v522 = vextract.low.u32 %v521
  %v523 = vextract.high.u32 %v521
  %v524 = vmul.u32.u64.compose %v520, %v515
  %v525 = vextract.low.u32 %v524
  %v526 = vextract.high.u32 %v524
  %v527 = vmul.u32 %v520, %v511
  %v528 = vadd.s32 %v523, %v525
  %vm529 = vc.u32 %v523, %v525
  %v530 = vadd.s32 %v526, 1
  %v531 = vsel %vm529, %v530, %v526
  %v532 = vadd.s32 %v527, %v531
  %v533 = vadd.s32 %v532, 536870912
  %v534 = vshrl.u32 %v533, 30
  %v535 = vshll.u32 %v534, 30
  %v536 = vsub.s32 %v532, %v535
  %vm537 = vcmp.lt.s32.totalorder %v536, 0
  %v538 = vsub.s32 0, %v536
  %v539 = vsel %vm537, %v538, %v536
  %v540 = vclz %v539
  %v541 = vsub.s32 %v540, 2
  %vm542 = vcmp.gt.s32.totalorder 0, %v541
  %v543 = vsel %vm542, 0, %v541
  %v544 = vsub.s32 32, %v543
  %v545 = vshll.u32 %v536, %v543
  %v546 = vshrl.u32 %v528, %v544
  %v547 = vor.u32 %v545, %v546
  %v548 = vsub.s32 4294967266, %v543
  %v549 = vadd.s32 %v548, 127
  %v550 = vshll.u32 %v549, 23
  %v551 = vor.u32 4788187, %v550
  %v552 = vand.u32 2147483647, %v551
  %v554 = vcvt.s32.f32 %v547
  %v555 = vmul.f32 %v554, %v552
  %v556 = vxor.u32 %v555, 2147483648
  %v557 = vsel %vm474, %v556, %v555
  %v558 = vsub.s32 4, %v534
  %v559 = vsel %vm474, %v558, %v534
  %v560 = vsel %vm473, %v157, %v557
  %v561 = vsel %vm473, 0, %v559
  %v562 = vcosq.f32.pop %v560
  %v563 = vsinq.f32.pop %v560
  %vm564 = vweird.f32 %v157
  %v565 = vadd.s32 %v561, 3
  %v566 = vand.u32 %v565, 3
  %vm567 = vcmp.lt.s32.totalorder %v566, 2
  %vm568 = vcmp.eq.s32.totalorder %v566, 0
  %v569 = vxor.u32 %v563, 2147483648
  %v570 = vsel %vm568, %v562, %v569
  %vm571 = vcmp.eq.s32.totalorder %v566, 2
  %v572 = vxor.u32 %v562, 2147483648
  %v573 = vsel %vm571, %v572, %v563
  %v574 = vsel %vm567, %v570, %v573
  %v575 = vsel %vm564, nan, %v574
  %v576 = vmul.f32 %v263, %v263
  %v577 = vmul.f32 %v367, %v367
  %v578 = vmul.f32 %v471, %v471
  %v579 = vmul.f32 %v575, %v575
  %v580 = vadd.f32 %v142, %v576
  %v581 = vadd.f32 %v147, %v577
  %v582 = vadd.f32 %v152, %v578
  %v583 = vadd.f32 %v157, %v579
  %v584 = vld [vmem:[%s2] sm:$0xff]
  %v585 = vld [vmem:[%s2 + $0x8] sm:$0xff]
  %v586 = vld [vmem:[%s2 + $0x10] sm:$0xff]
  %v587 = vld [vmem:[%s2 + $0x18] sm:$0xff]
  %v588 = vld [vmem:[%s2 + $0x20] sm:$0xff]
  %v589 = vld [vmem:[%s2 + $0x28] sm:$0xff]
  %v590 = vld [vmem:[%s2 + $0x30] sm:$0xff]
  %v591 = vld [vmem:[%s2 + $0x38] sm:$0xff]
  %v592 = vld [vmem:[%s7 + $0x20] sm:$0xff]
  %v593 = vld [vmem:[%s7 + $0x28] sm:$0xff]
  %v594 = vld [vmem:[%s7 + $0x30] sm:$0xff]
  %v595 = vld [vmem:[%s7 + $0x38] sm:$0xff]
  %v596 = vld [vmem:[%s7 + $0x40] sm:$0xff]
  %v597 = vld [vmem:[%s7 + $0x48] sm:$0xff]
  %v598 = vld [vmem:[%s7 + $0x50] sm:$0xff]
  %v599 = vld [vmem:[%s7 + $0x58] sm:$0xff]
  %601 = vset.pattern.permute.xlu0 0
  %602 = vperm.xlu0 %601, %v592
  %v603 = vpop.permute.xlu0 %602
  %606 = vset.pattern.permute.xlu0 0
  %607 = vperm.xlu0 %606, %v593
  %v608 = vpop.permute.xlu0 %607
  %611 = vset.pattern.permute.xlu0 0
  %612 = vperm.xlu0 %611, %v594
  %v613 = vpop.permute.xlu0 %612
  %616 = vset.pattern.permute.xlu0 0
  %617 = vperm.xlu0 %616, %v595
  %v618 = vpop.permute.xlu0 %617
  %621 = vset.pattern.permute.xlu0 0
  %622 = vperm.xlu0 %621, %v596
  %v623 = vpop.permute.xlu0 %622
  %626 = vset.pattern.permute.xlu0 0
  %627 = vperm.xlu0 %626, %v597
  %v628 = vpop.permute.xlu0 %627
  %631 = vset.pattern.permute.xlu0 0
  %632 = vperm.xlu0 %631, %v598
  %v633 = vpop.permute.xlu0 %632
  %636 = vset.pattern.permute.xlu0 0
  %637 = vperm.xlu0 %636, %v599
  %v638 = vpop.permute.xlu0 %637
  %vm640 = vcmask 261120
  %v642 = vsel %vm640, %v584, 0
  %v645 = vsel %vm640, %v585, 0
  %v648 = vsel %vm640, %v586, 0
  %v651 = vsel %vm640, %v587, 0
  %v654 = vsel %vm640, %v588, 0
  %v657 = vsel %vm640, %v589, 0
  %v660 = vsel %vm640, %v590, 0
  %v663 = vsel %vm640, %v591, 0
  %665 = vmatprep.subr.mxu0 0.0
  %666 = vmatpush1.msra.mxu0 0.0
  %667 = vmatprep.subr.mxu0 0.0
  %668 = vmatpush1.msra.mxu0 0.0
  %669 = vmatprep.subr.mxu0 0.0
  %670 = vmatpush1.msra.mxu0 0.0
  %671 = vmatprep.subr.mxu0 0.0
  %672 = vmatpush1.msra.mxu0 0.0
  %673 = vmatprep.subr.mxu0 0.0
  %674 = vmatpush1.msra.mxu0 0.0
  %675 = vmatprep.subr.mxu0 0.0
  %676 = vmatpush1.msra.mxu0 0.0
  %677 = vmatprep.subr.mxu0 0.0
  %678 = vmatpush1.msra.mxu0 0.0
  %679 = vmatprep.subr.mxu0 0.0
  %680 = vmatpush1.msra.mxu0 0.0
  %681 = vmatprep.subr.mxu0 0.0
  %682 = vmatpush1.msra.mxu0 0.0
  %683 = vmatprep.subr.mxu0 0.0
  %684 = vmatpush1.msra.mxu0 0.0
  %685 = vmatprep.subr.mxu0 0.0
  %686 = vmatpush1.msra.mxu0 0.0
  %687 = vmatprep.subr.mxu0 0.0
  %688 = vmatpush1.msra.mxu0 0.0
  %689 = vmatprep.subr.mxu0 0.0
  %690 = vmatpush1.msra.mxu0 %v583
  %691 = vmatprep.subr.mxu0 0.0
  %692 = vmatpush1.msra.mxu0 %v582
  %693 = vmatprep.subr.mxu0 0.0
  %694 = vmatpush1.msra.mxu0 %v581
  %695 = vmatprep.subr.mxu0 0.0
  %696 = vmatpush1.msra.mxu0 %v580
  %697 = vmatprep.subr.mxu0 0.0
  %698 = vmatpush2.msra.mxu0 0.0
  %699 = vmatprep.subr.mxu0 0.0
  %700 = vmatpush2.msra.mxu0 0.0
  %701 = vmatprep.subr.mxu0 0.0
  %702 = vmatpush2.msra.mxu0 0.0
  %703 = vmatprep.subr.mxu0 0.0
  %704 = vmatpush2.msra.mxu0 0.0
  %705 = vmatprep.subr.mxu0 0.0
  %706 = vmatpush2.msra.mxu0 0.0
  %707 = vmatprep.subr.mxu0 0.0
  %708 = vmatpush2.msra.mxu0 0.0
  %709 = vmatprep.subr.mxu0 0.0
  %710 = vmatpush2.msra.mxu0 0.0
  %711 = vmatprep.subr.mxu0 0.0
  %712 = vmatpush2.msra.mxu0 0.0
  %713 = vmatprep.subr.mxu0 0.0
  %714 = vmatpush2.msra.mxu0 0.0
  %715 = vmatprep.subr.mxu0 0.0
  %716 = vmatpush2.msra.mxu0 0.0
  %717 = vmatprep.subr.mxu0 0.0
  %718 = vmatpush2.msra.mxu0 0.0
  %719 = vmatprep.subr.mxu0 0.0
  %720 = vmatpush2.msra.mxu0 0.0
  %721 = vmatprep.subr.mxu0 0.0
  %722 = vmatpush2.msra.mxu0 0.0
  %723 = vmatprep.subr.mxu0 0.0
  %724 = vmatpush2.msra.mxu0 0.0
  %725 = vmatprep.subr.mxu0 0.0
  %726 = vmatpush2.msra.mxu0 0.0
  %727 = vmatprep.subr.mxu0 0.0
  %728 = vmatpush2.msra.mxu0 0.0
  %729 = vmatprep.mubr.f32.mxu0 0.0
  %730 = vmatmul.mubr.f32.gmra.mxu0 %v642
  %v731 = vpop.f32.mrf.mxu0
  %v732 = vadd.f32 %v603, %v731
  %v733 = vpop.f32.mrf.mxu0
  %734 = vmatprep.mubr.f32.mxu0 0.0
  %735 = vmatmul.mubr.f32.gmra.mxu0 %v645
  %v736 = vpop.f32.mrf.mxu0
  %v737 = vadd.f32 %v608, %v736
  %v738 = vpop.f32.mrf.mxu0
  %739 = vmatprep.mubr.f32.mxu0 0.0
  %740 = vmatmul.mubr.f32.gmra.mxu0 %v648
  %v741 = vpop.f32.mrf.mxu0
  %v742 = vadd.f32 %v613, %v741
  %v743 = vpop.f32.mrf.mxu0
  %744 = vmatprep.mubr.f32.mxu0 0.0
  %745 = vmatmul.mubr.f32.gmra.mxu0 %v651
  %v746 = vpop.f32.mrf.mxu0
  %v747 = vadd.f32 %v618, %v746
  %v748 = vpop.f32.mrf.mxu0
  %749 = vmatprep.mubr.f32.mxu0 0.0
  %750 = vmatmul.mubr.f32.gmra.mxu0 %v654
  %v751 = vpop.f32.mrf.mxu0
  %v752 = vadd.f32 %v623, %v751
  %v753 = vpop.f32.mrf.mxu0
  %754 = vmatprep.mubr.f32.mxu0 0.0
  %755 = vmatmul.mubr.f32.gmra.mxu0 %v657
  %v756 = vpop.f32.mrf.mxu0
  %v757 = vadd.f32 %v628, %v756
  %v758 = vpop.f32.mrf.mxu0
  %759 = vmatprep.mubr.f32.mxu0 0.0
  %760 = vmatmul.mubr.f32.gmra.mxu0 %v660
  %v761 = vpop.f32.mrf.mxu0
  %v762 = vadd.f32 %v633, %v761
  %v763 = vpop.f32.mrf.mxu0
  %764 = vmatprep.mubr.f32.mxu0 0.0
  %765 = vmatmul.mubr.f32.gmra.mxu0 %v663
  %v766 = vpop.f32.mrf.mxu0
  %v767 = vadd.f32 %v638, %v766
  %v768 = vpop.f32.mrf.mxu0
  %769 = vdwg.mxu0
  %v770 = vand.u32 2147483647, %v732
  %vm771 = vcmp.le.f32.partialorder %v770, 0.7853982
  %vm772 = vcmp.lt.s32.totalorder %v732, 0
  %v773 = vand.u32 %v732, 2139095040
  %v774 = vshrl.u32 %v773, 23
  %v775 = vsub.s32 %v774, 127
  %v776 = vand.u32 2147483647, %v732
  %v777 = vand.u32 %v776, 8388607
  %v778 = vor.u32 %v777, 8388608
  %v779 = vsub.s32 0, %v778
  %v780 = vadd.s32 %v775, 1
  %vm781 = vcmp.gt.s32.totalorder %v780, 0
  %v782 = vsel %vm781, %v780, 0
  %v783 = vshrl.u32 %v782, 5
  %v784 = vand.u32 %v782, 31
  %v785 = vsub.s32 32, %v784
  %v786 = vshrl.u32 683565275, %v785
  %v787 = vshll.u32 683565275, %v784
  %v788 = vshrl.u32 2475754826, %v785
  %v789 = vor.u32 %v787, %v788
  %v790 = vshll.u32 2475754826, %v784
  %v791 = vshrl.u32 2131351028, %v785
  %v792 = vor.u32 %v790, %v791
  %v793 = vshll.u32 2131351028, %v784
  %v794 = vshrl.u32 2102212464, %v785
  %v795 = vor.u32 %v793, %v794
  %v796 = vshll.u32 2102212464, %v784
  %v797 = vshrl.u32 920167782, %v785
  %v798 = vor.u32 %v796, %v797
  %v799 = vshll.u32 920167782, %v784
  %v800 = vshrl.u32 1326507024, %v785
  %v801 = vor.u32 %v799, %v800
  %vm802 = vcmp.lt.s32.totalorder %v783, 1
  %vm803 = vcmp.lt.s32.totalorder %v783, 2
  %vm804 = vcmp.lt.s32.totalorder %v783, 3
  %vm805 = vcmp.lt.s32.totalorder %v783, 4
  %v806 = vsel %vm802, %v786, %v789
  %v807 = vsel %vm805, %v795, 2102212464
  %v808 = vsel %vm804, %v792, %v807
  %v809 = vsel %vm803, %v806, %v808
  %v810 = vsel %vm802, %v789, %v792
  %v811 = vsel %vm805, %v798, 920167782
  %v812 = vsel %vm804, %v795, %v811
  %v813 = vsel %vm803, %v810, %v812
  %v814 = vsel %vm802, %v792, %v795
  %v815 = vsel %vm805, %v801, 1326507024
  %v816 = vsel %vm804, %v798, %v815
  %v817 = vsel %vm803, %v814, %v816
  %v818 = vshll.u32 %v778, 8
  %v819 = vmul.u32.u64.compose %v818, %v817
  %v820 = vextract.low.u32 %v819
  %v821 = vextract.high.u32 %v819
  %v822 = vmul.u32.u64.compose %v818, %v813
  %v823 = vextract.low.u32 %v822
  %v824 = vextract.high.u32 %v822
  %v825 = vmul.u32 %v818, %v809
  %v826 = vadd.s32 %v821, %v823
  %vm827 = vc.u32 %v821, %v823
  %v828 = vadd.s32 %v824, 1
  %v829 = vsel %vm827, %v828, %v824
  %v830 = vadd.s32 %v825, %v829
  %v831 = vadd.s32 %v830, 536870912
  %v832 = vshrl.u32 %v831, 30
  %v833 = vshll.u32 %v832, 30
  %v834 = vsub.s32 %v830, %v833
  %vm835 = vcmp.lt.s32.totalorder %v834, 0
  %v836 = vsub.s32 0, %v834
  %v837 = vsel %vm835, %v836, %v834
  %v838 = vclz %v837
  %v839 = vsub.s32 %v838, 2
  %vm840 = vcmp.gt.s32.totalorder 0, %v839
  %v841 = vsel %vm840, 0, %v839
  %v842 = vsub.s32 32, %v841
  %v843 = vshll.u32 %v834, %v841
  %v844 = vshrl.u32 %v826, %v842
  %v845 = vor.u32 %v843, %v844
  %v846 = vsub.s32 4294967266, %v841
  %v847 = vadd.s32 %v846, 127
  %v848 = vshll.u32 %v847, 23
  %v849 = vor.u32 4788187, %v848
  %v850 = vand.u32 2147483647, %v849
  %v852 = vcvt.s32.f32 %v845
  %v853 = vmul.f32 %v852, %v850
  %v854 = vxor.u32 %v853, 2147483648
  %v855 = vsel %vm772, %v854, %v853
  %v856 = vsub.s32 4, %v832
  %v857 = vsel %vm772, %v856, %v832
  %v858 = vsel %vm771, %v732, %v855
  %v859 = vsel %vm771, 0, %v857
  %v860 = vcosq.f32.pop %v858
  %v861 = vsinq.f32.pop %v858
  %vm862 = vweird.f32 %v732
  %v863 = vadd.s32 %v859, 3
  %v864 = vand.u32 %v863, 3
  %vm865 = vcmp.lt.s32.totalorder %v864, 2
  %vm866 = vcmp.eq.s32.totalorder %v864, 0
  %v867 = vxor.u32 %v861, 2147483648
  %v868 = vsel %vm866, %v860, %v867
  %vm869 = vcmp.eq.s32.totalorder %v864, 2
  %v870 = vxor.u32 %v860, 2147483648
  %v871 = vsel %vm869, %v870, %v861
  %v872 = vsel %vm865, %v868, %v871
  %v873 = vsel %vm862, nan, %v872
  %v874 = vand.u32 2147483647, %v737
  %vm875 = vcmp.le.f32.partialorder %v874, 0.7853982
  %vm876 = vcmp.lt.s32.totalorder %v737, 0
  %v877 = vand.u32 %v737, 2139095040
  %v878 = vshrl.u32 %v877, 23
  %v879 = vsub.s32 %v878, 127
  %v880 = vand.u32 2147483647, %v737
  %v881 = vand.u32 %v880, 8388607
  %v882 = vor.u32 %v881, 8388608
  %v883 = vsub.s32 0, %v882
  %v884 = vadd.s32 %v879, 1
  %vm885 = vcmp.gt.s32.totalorder %v884, 0
  %v886 = vsel %vm885, %v884, 0
  %v887 = vshrl.u32 %v886, 5
  %v888 = vand.u32 %v886, 31
  %v889 = vsub.s32 32, %v888
  %v890 = vshrl.u32 683565275, %v889
  %v891 = vshll.u32 683565275, %v888
  %v892 = vshrl.u32 2475754826, %v889
  %v893 = vor.u32 %v891, %v892
  %v894 = vshll.u32 2475754826, %v888
  %v895 = vshrl.u32 2131351028, %v889
  %v896 = vor.u32 %v894, %v895
  %v897 = vshll.u32 2131351028, %v888
  %v898 = vshrl.u32 2102212464, %v889
  %v899 = vor.u32 %v897, %v898
  %v900 = vshll.u32 2102212464, %v888
  %v901 = vshrl.u32 920167782, %v889
  %v902 = vor.u32 %v900, %v901
  %v903 = vshll.u32 920167782, %v888
  %v904 = vshrl.u32 1326507024, %v889
  %v905 = vor.u32 %v903, %v904
  %vm906 = vcmp.lt.s32.totalorder %v887, 1
  %vm907 = vcmp.lt.s32.totalorder %v887, 2
  %vm908 = vcmp.lt.s32.totalorder %v887, 3
  %vm909 = vcmp.lt.s32.totalorder %v887, 4
  %v910 = vsel %vm906, %v890, %v893
  %v911 = vsel %vm909, %v899, 2102212464
  %v912 = vsel %vm908, %v896, %v911
  %v913 = vsel %vm907, %v910, %v912
  %v914 = vsel %vm906, %v893, %v896
  %v915 = vsel %vm909, %v902, 920167782
  %v916 = vsel %vm908, %v899, %v915
  %v917 = vsel %vm907, %v914, %v916
  %v918 = vsel %vm906, %v896, %v899
  %v919 = vsel %vm909, %v905, 1326507024
  %v920 = vsel %vm908, %v902, %v919
  %v921 = vsel %vm907, %v918, %v920
  %v922 = vshll.u32 %v882, 8
  %v923 = vmul.u32.u64.compose %v922, %v921
  %v924 = vextract.low.u32 %v923
  %v925 = vextract.high.u32 %v923
  %v926 = vmul.u32.u64.compose %v922, %v917
  %v927 = vextract.low.u32 %v926
  %v928 = vextract.high.u32 %v926
  %v929 = vmul.u32 %v922, %v913
  %v930 = vadd.s32 %v925, %v927
  %vm931 = vc.u32 %v925, %v927
  %v932 = vadd.s32 %v928, 1
  %v933 = vsel %vm931, %v932, %v928
  %v934 = vadd.s32 %v929, %v933
  %v935 = vadd.s32 %v934, 536870912
  %v936 = vshrl.u32 %v935, 30
  %v937 = vshll.u32 %v936, 30
  %v938 = vsub.s32 %v934, %v937
  %vm939 = vcmp.lt.s32.totalorder %v938, 0
  %v940 = vsub.s32 0, %v938
  %v941 = vsel %vm939, %v940, %v938
  %v942 = vclz %v941
  %v943 = vsub.s32 %v942, 2
  %vm944 = vcmp.gt.s32.totalorder 0, %v943
  %v945 = vsel %vm944, 0, %v943
  %v946 = vsub.s32 32, %v945
  %v947 = vshll.u32 %v938, %v945
  %v948 = vshrl.u32 %v930, %v946
  %v949 = vor.u32 %v947, %v948
  %v950 = vsub.s32 4294967266, %v945
  %v951 = vadd.s32 %v950, 127
  %v952 = vshll.u32 %v951, 23
  %v953 = vor.u32 4788187, %v952
  %v954 = vand.u32 2147483647, %v953
  %v956 = vcvt.s32.f32 %v949
  %v957 = vmul.f32 %v956, %v954
  %v958 = vxor.u32 %v957, 2147483648
  %v959 = vsel %vm876, %v958, %v957
  %v960 = vsub.s32 4, %v936
  %v961 = vsel %vm876, %v960, %v936
  %v962 = vsel %vm875, %v737, %v959
  %v963 = vsel %vm875, 0, %v961
  %v964 = vcosq.f32.pop %v962
  %v965 = vsinq.f32.pop %v962
  %vm966 = vweird.f32 %v737
  %v967 = vadd.s32 %v963, 3
  %v968 = vand.u32 %v967, 3
  %vm969 = vcmp.lt.s32.totalorder %v968, 2
  %vm970 = vcmp.eq.s32.totalorder %v968, 0
  %v971 = vxor.u32 %v965, 2147483648
  %v972 = vsel %vm970, %v964, %v971
  %vm973 = vcmp.eq.s32.totalorder %v968, 2
  %v974 = vxor.u32 %v964, 2147483648
  %v975 = vsel %vm973, %v974, %v965
  %v976 = vsel %vm969, %v972, %v975
  %v977 = vsel %vm966, nan, %v976
  %v978 = vand.u32 2147483647, %v742
  %vm979 = vcmp.le.f32.partialorder %v978, 0.7853982
  %vm980 = vcmp.lt.s32.totalorder %v742, 0
  %v981 = vand.u32 %v742, 2139095040
  %v982 = vshrl.u32 %v981, 23
  %v983 = vsub.s32 %v982, 127
  %v984 = vand.u32 2147483647, %v742
  %v985 = vand.u32 %v984, 8388607
  %v986 = vor.u32 %v985, 8388608
  %v987 = vsub.s32 0, %v986
  %v988 = vadd.s32 %v983, 1
  %vm989 = vcmp.gt.s32.totalorder %v988, 0
  %v990 = vsel %vm989, %v988, 0
  %v991 = vshrl.u32 %v990, 5
  %v992 = vand.u32 %v990, 31
  %v993 = vsub.s32 32, %v992
  %v994 = vshrl.u32 683565275, %v993
  %v995 = vshll.u32 683565275, %v992
  %v996 = vshrl.u32 2475754826, %v993
  %v997 = vor.u32 %v995, %v996
  %v998 = vshll.u32 2475754826, %v992
  %v999 = vshrl.u32 2131351028, %v993
  %v1000 = vor.u32 %v998, %v999
  %v1001 = vshll.u32 2131351028, %v992
  %v1002 = vshrl.u32 2102212464, %v993
  %v1003 = vor.u32 %v1001, %v1002
  %v1004 = vshll.u32 2102212464, %v992
  %v1005 = vshrl.u32 920167782, %v993
  %v1006 = vor.u32 %v1004, %v1005
  %v1007 = vshll.u32 920167782, %v992
  %v1008 = vshrl.u32 1326507024, %v993
  %v1009 = vor.u32 %v1007, %v1008
  %vm1010 = vcmp.lt.s32.totalorder %v991, 1
  %vm1011 = vcmp.lt.s32.totalorder %v991, 2
  %vm1012 = vcmp.lt.s32.totalorder %v991, 3
  %vm1013 = vcmp.lt.s32.totalorder %v991, 4
  %v1014 = vsel %vm1010, %v994, %v997
  %v1015 = vsel %vm1013, %v1003, 2102212464
  %v1016 = vsel %vm1012, %v1000, %v1015
  %v1017 = vsel %vm1011, %v1014, %v1016
  %v1018 = vsel %vm1010, %v997, %v1000
  %v1019 = vsel %vm1013, %v1006, 920167782
  %v1020 = vsel %vm1012, %v1003, %v1019
  %v1021 = vsel %vm1011, %v1018, %v1020
  %v1022 = vsel %vm1010, %v1000, %v1003
  %v1023 = vsel %vm1013, %v1009, 1326507024
  %v1024 = vsel %vm1012, %v1006, %v1023
  %v1025 = vsel %vm1011, %v1022, %v1024
  %v1026 = vshll.u32 %v986, 8
  %v1027 = vmul.u32.u64.compose %v1026, %v1025
  %v1028 = vextract.low.u32 %v1027
  %v1029 = vextract.high.u32 %v1027
  %v1030 = vmul.u32.u64.compose %v1026, %v1021
  %v1031 = vextract.low.u32 %v1030
  %v1032 = vextract.high.u32 %v1030
  %v1033 = vmul.u32 %v1026, %v1017
  %v1034 = vadd.s32 %v1029, %v1031
  %vm1035 = vc.u32 %v1029, %v1031
  %v1036 = vadd.s32 %v1032, 1
  %v1037 = vsel %vm1035, %v1036, %v1032
  %v1038 = vadd.s32 %v1033, %v1037
  %v1039 = vadd.s32 %v1038, 536870912
  %v1040 = vshrl.u32 %v1039, 30
  %v1041 = vshll.u32 %v1040, 30
  %v1042 = vsub.s32 %v1038, %v1041
  %vm1043 = vcmp.lt.s32.totalorder %v1042, 0
  %v1044 = vsub.s32 0, %v1042
  %v1045 = vsel %vm1043, %v1044, %v1042
  %v1046 = vclz %v1045
  %v1047 = vsub.s32 %v1046, 2
  %vm1048 = vcmp.gt.s32.totalorder 0, %v1047
  %v1049 = vsel %vm1048, 0, %v1047
  %v1050 = vsub.s32 32, %v1049
  %v1051 = vshll.u32 %v1042, %v1049
  %v1052 = vshrl.u32 %v1034, %v1050
  %v1053 = vor.u32 %v1051, %v1052
  %v1054 = vsub.s32 4294967266, %v1049
  %v1055 = vadd.s32 %v1054, 127
  %v1056 = vshll.u32 %v1055, 23
  %v1057 = vor.u32 4788187, %v1056
  %v1058 = vand.u32 2147483647, %v1057
  %v1060 = vcvt.s32.f32 %v1053
  %v1061 = vmul.f32 %v1060, %v1058
  %v1062 = vxor.u32 %v1061, 2147483648
  %v1063 = vsel %vm980, %v1062, %v1061
  %v1064 = vsub.s32 4, %v1040
  %v1065 = vsel %vm980, %v1064, %v1040
  %v1066 = vsel %vm979, %v742, %v1063
  %v1067 = vsel %vm979, 0, %v1065
  %v1068 = vcosq.f32.pop %v1066
  %v1069 = vsinq.f32.pop %v1066
  %vm1070 = vweird.f32 %v742
  %v1071 = vadd.s32 %v1067, 3
  %v1072 = vand.u32 %v1071, 3
  %vm1073 = vcmp.lt.s32.totalorder %v1072, 2
  %vm1074 = vcmp.eq.s32.totalorder %v1072, 0
  %v1075 = vxor.u32 %v1069, 2147483648
  %v1076 = vsel %vm1074, %v1068, %v1075
  %vm1077 = vcmp.eq.s32.totalorder %v1072, 2
  %v1078 = vxor.u32 %v1068, 2147483648
  %v1079 = vsel %vm1077, %v1078, %v1069
  %v1080 = vsel %vm1073, %v1076, %v1079
  %v1081 = vsel %vm1070, nan, %v1080
  %v1082 = vand.u32 2147483647, %v747
  %vm1083 = vcmp.le.f32.partialorder %v1082, 0.7853982
  %vm1084 = vcmp.lt.s32.totalorder %v747, 0
  %v1085 = vand.u32 %v747, 2139095040
  %v1086 = vshrl.u32 %v1085, 23
  %v1087 = vsub.s32 %v1086, 127
  %v1088 = vand.u32 2147483647, %v747
  %v1089 = vand.u32 %v1088, 8388607
  %v1090 = vor.u32 %v1089, 8388608
  %v1091 = vsub.s32 0, %v1090
  %v1092 = vadd.s32 %v1087, 1
  %vm1093 = vcmp.gt.s32.totalorder %v1092, 0
  %v1094 = vsel %vm1093, %v1092, 0
  %v1095 = vshrl.u32 %v1094, 5
  %v1096 = vand.u32 %v1094, 31
  %v1097 = vsub.s32 32, %v1096
  %v1098 = vshrl.u32 683565275, %v1097
  %v1099 = vshll.u32 683565275, %v1096
  %v1100 = vshrl.u32 2475754826, %v1097
  %v1101 = vor.u32 %v1099, %v1100
  %v1102 = vshll.u32 2475754826, %v1096
  %v1103 = vshrl.u32 2131351028, %v1097
  %v1104 = vor.u32 %v1102, %v1103
  %v1105 = vshll.u32 2131351028, %v1096
  %v1106 = vshrl.u32 2102212464, %v1097
  %v1107 = vor.u32 %v1105, %v1106
  %v1108 = vshll.u32 2102212464, %v1096
  %v1109 = vshrl.u32 920167782, %v1097
  %v1110 = vor.u32 %v1108, %v1109
  %v1111 = vshll.u32 920167782, %v1096
  %v1112 = vshrl.u32 1326507024, %v1097
  %v1113 = vor.u32 %v1111, %v1112
  %vm1114 = vcmp.lt.s32.totalorder %v1095, 1
  %vm1115 = vcmp.lt.s32.totalorder %v1095, 2
  %vm1116 = vcmp.lt.s32.totalorder %v1095, 3
  %vm1117 = vcmp.lt.s32.totalorder %v1095, 4
  %v1118 = vsel %vm1114, %v1098, %v1101
  %v1119 = vsel %vm1117, %v1107, 2102212464
  %v1120 = vsel %vm1116, %v1104, %v1119
  %v1121 = vsel %vm1115, %v1118, %v1120
  %v1122 = vsel %vm1114, %v1101, %v1104
  %v1123 = vsel %vm1117, %v1110, 920167782
  %v1124 = vsel %vm1116, %v1107, %v1123
  %v1125 = vsel %vm1115, %v1122, %v1124
  %v1126 = vsel %vm1114, %v1104, %v1107
  %v1127 = vsel %vm1117, %v1113, 1326507024
  %v1128 = vsel %vm1116, %v1110, %v1127
  %v1129 = vsel %vm1115, %v1126, %v1128
  %v1130 = vshll.u32 %v1090, 8
  %v1131 = vmul.u32.u64.compose %v1130, %v1129
  %v1132 = vextract.low.u32 %v1131
  %v1133 = vextract.high.u32 %v1131
  %v1134 = vmul.u32.u64.compose %v1130, %v1125
  %v1135 = vextract.low.u32 %v1134
  %v1136 = vextract.high.u32 %v1134
  %v1137 = vmul.u32 %v1130, %v1121
  %v1138 = vadd.s32 %v1133, %v1135
  %vm1139 = vc.u32 %v1133, %v1135
  %v1140 = vadd.s32 %v1136, 1
  %v1141 = vsel %vm1139, %v1140, %v1136
  %v1142 = vadd.s32 %v1137, %v1141
  %v1143 = vadd.s32 %v1142, 536870912
  %v1144 = vshrl.u32 %v1143, 30
  %v1145 = vshll.u32 %v1144, 30
  %v1146 = vsub.s32 %v1142, %v1145
  %vm1147 = vcmp.lt.s32.totalorder %v1146, 0
  %v1148 = vsub.s32 0, %v1146
  %v1149 = vsel %vm1147, %v1148, %v1146
  %v1150 = vclz %v1149
  %v1151 = vsub.s32 %v1150, 2
  %vm1152 = vcmp.gt.s32.totalorder 0, %v1151
  %v1153 = vsel %vm1152, 0, %v1151
  %v1154 = vsub.s32 32, %v1153
  %v1155 = vshll.u32 %v1146, %v1153
  %v1156 = vshrl.u32 %v1138, %v1154
  %v1157 = vor.u32 %v1155, %v1156
  %v1158 = vsub.s32 4294967266, %v1153
  %v1159 = vadd.s32 %v1158, 127
  %v1160 = vshll.u32 %v1159, 23
  %v1161 = vor.u32 4788187, %v1160
  %v1162 = vand.u32 2147483647, %v1161
  %v1164 = vcvt.s32.f32 %v1157
  %v1165 = vmul.f32 %v1164, %v1162
  %v1166 = vxor.u32 %v1165, 2147483648
  %v1167 = vsel %vm1084, %v1166, %v1165
  %v1168 = vsub.s32 4, %v1144
  %v1169 = vsel %vm1084, %v1168, %v1144
  %v1170 = vsel %vm1083, %v747, %v1167
  %v1171 = vsel %vm1083, 0, %v1169
  %v1172 = vcosq.f32.pop %v1170
  %v1173 = vsinq.f32.pop %v1170
  %vm1174 = vweird.f32 %v747
  %v1175 = vadd.s32 %v1171, 3
  %v1176 = vand.u32 %v1175, 3
  %vm1177 = vcmp.lt.s32.totalorder %v1176, 2
  %vm1178 = vcmp.eq.s32.totalorder %v1176, 0
  %v1179 = vxor.u32 %v1173, 2147483648
  %v1180 = vsel %vm1178, %v1172, %v1179
  %vm1181 = vcmp.eq.s32.totalorder %v1176, 2
  %v1182 = vxor.u32 %v1172, 2147483648
  %v1183 = vsel %vm1181, %v1182, %v1173
  %v1184 = vsel %vm1177, %v1180, %v1183
  %v1185 = vsel %vm1174, nan, %v1184
  %v1186 = vand.u32 2147483647, %v752
  %vm1187 = vcmp.le.f32.partialorder %v1186, 0.7853982
  %vm1188 = vcmp.lt.s32.totalorder %v752, 0
  %v1189 = vand.u32 %v752, 2139095040
  %v1190 = vshrl.u32 %v1189, 23
  %v1191 = vsub.s32 %v1190, 127
  %v1192 = vand.u32 2147483647, %v752
  %v1193 = vand.u32 %v1192, 8388607
  %v1194 = vor.u32 %v1193, 8388608
  %v1195 = vsub.s32 0, %v1194
  %v1196 = vadd.s32 %v1191, 1
  %vm1197 = vcmp.gt.s32.totalorder %v1196, 0
  %v1198 = vsel %vm1197, %v1196, 0
  %v1199 = vshrl.u32 %v1198, 5
  %v1200 = vand.u32 %v1198, 31
  %v1201 = vsub.s32 32, %v1200
  %v1202 = vshrl.u32 683565275, %v1201
  %v1203 = vshll.u32 683565275, %v1200
  %v1204 = vshrl.u32 2475754826, %v1201
  %v1205 = vor.u32 %v1203, %v1204
  %v1206 = vshll.u32 2475754826, %v1200
  %v1207 = vshrl.u32 2131351028, %v1201
  %v1208 = vor.u32 %v1206, %v1207
  %v1209 = vshll.u32 2131351028, %v1200
  %v1210 = vshrl.u32 2102212464, %v1201
  %v1211 = vor.u32 %v1209, %v1210
  %v1212 = vshll.u32 2102212464, %v1200
  %v1213 = vshrl.u32 920167782, %v1201
  %v1214 = vor.u32 %v1212, %v1213
  %v1215 = vshll.u32 920167782, %v1200
  %v1216 = vshrl.u32 1326507024, %v1201
  %v1217 = vor.u32 %v1215, %v1216
  %vm1218 = vcmp.lt.s32.totalorder %v1199, 1
  %vm1219 = vcmp.lt.s32.totalorder %v1199, 2
  %vm1220 = vcmp.lt.s32.totalorder %v1199, 3
  %vm1221 = vcmp.lt.s32.totalorder %v1199, 4
  %v1222 = vsel %vm1218, %v1202, %v1205
  %v1223 = vsel %vm1221, %v1211, 2102212464
  %v1224 = vsel %vm1220, %v1208, %v1223
  %v1225 = vsel %vm1219, %v1222, %v1224
  %v1226 = vsel %vm1218, %v1205, %v1208
  %v1227 = vsel %vm1221, %v1214, 920167782
  %v1228 = vsel %vm1220, %v1211, %v1227
  %v1229 = vsel %vm1219, %v1226, %v1228
  %v1230 = vsel %vm1218, %v1208, %v1211
  %v1231 = vsel %vm1221, %v1217, 1326507024
  %v1232 = vsel %vm1220, %v1214, %v1231
  %v1233 = vsel %vm1219, %v1230, %v1232
  %v1234 = vshll.u32 %v1194, 8
  %v1235 = vmul.u32.u64.compose %v1234, %v1233
  %v1236 = vextract.low.u32 %v1235
  %v1237 = vextract.high.u32 %v1235
  %v1238 = vmul.u32.u64.compose %v1234, %v1229
  %v1239 = vextract.low.u32 %v1238
  %v1240 = vextract.high.u32 %v1238
  %v1241 = vmul.u32 %v1234, %v1225
  %v1242 = vadd.s32 %v1237, %v1239
  %vm1243 = vc.u32 %v1237, %v1239
  %v1244 = vadd.s32 %v1240, 1
  %v1245 = vsel %vm1243, %v1244, %v1240
  %v1246 = vadd.s32 %v1241, %v1245
  %v1247 = vadd.s32 %v1246, 536870912
  %v1248 = vshrl.u32 %v1247, 30
  %v1249 = vshll.u32 %v1248, 30
  %v1250 = vsub.s32 %v1246, %v1249
  %vm1251 = vcmp.lt.s32.totalorder %v1250, 0
  %v1252 = vsub.s32 0, %v1250
  %v1253 = vsel %vm1251, %v1252, %v1250
  %v1254 = vclz %v1253
  %v1255 = vsub.s32 %v1254, 2
  %vm1256 = vcmp.gt.s32.totalorder 0, %v1255
  %v1257 = vsel %vm1256, 0, %v1255
  %v1258 = vsub.s32 32, %v1257
  %v1259 = vshll.u32 %v1250, %v1257
  %v1260 = vshrl.u32 %v1242, %v1258
  %v1261 = vor.u32 %v1259, %v1260
  %v1262 = vsub.s32 4294967266, %v1257
  %v1263 = vadd.s32 %v1262, 127
  %v1264 = vshll.u32 %v1263, 23
  %v1265 = vor.u32 4788187, %v1264
  %v1266 = vand.u32 2147483647, %v1265
  %v1268 = vcvt.s32.f32 %v1261
  %v1269 = vmul.f32 %v1268, %v1266
  %v1270 = vxor.u32 %v1269, 2147483648
  %v1271 = vsel %vm1188, %v1270, %v1269
  %v1272 = vsub.s32 4, %v1248
  %v1273 = vsel %vm1188, %v1272, %v1248
  %v1274 = vsel %vm1187, %v752, %v1271
  %v1275 = vsel %vm1187, 0, %v1273
  %v1276 = vcosq.f32.pop %v1274
  %v1277 = vsinq.f32.pop %v1274
  %vm1278 = vweird.f32 %v752
  %v1279 = vadd.s32 %v1275, 3
  %v1280 = vand.u32 %v1279, 3
  %vm1281 = vcmp.lt.s32.totalorder %v1280, 2
  %vm1282 = vcmp.eq.s32.totalorder %v1280, 0
  %v1283 = vxor.u32 %v1277, 2147483648
  %v1284 = vsel %vm1282, %v1276, %v1283
  %vm1285 = vcmp.eq.s32.totalorder %v1280, 2
  %v1286 = vxor.u32 %v1276, 2147483648
  %v1287 = vsel %vm1285, %v1286, %v1277
  %v1288 = vsel %vm1281, %v1284, %v1287
  %v1289 = vsel %vm1278, nan, %v1288
  %v1290 = vand.u32 2147483647, %v757
  %vm1291 = vcmp.le.f32.partialorder %v1290, 0.7853982
  %vm1292 = vcmp.lt.s32.totalorder %v757, 0
  %v1293 = vand.u32 %v757, 2139095040
  %v1294 = vshrl.u32 %v1293, 23
  %v1295 = vsub.s32 %v1294, 127
  %v1296 = vand.u32 2147483647, %v757
  %v1297 = vand.u32 %v1296, 8388607
  %v1298 = vor.u32 %v1297, 8388608
  %v1299 = vsub.s32 0, %v1298
  %v1300 = vadd.s32 %v1295, 1
  %vm1301 = vcmp.gt.s32.totalorder %v1300, 0
  %v1302 = vsel %vm1301, %v1300, 0
  %v1303 = vshrl.u32 %v1302, 5
  %v1304 = vand.u32 %v1302, 31
  %v1305 = vsub.s32 32, %v1304
  %v1306 = vshrl.u32 683565275, %v1305
  %v1307 = vshll.u32 683565275, %v1304
  %v1308 = vshrl.u32 2475754826, %v1305
  %v1309 = vor.u32 %v1307, %v1308
  %v1310 = vshll.u32 2475754826, %v1304
  %v1311 = vshrl.u32 2131351028, %v1305
  %v1312 = vor.u32 %v1310, %v1311
  %v1313 = vshll.u32 2131351028, %v1304
  %v1314 = vshrl.u32 2102212464, %v1305
  %v1315 = vor.u32 %v1313, %v1314
  %v1316 = vshll.u32 2102212464, %v1304
  %v1317 = vshrl.u32 920167782, %v1305
  %v1318 = vor.u32 %v1316, %v1317
  %v1319 = vshll.u32 920167782, %v1304
  %v1320 = vshrl.u32 1326507024, %v1305
  %v1321 = vor.u32 %v1319, %v1320
  %vm1322 = vcmp.lt.s32.totalorder %v1303, 1
  %vm1323 = vcmp.lt.s32.totalorder %v1303, 2
  %vm1324 = vcmp.lt.s32.totalorder %v1303, 3
  %vm1325 = vcmp.lt.s32.totalorder %v1303, 4
  %v1326 = vsel %vm1322, %v1306, %v1309
  %v1327 = vsel %vm1325, %v1315, 2102212464
  %v1328 = vsel %vm1324, %v1312, %v1327
  %v1329 = vsel %vm1323, %v1326, %v1328
  %v1330 = vsel %vm1322, %v1309, %v1312
  %v1331 = vsel %vm1325, %v1318, 920167782
  %v1332 = vsel %vm1324, %v1315, %v1331
  %v1333 = vsel %vm1323, %v1330, %v1332
  %v1334 = vsel %vm1322, %v1312, %v1315
  %v1335 = vsel %vm1325, %v1321, 1326507024
  %v1336 = vsel %vm1324, %v1318, %v1335
  %v1337 = vsel %vm1323, %v1334, %v1336
  %v1338 = vshll.u32 %v1298, 8
  %v1339 = vmul.u32.u64.compose %v1338, %v1337
  %v1340 = vextract.low.u32 %v1339
  %v1341 = vextract.high.u32 %v1339
  %v1342 = vmul.u32.u64.compose %v1338, %v1333
  %v1343 = vextract.low.u32 %v1342
  %v1344 = vextract.high.u32 %v1342
  %v1345 = vmul.u32 %v1338, %v1329
  %v1346 = vadd.s32 %v1341, %v1343
  %vm1347 = vc.u32 %v1341, %v1343
  %v1348 = vadd.s32 %v1344, 1
  %v1349 = vsel %vm1347, %v1348, %v1344
  %v1350 = vadd.s32 %v1345, %v1349
  %v1351 = vadd.s32 %v1350, 536870912
  %v1352 = vshrl.u32 %v1351, 30
  %v1353 = vshll.u32 %v1352, 30
  %v1354 = vsub.s32 %v1350, %v1353
  %vm1355 = vcmp.lt.s32.totalorder %v1354, 0
  %v1356 = vsub.s32 0, %v1354
  %v1357 = vsel %vm1355, %v1356, %v1354
  %v1358 = vclz %v1357
  %v1359 = vsub.s32 %v1358, 2
  %vm1360 = vcmp.gt.s32.totalorder 0, %v1359
  %v1361 = vsel %vm1360, 0, %v1359
  %v1362 = vsub.s32 32, %v1361
  %v1363 = vshll.u32 %v1354, %v1361
  %v1364 = vshrl.u32 %v1346, %v1362
  %v1365 = vor.u32 %v1363, %v1364
  %v1366 = vsub.s32 4294967266, %v1361
  %v1367 = vadd.s32 %v1366, 127
  %v1368 = vshll.u32 %v1367, 23
  %v1369 = vor.u32 4788187, %v1368
  %v1370 = vand.u32 2147483647, %v1369
  %v1372 = vcvt.s32.f32 %v1365
  %v1373 = vmul.f32 %v1372, %v1370
  %v1374 = vxor.u32 %v1373, 2147483648
  %v1375 = vsel %vm1292, %v1374, %v1373
  %v1376 = vsub.s32 4, %v1352
  %v1377 = vsel %vm1292, %v1376, %v1352
  %v1378 = vsel %vm1291, %v757, %v1375
  %v1379 = vsel %vm1291, 0, %v1377
  %v1380 = vcosq.f32.pop %v1378
  %v1381 = vsinq.f32.pop %v1378
  %vm1382 = vweird.f32 %v757
  %v1383 = vadd.s32 %v1379, 3
  %v1384 = vand.u32 %v1383, 3
  %vm1385 = vcmp.lt.s32.totalorder %v1384, 2
  %vm1386 = vcmp.eq.s32.totalorder %v1384, 0
  %v1387 = vxor.u32 %v1381, 2147483648
  %v1388 = vsel %vm1386, %v1380, %v1387
  %vm1389 = vcmp.eq.s32.totalorder %v1384, 2
  %v1390 = vxor.u32 %v1380, 2147483648
  %v1391 = vsel %vm1389, %v1390, %v1381
  %v1392 = vsel %vm1385, %v1388, %v1391
  %v1393 = vsel %vm1382, nan, %v1392
  %v1394 = vand.u32 2147483647, %v762
  %vm1395 = vcmp.le.f32.partialorder %v1394, 0.7853982
  %vm1396 = vcmp.lt.s32.totalorder %v762, 0
  %v1397 = vand.u32 %v762, 2139095040
  %v1398 = vshrl.u32 %v1397, 23
  %v1399 = vsub.s32 %v1398, 127
  %v1400 = vand.u32 2147483647, %v762
  %v1401 = vand.u32 %v1400, 8388607
  %v1402 = vor.u32 %v1401, 8388608
  %v1403 = vsub.s32 0, %v1402
  %v1404 = vadd.s32 %v1399, 1
  %vm1405 = vcmp.gt.s32.totalorder %v1404, 0
  %v1406 = vsel %vm1405, %v1404, 0
  %v1407 = vshrl.u32 %v1406, 5
  %v1408 = vand.u32 %v1406, 31
  %v1409 = vsub.s32 32, %v1408
  %v1410 = vshrl.u32 683565275, %v1409
  %v1411 = vshll.u32 683565275, %v1408
  %v1412 = vshrl.u32 2475754826, %v1409
  %v1413 = vor.u32 %v1411, %v1412
  %v1414 = vshll.u32 2475754826, %v1408
  %v1415 = vshrl.u32 2131351028, %v1409
  %v1416 = vor.u32 %v1414, %v1415
  %v1417 = vshll.u32 2131351028, %v1408
  %v1418 = vshrl.u32 2102212464, %v1409
  %v1419 = vor.u32 %v1417, %v1418
  %v1420 = vshll.u32 2102212464, %v1408
  %v1421 = vshrl.u32 920167782, %v1409
  %v1422 = vor.u32 %v1420, %v1421
  %v1423 = vshll.u32 920167782, %v1408
  %v1424 = vshrl.u32 1326507024, %v1409
  %v1425 = vor.u32 %v1423, %v1424
  %vm1426 = vcmp.lt.s32.totalorder %v1407, 1
  %vm1427 = vcmp.lt.s32.totalorder %v1407, 2
  %vm1428 = vcmp.lt.s32.totalorder %v1407, 3
  %vm1429 = vcmp.lt.s32.totalorder %v1407, 4
  %v1430 = vsel %vm1426, %v1410, %v1413
  %v1431 = vsel %vm1429, %v1419, 2102212464
  %v1432 = vsel %vm1428, %v1416, %v1431
  %v1433 = vsel %vm1427, %v1430, %v1432
  %v1434 = vsel %vm1426, %v1413, %v1416
  %v1435 = vsel %vm1429, %v1422, 920167782
  %v1436 = vsel %vm1428, %v1419, %v1435
  %v1437 = vsel %vm1427, %v1434, %v1436
  %v1438 = vsel %vm1426, %v1416, %v1419
  %v1439 = vsel %vm1429, %v1425, 1326507024
  %v1440 = vsel %vm1428, %v1422, %v1439
  %v1441 = vsel %vm1427, %v1438, %v1440
  %v1442 = vshll.u32 %v1402, 8
  %v1443 = vmul.u32.u64.compose %v1442, %v1441
  %v1444 = vextract.low.u32 %v1443
  %v1445 = vextract.high.u32 %v1443
  %v1446 = vmul.u32.u64.compose %v1442, %v1437
  %v1447 = vextract.low.u32 %v1446
  %v1448 = vextract.high.u32 %v1446
  %v1449 = vmul.u32 %v1442, %v1433
  %v1450 = vadd.s32 %v1445, %v1447
  %vm1451 = vc.u32 %v1445, %v1447
  %v1452 = vadd.s32 %v1448, 1
  %v1453 = vsel %vm1451, %v1452, %v1448
  %v1454 = vadd.s32 %v1449, %v1453
  %v1455 = vadd.s32 %v1454, 536870912
  %v1456 = vshrl.u32 %v1455, 30
  %v1457 = vshll.u32 %v1456, 30
  %v1458 = vsub.s32 %v1454, %v1457
  %vm1459 = vcmp.lt.s32.totalorder %v1458, 0
  %v1460 = vsub.s32 0, %v1458
  %v1461 = vsel %vm1459, %v1460, %v1458
  %v1462 = vclz %v1461
  %v1463 = vsub.s32 %v1462, 2
  %vm1464 = vcmp.gt.s32.totalorder 0, %v1463
  %v1465 = vsel %vm1464, 0, %v1463
  %v1466 = vsub.s32 32, %v1465
  %v1467 = vshll.u32 %v1458, %v1465
  %v1468 = vshrl.u32 %v1450, %v1466
  %v1469 = vor.u32 %v1467, %v1468
  %v1470 = vsub.s32 4294967266, %v1465
  %v1471 = vadd.s32 %v1470, 127
  %v1472 = vshll.u32 %v1471, 23
  %v1473 = vor.u32 4788187, %v1472
  %v1474 = vand.u32 2147483647, %v1473
  %v1476 = vcvt.s32.f32 %v1469
  %v1477 = vmul.f32 %v1476, %v1474
  %v1478 = vxor.u32 %v1477, 2147483648
  %v1479 = vsel %vm1396, %v1478, %v1477
  %v1480 = vsub.s32 4, %v1456
  %v1481 = vsel %vm1396, %v1480, %v1456
  %v1482 = vsel %vm1395, %v762, %v1479
  %v1483 = vsel %vm1395, 0, %v1481
  %v1484 = vcosq.f32.pop %v1482
  %v1485 = vsinq.f32.pop %v1482
  %vm1486 = vweird.f32 %v762
  %v1487 = vadd.s32 %v1483, 3
  %v1488 = vand.u32 %v1487, 3
  %vm1489 = vcmp.lt.s32.totalorder %v1488, 2
  %vm1490 = vcmp.eq.s32.totalorder %v1488, 0
  %v1491 = vxor.u32 %v1485, 2147483648
  %v1492 = vsel %vm1490, %v1484, %v1491
  %vm1493 = vcmp.eq.s32.totalorder %v1488, 2
  %v1494 = vxor.u32 %v1484, 2147483648
  %v1495 = vsel %vm1493, %v1494, %v1485
  %v1496 = vsel %vm1489, %v1492, %v1495
  %v1497 = vsel %vm1486, nan, %v1496
  %v1498 = vand.u32 2147483647, %v767
  %vm1499 = vcmp.le.f32.partialorder %v1498, 0.7853982
  %vm1500 = vcmp.lt.s32.totalorder %v767, 0
  %v1501 = vand.u32 %v767, 2139095040
  %v1502 = vshrl.u32 %v1501, 23
  %v1503 = vsub.s32 %v1502, 127
  %v1504 = vand.u32 2147483647, %v767
  %v1505 = vand.u32 %v1504, 8388607
  %v1506 = vor.u32 %v1505, 8388608
  %v1507 = vsub.s32 0, %v1506
  %v1508 = vadd.s32 %v1503, 1
  %vm1509 = vcmp.gt.s32.totalorder %v1508, 0
  %v1510 = vsel %vm1509, %v1508, 0
  %v1511 = vshrl.u32 %v1510, 5
  %v1512 = vand.u32 %v1510, 31
  %v1513 = vsub.s32 32, %v1512
  %v1514 = vshrl.u32 683565275, %v1513
  %v1515 = vshll.u32 683565275, %v1512
  %v1516 = vshrl.u32 2475754826, %v1513
  %v1517 = vor.u32 %v1515, %v1516
  %v1518 = vshll.u32 2475754826, %v1512
  %v1519 = vshrl.u32 2131351028, %v1513
  %v1520 = vor.u32 %v1518, %v1519
  %v1521 = vshll.u32 2131351028, %v1512
  %v1522 = vshrl.u32 2102212464, %v1513
  %v1523 = vor.u32 %v1521, %v1522
  %v1524 = vshll.u32 2102212464, %v1512
  %v1525 = vshrl.u32 920167782, %v1513
  %v1526 = vor.u32 %v1524, %v1525
  %v1527 = vshll.u32 920167782, %v1512
  %v1528 = vshrl.u32 1326507024, %v1513
  %v1529 = vor.u32 %v1527, %v1528
  %vm1530 = vcmp.lt.s32.totalorder %v1511, 1
  %vm1531 = vcmp.lt.s32.totalorder %v1511, 2
  %vm1532 = vcmp.lt.s32.totalorder %v1511, 3
  %vm1533 = vcmp.lt.s32.totalorder %v1511, 4
  %v1534 = vsel %vm1530, %v1514, %v1517
  %v1535 = vsel %vm1533, %v1523, 2102212464
  %v1536 = vsel %vm1532, %v1520, %v1535
  %v1537 = vsel %vm1531, %v1534, %v1536
  %v1538 = vsel %vm1530, %v1517, %v1520
  %v1539 = vsel %vm1533, %v1526, 920167782
  %v1540 = vsel %vm1532, %v1523, %v1539
  %v1541 = vsel %vm1531, %v1538, %v1540
  %v1542 = vsel %vm1530, %v1520, %v1523
  %v1543 = vsel %vm1533, %v1529, 1326507024
  %v1544 = vsel %vm1532, %v1526, %v1543
  %v1545 = vsel %vm1531, %v1542, %v1544
  %v1546 = vshll.u32 %v1506, 8
  %v1547 = vmul.u32.u64.compose %v1546, %v1545
  %v1548 = vextract.low.u32 %v1547
  %v1549 = vextract.high.u32 %v1547
  %v1550 = vmul.u32.u64.compose %v1546, %v1541
  %v1551 = vextract.low.u32 %v1550
  %v1552 = vextract.high.u32 %v1550
  %v1553 = vmul.u32 %v1546, %v1537
  %v1554 = vadd.s32 %v1549, %v1551
  %vm1555 = vc.u32 %v1549, %v1551
  %v1556 = vadd.s32 %v1552, 1
  %v1557 = vsel %vm1555, %v1556, %v1552
  %v1558 = vadd.s32 %v1553, %v1557
  %v1559 = vadd.s32 %v1558, 536870912
  %v1560 = vshrl.u32 %v1559, 30
  %v1561 = vshll.u32 %v1560, 30
  %v1562 = vsub.s32 %v1558, %v1561
  %vm1563 = vcmp.lt.s32.totalorder %v1562, 0
  %v1564 = vsub.s32 0, %v1562
  %v1565 = vsel %vm1563, %v1564, %v1562
  %v1566 = vclz %v1565
  %v1567 = vsub.s32 %v1566, 2
  %vm1568 = vcmp.gt.s32.totalorder 0, %v1567
  %v1569 = vsel %vm1568, 0, %v1567
  %v1570 = vsub.s32 32, %v1569
  %v1571 = vshll.u32 %v1562, %v1569
  %v1572 = vshrl.u32 %v1554, %v1570
  %v1573 = vor.u32 %v1571, %v1572
  %v1574 = vsub.s32 4294967266, %v1569
  %v1575 = vadd.s32 %v1574, 127
  %v1576 = vshll.u32 %v1575, 23
  %v1577 = vor.u32 4788187, %v1576
  %v1578 = vand.u32 2147483647, %v1577
  %v1580 = vcvt.s32.f32 %v1573
  %v1581 = vmul.f32 %v1580, %v1578
  %v1582 = vxor.u32 %v1581, 2147483648
  %v1583 = vsel %vm1500, %v1582, %v1581
  %v1584 = vsub.s32 4, %v1560
  %v1585 = vsel %vm1500, %v1584, %v1560
  %v1586 = vsel %vm1499, %v767, %v1583
  %v1587 = vsel %vm1499, 0, %v1585
  %v1588 = vcosq.f32.pop %v1586
  %v1589 = vsinq.f32.pop %v1586
  %vm1590 = vweird.f32 %v767
  %v1591 = vadd.s32 %v1587, 3
  %v1592 = vand.u32 %v1591, 3
  %vm1593 = vcmp.lt.s32.totalorder %v1592, 2
  %vm1594 = vcmp.eq.s32.totalorder %v1592, 0
  %v1595 = vxor.u32 %v1589, 2147483648
  %v1596 = vsel %vm1594, %v1588, %v1595
  %vm1597 = vcmp.eq.s32.totalorder %v1592, 2
  %v1598 = vxor.u32 %v1588, 2147483648
  %v1599 = vsel %vm1597, %v1598, %v1589
  %v1600 = vsel %vm1593, %v1596, %v1599
  %v1601 = vsel %vm1590, nan, %v1600
  %v1602 = vmul.f32 %v873, %v873
  %v1603 = vmul.f32 %v977, %v977
  %v1604 = vmul.f32 %v1081, %v1081
  %v1605 = vmul.f32 %v1185, %v1185
  %v1606 = vmul.f32 %v1289, %v1289
  %v1607 = vmul.f32 %v1393, %v1393
  %v1608 = vmul.f32 %v1497, %v1497
  %v1609 = vmul.f32 %v1601, %v1601
  %v1610 = vadd.f32 %v732, %v1602
  %v1611 = vadd.f32 %v737, %v1603
  %v1612 = vadd.f32 %v742, %v1604
  %v1613 = vadd.f32 %v747, %v1605
  %v1614 = vadd.f32 %v752, %v1606
  %v1615 = vadd.f32 %v757, %v1607
  %v1616 = vadd.f32 %v762, %v1608
  %v1617 = vadd.f32 %v767, %v1609
  %v1618 = vld [vmem:[%s3] sm:$0xff]
  %v1619 = vld [vmem:[%s3 + $0x8] sm:$0xff]
  %v1620 = vld [vmem:[%s3 + $0x10] sm:$0xff]
  %v1621 = vld [vmem:[%s3 + $0x18] sm:$0xff]
  %v1622 = vld [vmem:[%s3 + $0x20] sm:$0xff]
  %v1623 = vld [vmem:[%s3 + $0x28] sm:$0xff]
  %v1624 = vld [vmem:[%s3 + $0x30] sm:$0xff]
  %v1625 = vld [vmem:[%s3 + $0x38] sm:$0xff]
  %v1626 = vld [vmem:[%s3 + $0x40] sm:$0xff]
  %v1627 = vld [vmem:[%s3 + $0x48] sm:$0xff]
  %v1628 = vld [vmem:[%s3 + $0x50] sm:$0xff]
  %v1629 = vld [vmem:[%s3 + $0x58] sm:$0xff]
  %v1630 = vld [vmem:[%s3 + $0x60] sm:$0xff]
  %v1631 = vld [vmem:[%s3 + $0x68] sm:$0xff]
  %v1632 = vld [vmem:[%s3 + $0x70] sm:$0xff]
  %v1633 = vld [vmem:[%s3 + $0x78] sm:$0xff]
  %v1634 = vld [vmem:[%s7 + $0x60] sm:$0xff]
  %v1635 = vld [vmem:[%s7 + $0x68] sm:$0xff]
  %v1636 = vld [vmem:[%s7 + $0x70] sm:$0xff]
  %v1637 = vld [vmem:[%s7 + $0x78] sm:$0xff]
  %v1638 = vld [vmem:[%s7 + $0x80] sm:$0xff]
  %v1639 = vld [vmem:[%s7 + $0x88] sm:$0xff]
  %v1640 = vld [vmem:[%s7 + $0x90] sm:$0xff]
  %v1641 = vld [vmem:[%s7 + $0x98] sm:$0xff]
  %v1642 = vld [vmem:[%s7 + $0xa0] sm:$0xff]
  %v1643 = vld [vmem:[%s7 + $0xa8] sm:$0xff]
  %v1644 = vld [vmem:[%s7 + $0xb0] sm:$0xff]
  %v1645 = vld [vmem:[%s7 + $0xb8] sm:$0xff]
  %v1646 = vld [vmem:[%s7 + $0xc0] sm:$0xff]
  %v1647 = vld [vmem:[%s7 + $0xc8] sm:$0xff]
  %v1648 = vld [vmem:[%s7 + $0xd0] sm:$0xff]
  %v1649 = vld [vmem:[%s7 + $0xd8] sm:$0xff]
  %1651 = vset.pattern.permute.xlu0 0
  %1652 = vperm.xlu0 %1651, %v1634
  %v1653 = vpop.permute.xlu0 %1652
  %1656 = vset.pattern.permute.xlu0 0
  %1657 = vperm.xlu0 %1656, %v1635
  %v1658 = vpop.permute.xlu0 %1657
  %1661 = vset.pattern.permute.xlu0 0
  %1662 = vperm.xlu0 %1661, %v1636
  %v1663 = vpop.permute.xlu0 %1662
  %1666 = vset.pattern.permute.xlu0 0
  %1667 = vperm.xlu0 %1666, %v1637
  %v1668 = vpop.permute.xlu0 %1667
  %1671 = vset.pattern.permute.xlu0 0
  %1672 = vperm.xlu0 %1671, %v1638
  %v1673 = vpop.permute.xlu0 %1672
  %1676 = vset.pattern.permute.xlu0 0
  %1677 = vperm.xlu0 %1676, %v1639
  %v1678 = vpop.permute.xlu0 %1677
  %1681 = vset.pattern.permute.xlu0 0
  %1682 = vperm.xlu0 %1681, %v1640
  %v1683 = vpop.permute.xlu0 %1682
  %1686 = vset.pattern.permute.xlu0 0
  %1687 = vperm.xlu0 %1686, %v1641
  %v1688 = vpop.permute.xlu0 %1687
  %1691 = vset.pattern.permute.xlu0 0
  %1692 = vperm.xlu0 %1691, %v1642
  %v1693 = vpop.permute.xlu0 %1692
  %1696 = vset.pattern.permute.xlu0 0
  %1697 = vperm.xlu0 %1696, %v1643
  %v1698 = vpop.permute.xlu0 %1697
  %1701 = vset.pattern.permute.xlu0 0
  %1702 = vperm.xlu0 %1701, %v1644
  %v1703 = vpop.permute.xlu0 %1702
  %1706 = vset.pattern.permute.xlu0 0
  %1707 = vperm.xlu0 %1706, %v1645
  %v1708 = vpop.permute.xlu0 %1707
  %1711 = vset.pattern.permute.xlu0 0
  %1712 = vperm.xlu0 %1711, %v1646
  %v1713 = vpop.permute.xlu0 %1712
  %1716 = vset.pattern.permute.xlu0 0
  %1717 = vperm.xlu0 %1716, %v1647
  %v1718 = vpop.permute.xlu0 %1717
  %1721 = vset.pattern.permute.xlu0 0
  %1722 = vperm.xlu0 %1721, %v1648
  %v1723 = vpop.permute.xlu0 %1722
  %1726 = vset.pattern.permute.xlu0 0
  %1727 = vperm.xlu0 %1726, %v1649
  %v1728 = vpop.permute.xlu0 %1727
  %vm1730 = vcmask 523264
  %v1732 = vsel %vm1730, %v1618, 0
  %v1735 = vsel %vm1730, %v1619, 0
  %v1738 = vsel %vm1730, %v1620, 0
  %v1741 = vsel %vm1730, %v1621, 0
  %v1744 = vsel %vm1730, %v1622, 0
  %v1747 = vsel %vm1730, %v1623, 0
  %v1750 = vsel %vm1730, %v1624, 0
  %v1753 = vsel %vm1730, %v1625, 0
  %v1756 = vsel %vm1730, %v1626, 0
  %v1759 = vsel %vm1730, %v1627, 0
  %v1762 = vsel %vm1730, %v1628, 0
  %v1765 = vsel %vm1730, %v1629, 0
  %v1768 = vsel %vm1730, %v1630, 0
  %v1771 = vsel %vm1730, %v1631, 0
  %v1774 = vsel %vm1730, %v1632, 0
  %v1777 = vsel %vm1730, %v1633, 0
  %1779 = vmatprep.subr.mxu0 0.0
  %1780 = vmatpush1.msra.mxu0 0.0
  %1781 = vmatprep.subr.mxu0 0.0
  %1782 = vmatpush1.msra.mxu0 0.0
  %1783 = vmatprep.subr.mxu0 0.0
  %1784 = vmatpush1.msra.mxu0 0.0
  %1785 = vmatprep.subr.mxu0 0.0
  %1786 = vmatpush1.msra.mxu0 0.0
  %1787 = vmatprep.subr.mxu0 0.0
  %1788 = vmatpush1.msra.mxu0 0.0
  %1789 = vmatprep.subr.mxu0 0.0
  %1790 = vmatpush1.msra.mxu0 0.0
  %1791 = vmatprep.subr.mxu0 0.0
  %1792 = vmatpush1.msra.mxu0 0.0
  %1793 = vmatprep.subr.mxu0 0.0
  %1794 = vmatpush1.msra.mxu0 0.0
  %1795 = vmatprep.subr.mxu0 0.0
  %1796 = vmatpush1.msra.mxu0 %v1617
  %1797 = vmatprep.subr.mxu0 0.0
  %1798 = vmatpush1.msra.mxu0 %v1616
  %1799 = vmatprep.subr.mxu0 0.0
  %1800 = vmatpush1.msra.mxu0 %v1615
  %1801 = vmatprep.subr.mxu0 0.0
  %1802 = vmatpush1.msra.mxu0 %v1614
  %1803 = vmatprep.subr.mxu0 0.0
  %1804 = vmatpush1.msra.mxu0 %v1613
  %1805 = vmatprep.subr.mxu0 0.0
  %1806 = vmatpush1.msra.mxu0 %v1612
  %1807 = vmatprep.subr.mxu0 0.0
  %1808 = vmatpush1.msra.mxu0 %v1611
  %1809 = vmatprep.subr.mxu0 0.0
  %1810 = vmatpush1.msra.mxu0 %v1610
  %1811 = vmatprep.subr.mxu0 0.0
  %1812 = vmatpush2.msra.mxu0 0.0
  %1813 = vmatprep.subr.mxu0 0.0
  %1814 = vmatpush2.msra.mxu0 0.0
  %1815 = vmatprep.subr.mxu0 0.0
  %1816 = vmatpush2.msra.mxu0 0.0
  %1817 = vmatprep.subr.mxu0 0.0
  %1818 = vmatpush2.msra.mxu0 0.0
  %1819 = vmatprep.subr.mxu0 0.0
  %1820 = vmatpush2.msra.mxu0 0.0
  %1821 = vmatprep.subr.mxu0 0.0
  %1822 = vmatpush2.msra.mxu0 0.0
  %1823 = vmatprep.subr.mxu0 0.0
  %1824 = vmatpush2.msra.mxu0 0.0
  %1825 = vmatprep.subr.mxu0 0.0
  %1826 = vmatpush2.msra.mxu0 0.0
  %1827 = vmatprep.subr.mxu0 0.0
  %1828 = vmatpush2.msra.mxu0 0.0
  %1829 = vmatprep.subr.mxu0 0.0
  %1830 = vmatpush2.msra.mxu0 0.0
  %1831 = vmatprep.subr.mxu0 0.0
  %1832 = vmatpush2.msra.mxu0 0.0
  %1833 = vmatprep.subr.mxu0 0.0
  %1834 = vmatpush2.msra.mxu0 0.0
  %1835 = vmatprep.subr.mxu0 0.0
  %1836 = vmatpush2.msra.mxu0 0.0
  %1837 = vmatprep.subr.mxu0 0.0
  %1838 = vmatpush2.msra.mxu0 0.0
  %1839 = vmatprep.subr.mxu0 0.0
  %1840 = vmatpush2.msra.mxu0 0.0
  %1841 = vmatprep.subr.mxu0 0.0
  %1842 = vmatpush2.msra.mxu0 0.0
  %1843 = vmatprep.mubr.f32.mxu0 0.0
  %1844 = vmatmul.mubr.f32.gmra.mxu0 %v1732
  %v1845 = vpop.f32.mrf.mxu0
  %v1846 = vadd.f32 %v1653, %v1845
  %v1847 = vpop.f32.mrf.mxu0
  %1848 = vmatprep.mubr.f32.mxu0 0.0
  %1849 = vmatmul.mubr.f32.gmra.mxu0 %v1735
  %v1850 = vpop.f32.mrf.mxu0
  %v1851 = vadd.f32 %v1658, %v1850
  %v1852 = vpop.f32.mrf.mxu0
  %1853 = vmatprep.mubr.f32.mxu0 0.0
  %1854 = vmatmul.mubr.f32.gmra.mxu0 %v1738
  %v1855 = vpop.f32.mrf.mxu0
  %v1856 = vadd.f32 %v1663, %v1855
  %v1857 = vpop.f32.mrf.mxu0
  %1858 = vmatprep.mubr.f32.mxu0 0.0
  %1859 = vmatmul.mubr.f32.gmra.mxu0 %v1741
  %v1860 = vpop.f32.mrf.mxu0
  %v1861 = vadd.f32 %v1668, %v1860
  %v1862 = vpop.f32.mrf.mxu0
  %1863 = vmatprep.mubr.f32.mxu0 0.0
  %1864 = vmatmul.mubr.f32.gmra.mxu0 %v1744
  %v1865 = vpop.f32.mrf.mxu0
  %v1866 = vadd.f32 %v1673, %v1865
  %v1867 = vpop.f32.mrf.mxu0
  %1868 = vmatprep.mubr.f32.mxu0 0.0
  %1869 = vmatmul.mubr.f32.gmra.mxu0 %v1747
  %v1870 = vpop.f32.mrf.mxu0
  %v1871 = vadd.f32 %v1678, %v1870
  %v1872 = vpop.f32.mrf.mxu0
  %1873 = vmatprep.mubr.f32.mxu0 0.0
  %1874 = vmatmul.mubr.f32.gmra.mxu0 %v1750
  %v1875 = vpop.f32.mrf.mxu0
  %v1876 = vadd.f32 %v1683, %v1875
  %v1877 = vpop.f32.mrf.mxu0
  %1878 = vmatprep.mubr.f32.mxu0 0.0
  %1879 = vmatmul.mubr.f32.gmra.mxu0 %v1753
  %v1880 = vpop.f32.mrf.mxu0
  %v1881 = vadd.f32 %v1688, %v1880
  %v1882 = vpop.f32.mrf.mxu0
  %1883 = vmatprep.mubr.f32.mxu0 0.0
  %1884 = vmatmul.mubr.f32.gmra.mxu0 %v1756
  %v1885 = vpop.f32.mrf.mxu0
  %v1886 = vadd.f32 %v1693, %v1885
  %v1887 = vpop.f32.mrf.mxu0
  %1888 = vmatprep.mubr.f32.mxu0 0.0
  %1889 = vmatmul.mubr.f32.gmra.mxu0 %v1759
  %v1890 = vpop.f32.mrf.mxu0
  %v1891 = vadd.f32 %v1698, %v1890
  %v1892 = vpop.f32.mrf.mxu0
  %1893 = vmatprep.mubr.f32.mxu0 0.0
  %1894 = vmatmul.mubr.f32.gmra.mxu0 %v1762
  %v1895 = vpop.f32.mrf.mxu0
  %v1896 = vadd.f32 %v1703, %v1895
  %v1897 = vpop.f32.mrf.mxu0
  %1898 = vmatprep.mubr.f32.mxu0 0.0
  %1899 = vmatmul.mubr.f32.gmra.mxu0 %v1765
  %v1900 = vpop.f32.mrf.mxu0
  %v1901 = vadd.f32 %v1708, %v1900
  %v1902 = vpop.f32.mrf.mxu0
  %1903 = vmatprep.mubr.f32.mxu0 0.0
  %1904 = vmatmul.mubr.f32.gmra.mxu0 %v1768
  %v1905 = vpop.f32.mrf.mxu0
  %v1906 = vadd.f32 %v1713, %v1905
  %v1907 = vpop.f32.mrf.mxu0
  %1908 = vmatprep.mubr.f32.mxu0 0.0
  %1909 = vmatmul.mubr.f32.gmra.mxu0 %v1771
  %v1910 = vpop.f32.mrf.mxu0
  %v1911 = vadd.f32 %v1718, %v1910
  %v1912 = vpop.f32.mrf.mxu0
  %1913 = vmatprep.mubr.f32.mxu0 0.0
  %1914 = vmatmul.mubr.f32.gmra.mxu0 %v1774
  %v1915 = vpop.f32.mrf.mxu0
  %v1916 = vadd.f32 %v1723, %v1915
  %v1917 = vpop.f32.mrf.mxu0
  %1918 = vmatprep.mubr.f32.mxu0 0.0
  %1919 = vmatmul.mubr.f32.gmra.mxu0 %v1777
  %v1920 = vpop.f32.mrf.mxu0
  %v1921 = vadd.f32 %v1728, %v1920
  %v1922 = vpop.f32.mrf.mxu0
  %1923 = vdwg.mxu0
  %v1924 = vand.u32 2147483647, %v1846
  %vm1925 = vcmp.le.f32.partialorder %v1924, 0.7853982
  %vm1926 = vcmp.lt.s32.totalorder %v1846, 0
  %v1927 = vand.u32 %v1846, 2139095040
  %v1928 = vshrl.u32 %v1927, 23
  %v1929 = vsub.s32 %v1928, 127
  %v1930 = vand.u32 2147483647, %v1846
  %v1931 = vand.u32 %v1930, 8388607
  %v1932 = vor.u32 %v1931, 8388608
  %v1933 = vsub.s32 0, %v1932
  %v1934 = vadd.s32 %v1929, 1
  %vm1935 = vcmp.gt.s32.totalorder %v1934, 0
  %v1936 = vsel %vm1935, %v1934, 0
  %v1937 = vshrl.u32 %v1936, 5
  %v1938 = vand.u32 %v1936, 31
  %v1939 = vsub.s32 32, %v1938
  %v1940 = vshrl.u32 683565275, %v1939
  %v1941 = vshll.u32 683565275, %v1938
  %v1942 = vshrl.u32 2475754826, %v1939
  %v1943 = vor.u32 %v1941, %v1942
  %v1944 = vshll.u32 2475754826, %v1938
  %v1945 = vshrl.u32 2131351028, %v1939
  %v1946 = vor.u32 %v1944, %v1945
  %v1947 = vshll.u32 2131351028, %v1938
  %v1948 = vshrl.u32 2102212464, %v1939
  %v1949 = vor.u32 %v1947, %v1948
  %v1950 = vshll.u32 2102212464, %v1938
  %v1951 = vshrl.u32 920167782, %v1939
  %v1952 = vor.u32 %v1950, %v1951
  %v1953 = vshll.u32 920167782, %v1938
  %v1954 = vshrl.u32 1326507024, %v1939
  %v1955 = vor.u32 %v1953, %v1954
  %vm1956 = vcmp.lt.s32.totalorder %v1937, 1
  %vm1957 = vcmp.lt.s32.totalorder %v1937, 2
  %vm1958 = vcmp.lt.s32.totalorder %v1937, 3
  %vm1959 = vcmp.lt.s32.totalorder %v1937, 4
  %v1960 = vsel %vm1956, %v1940, %v1943
  %v1961 = vsel %vm1959, %v1949, 2102212464
  %v1962 = vsel %vm1958, %v1946, %v1961
  %v1963 = vsel %vm1957, %v1960, %v1962
  %v1964 = vsel %vm1956, %v1943, %v1946
  %v1965 = vsel %vm1959, %v1952, 920167782
  %v1966 = vsel %vm1958, %v1949, %v1965
  %v1967 = vsel %vm1957, %v1964, %v1966
  %v1968 = vsel %vm1956, %v1946, %v1949
  %v1969 = vsel %vm1959, %v1955, 1326507024
  %v1970 = vsel %vm1958, %v1952, %v1969
  %v1971 = vsel %vm1957, %v1968, %v1970
  %v1972 = vshll.u32 %v1932, 8
  %v1973 = vmul.u32.u64.compose %v1972, %v1971
  %v1974 = vextract.low.u32 %v1973
  %v1975 = vextract.high.u32 %v1973
  %v1976 = vmul.u32.u64.compose %v1972, %v1967
  %v1977 = vextract.low.u32 %v1976
  %v1978 = vextract.high.u32 %v1976
  %v1979 = vmul.u32 %v1972, %v1963
  %v1980 = vadd.s32 %v1975, %v1977
  %vm1981 = vc.u32 %v1975, %v1977
  %v1982 = vadd.s32 %v1978, 1
  %v1983 = vsel %vm1981, %v1982, %v1978
  %v1984 = vadd.s32 %v1979, %v1983
  %v1985 = vadd.s32 %v1984, 536870912
  %v1986 = vshrl.u32 %v1985, 30
  %v1987 = vshll.u32 %v1986, 30
  %v1988 = vsub.s32 %v1984, %v1987
  %vm1989 = vcmp.lt.s32.totalorder %v1988, 0
  %v1990 = vsub.s32 0, %v1988
  %v1991 = vsel %vm1989, %v1990, %v1988
  %v1992 = vclz %v1991
  %v1993 = vsub.s32 %v1992, 2
  %vm1994 = vcmp.gt.s32.totalorder 0, %v1993
  %v1995 = vsel %vm1994, 0, %v1993
  %v1996 = vsub.s32 32, %v1995
  %v1997 = vshll.u32 %v1988, %v1995
  %v1998 = vshrl.u32 %v1980, %v1996
  %v1999 = vor.u32 %v1997, %v1998
  %v2000 = vsub.s32 4294967266, %v1995
  %v2001 = vadd.s32 %v2000, 127
  %v2002 = vshll.u32 %v2001, 23
  %v2003 = vor.u32 4788187, %v2002
  %v2004 = vand.u32 2147483647, %v2003
  %v2006 = vcvt.s32.f32 %v1999
  %v2007 = vmul.f32 %v2006, %v2004
  %v2008 = vxor.u32 %v2007, 2147483648
  %v2009 = vsel %vm1926, %v2008, %v2007
  %v2010 = vsub.s32 4, %v1986
  %v2011 = vsel %vm1926, %v2010, %v1986
  %v2012 = vsel %vm1925, %v1846, %v2009
  %v2013 = vsel %vm1925, 0, %v2011
  %v2014 = vcosq.f32.pop %v2012
  %v2015 = vsinq.f32.pop %v2012
  %vm2016 = vweird.f32 %v1846
  %v2017 = vadd.s32 %v2013, 3
  %v2018 = vand.u32 %v2017, 3
  %vm2019 = vcmp.lt.s32.totalorder %v2018, 2
  %vm2020 = vcmp.eq.s32.totalorder %v2018, 0
  %v2021 = vxor.u32 %v2015, 2147483648
  %v2022 = vsel %vm2020, %v2014, %v2021
  %vm2023 = vcmp.eq.s32.totalorder %v2018, 2
  %v2024 = vxor.u32 %v2014, 2147483648
  %v2025 = vsel %vm2023, %v2024, %v2015
  %v2026 = vsel %vm2019, %v2022, %v2025
  %v2027 = vsel %vm2016, nan, %v2026
  %v2028 = vand.u32 2147483647, %v1851
  %vm2029 = vcmp.le.f32.partialorder %v2028, 0.7853982
  %vm2030 = vcmp.lt.s32.totalorder %v1851, 0
  %v2031 = vand.u32 %v1851, 2139095040
  %v2032 = vshrl.u32 %v2031, 23
  %v2033 = vsub.s32 %v2032, 127
  %v2034 = vand.u32 2147483647, %v1851
  %v2035 = vand.u32 %v2034, 8388607
  %v2036 = vor.u32 %v2035, 8388608
  %v2037 = vsub.s32 0, %v2036
  %v2038 = vadd.s32 %v2033, 1
  %vm2039 = vcmp.gt.s32.totalorder %v2038, 0
  %v2040 = vsel %vm2039, %v2038, 0
  %v2041 = vshrl.u32 %v2040, 5
  %v2042 = vand.u32 %v2040, 31
  %v2043 = vsub.s32 32, %v2042
  %v2044 = vshrl.u32 683565275, %v2043
  %v2045 = vshll.u32 683565275, %v2042
  %v2046 = vshrl.u32 2475754826, %v2043
  %v2047 = vor.u32 %v2045, %v2046
  %v2048 = vshll.u32 2475754826, %v2042
  %v2049 = vshrl.u32 2131351028, %v2043
  %v2050 = vor.u32 %v2048, %v2049
  %v2051 = vshll.u32 2131351028, %v2042
  %v2052 = vshrl.u32 2102212464, %v2043
  %v2053 = vor.u32 %v2051, %v2052
  %v2054 = vshll.u32 2102212464, %v2042
  %v2055 = vshrl.u32 920167782, %v2043
  %v2056 = vor.u32 %v2054, %v2055
  %v2057 = vshll.u32 920167782, %v2042
  %v2058 = vshrl.u32 1326507024, %v2043
  %v2059 = vor.u32 %v2057, %v2058
  %vm2060 = vcmp.lt.s32.totalorder %v2041, 1
  %vm2061 = vcmp.lt.s32.totalorder %v2041, 2
  %vm2062 = vcmp.lt.s32.totalorder %v2041, 3
  %vm2063 = vcmp.lt.s32.totalorder %v2041, 4
  %v2064 = vsel %vm2060, %v2044, %v2047
  %v2065 = vsel %vm2063, %v2053, 2102212464
  %v2066 = vsel %vm2062, %v2050, %v2065
  %v2067 = vsel %vm2061, %v2064, %v2066
  %v2068 = vsel %vm2060, %v2047, %v2050
  %v2069 = vsel %vm2063, %v2056, 920167782
  %v2070 = vsel %vm2062, %v2053, %v2069
  %v2071 = vsel %vm2061, %v2068, %v2070
  %v2072 = vsel %vm2060, %v2050, %v2053
  %v2073 = vsel %vm2063, %v2059, 1326507024
  %v2074 = vsel %vm2062, %v2056, %v2073
  %v2075 = vsel %vm2061, %v2072, %v2074
  %v2076 = vshll.u32 %v2036, 8
  %v2077 = vmul.u32.u64.compose %v2076, %v2075
  %v2078 = vextract.low.u32 %v2077
  %v2079 = vextract.high.u32 %v2077
  %v2080 = vmul.u32.u64.compose %v2076, %v2071
  %v2081 = vextract.low.u32 %v2080
  %v2082 = vextract.high.u32 %v2080
  %v2083 = vmul.u32 %v2076, %v2067
  %v2084 = vadd.s32 %v2079, %v2081
  %vm2085 = vc.u32 %v2079, %v2081
  %v2086 = vadd.s32 %v2082, 1
  %v2087 = vsel %vm2085, %v2086, %v2082
  %v2088 = vadd.s32 %v2083, %v2087
  %v2089 = vadd.s32 %v2088, 536870912
  %v2090 = vshrl.u32 %v2089, 30
  %v2091 = vshll.u32 %v2090, 30
  %v2092 = vsub.s32 %v2088, %v2091
  %vm2093 = vcmp.lt.s32.totalorder %v2092, 0
  %v2094 = vsub.s32 0, %v2092
  %v2095 = vsel %vm2093, %v2094, %v2092
  %v2096 = vclz %v2095
  %v2097 = vsub.s32 %v2096, 2
  %vm2098 = vcmp.gt.s32.totalorder 0, %v2097
  %v2099 = vsel %vm2098, 0, %v2097
  %v2100 = vsub.s32 32, %v2099
  %v2101 = vshll.u32 %v2092, %v2099
  %v2102 = vshrl.u32 %v2084, %v2100
  %v2103 = vor.u32 %v2101, %v2102
  %v2104 = vsub.s32 4294967266, %v2099
  %v2105 = vadd.s32 %v2104, 127
  %v2106 = vshll.u32 %v2105, 23
  %v2107 = vor.u32 4788187, %v2106
  %v2108 = vand.u32 2147483647, %v2107
  %v2110 = vcvt.s32.f32 %v2103
  %v2111 = vmul.f32 %v2110, %v2108
  %v2112 = vxor.u32 %v2111, 2147483648
  %v2113 = vsel %vm2030, %v2112, %v2111
  %v2114 = vsub.s32 4, %v2090
  %v2115 = vsel %vm2030, %v2114, %v2090
  %v2116 = vsel %vm2029, %v1851, %v2113
  %v2117 = vsel %vm2029, 0, %v2115
  %v2118 = vcosq.f32.pop %v2116
  %v2119 = vsinq.f32.pop %v2116
  %vm2120 = vweird.f32 %v1851
  %v2121 = vadd.s32 %v2117, 3
  %v2122 = vand.u32 %v2121, 3
  %vm2123 = vcmp.lt.s32.totalorder %v2122, 2
  %vm2124 = vcmp.eq.s32.totalorder %v2122, 0
  %v2125 = vxor.u32 %v2119, 2147483648
  %v2126 = vsel %vm2124, %v2118, %v2125
  %vm2127 = vcmp.eq.s32.totalorder %v2122, 2
  %v2128 = vxor.u32 %v2118, 2147483648
  %v2129 = vsel %vm2127, %v2128, %v2119
  %v2130 = vsel %vm2123, %v2126, %v2129
  %v2131 = vsel %vm2120, nan, %v2130
  %v2132 = vand.u32 2147483647, %v1856
  %vm2133 = vcmp.le.f32.partialorder %v2132, 0.7853982
  %vm2134 = vcmp.lt.s32.totalorder %v1856, 0
  %v2135 = vand.u32 %v1856, 2139095040
  %v2136 = vshrl.u32 %v2135, 23
  %v2137 = vsub.s32 %v2136, 127
  %v2138 = vand.u32 2147483647, %v1856
  %v2139 = vand.u32 %v2138, 8388607
  %v2140 = vor.u32 %v2139, 8388608
  %v2141 = vsub.s32 0, %v2140
  %v2142 = vadd.s32 %v2137, 1
  %vm2143 = vcmp.gt.s32.totalorder %v2142, 0
  %v2144 = vsel %vm2143, %v2142, 0
  %v2145 = vshrl.u32 %v2144, 5
  %v2146 = vand.u32 %v2144, 31
  %v2147 = vsub.s32 32, %v2146
  %v2148 = vshrl.u32 683565275, %v2147
  %v2149 = vshll.u32 683565275, %v2146
  %v2150 = vshrl.u32 2475754826, %v2147
  %v2151 = vor.u32 %v2149, %v2150
  %v2152 = vshll.u32 2475754826, %v2146
  %v2153 = vshrl.u32 2131351028, %v2147
  %v2154 = vor.u32 %v2152, %v2153
  %v2155 = vshll.u32 2131351028, %v2146
  %v2156 = vshrl.u32 2102212464, %v2147
  %v2157 = vor.u32 %v2155, %v2156
  %v2158 = vshll.u32 2102212464, %v2146
  %v2159 = vshrl.u32 920167782, %v2147
  %v2160 = vor.u32 %v2158, %v2159
  %v2161 = vshll.u32 920167782, %v2146
  %v2162 = vshrl.u32 1326507024, %v2147
  %v2163 = vor.u32 %v2161, %v2162
  %vm2164 = vcmp.lt.s32.totalorder %v2145, 1
  %vm2165 = vcmp.lt.s32.totalorder %v2145, 2
  %vm2166 = vcmp.lt.s32.totalorder %v2145, 3
  %vm2167 = vcmp.lt.s32.totalorder %v2145, 4
  %v2168 = vsel %vm2164, %v2148, %v2151
  %v2169 = vsel %vm2167, %v2157, 2102212464
  %v2170 = vsel %vm2166, %v2154, %v2169
  %v2171 = vsel %vm2165, %v2168, %v2170
  %v2172 = vsel %vm2164, %v2151, %v2154
  %v2173 = vsel %vm2167, %v2160, 920167782
  %v2174 = vsel %vm2166, %v2157, %v2173
  %v2175 = vsel %vm2165, %v2172, %v2174
  %v2176 = vsel %vm2164, %v2154, %v2157
  %v2177 = vsel %vm2167, %v2163, 1326507024
  %v2178 = vsel %vm2166, %v2160, %v2177
  %v2179 = vsel %vm2165, %v2176, %v2178
  %v2180 = vshll.u32 %v2140, 8
  %v2181 = vmul.u32.u64.compose %v2180, %v2179
  %v2182 = vextract.low.u32 %v2181
  %v2183 = vextract.high.u32 %v2181
  %v2184 = vmul.u32.u64.compose %v2180, %v2175
  %v2185 = vextract.low.u32 %v2184
  %v2186 = vextract.high.u32 %v2184
  %v2187 = vmul.u32 %v2180, %v2171
  %v2188 = vadd.s32 %v2183, %v2185
  %vm2189 = vc.u32 %v2183, %v2185
  %v2190 = vadd.s32 %v2186, 1
  %v2191 = vsel %vm2189, %v2190, %v2186
  %v2192 = vadd.s32 %v2187, %v2191
  %v2193 = vadd.s32 %v2192, 536870912
  %v2194 = vshrl.u32 %v2193, 30
  %v2195 = vshll.u32 %v2194, 30
  %v2196 = vsub.s32 %v2192, %v2195
  %vm2197 = vcmp.lt.s32.totalorder %v2196, 0
  %v2198 = vsub.s32 0, %v2196
  %v2199 = vsel %vm2197, %v2198, %v2196
  %v2200 = vclz %v2199
  %v2201 = vsub.s32 %v2200, 2
  %vm2202 = vcmp.gt.s32.totalorder 0, %v2201
  %v2203 = vsel %vm2202, 0, %v2201
  %v2204 = vsub.s32 32, %v2203
  %v2205 = vshll.u32 %v2196, %v2203
  %v2206 = vshrl.u32 %v2188, %v2204
  %v2207 = vor.u32 %v2205, %v2206
  %v2208 = vsub.s32 4294967266, %v2203
  %v2209 = vadd.s32 %v2208, 127
  %v2210 = vshll.u32 %v2209, 23
  %v2211 = vor.u32 4788187, %v2210
  %v2212 = vand.u32 2147483647, %v2211
  %v2214 = vcvt.s32.f32 %v2207
  %v2215 = vmul.f32 %v2214, %v2212
  %v2216 = vxor.u32 %v2215, 2147483648
  %v2217 = vsel %vm2134, %v2216, %v2215
  %v2218 = vsub.s32 4, %v2194
  %v2219 = vsel %vm2134, %v2218, %v2194
  %v2220 = vsel %vm2133, %v1856, %v2217
  %v2221 = vsel %vm2133, 0, %v2219
  %v2222 = vcosq.f32.pop %v2220
  %v2223 = vsinq.f32.pop %v2220
  %vm2224 = vweird.f32 %v1856
  %v2225 = vadd.s32 %v2221, 3
  %v2226 = vand.u32 %v2225, 3
  %vm2227 = vcmp.lt.s32.totalorder %v2226, 2
  %vm2228 = vcmp.eq.s32.totalorder %v2226, 0
  %v2229 = vxor.u32 %v2223, 2147483648
  %v2230 = vsel %vm2228, %v2222, %v2229
  %vm2231 = vcmp.eq.s32.totalorder %v2226, 2
  %v2232 = vxor.u32 %v2222, 2147483648
  %v2233 = vsel %vm2231, %v2232, %v2223
  %v2234 = vsel %vm2227, %v2230, %v2233
  %v2235 = vsel %vm2224, nan, %v2234
  %v2236 = vand.u32 2147483647, %v1861
  %vm2237 = vcmp.le.f32.partialorder %v2236, 0.7853982
  %vm2238 = vcmp.lt.s32.totalorder %v1861, 0
  %v2239 = vand.u32 %v1861, 2139095040
  %v2240 = vshrl.u32 %v2239, 23
  %v2241 = vsub.s32 %v2240, 127
  %v2242 = vand.u32 2147483647, %v1861
  %v2243 = vand.u32 %v2242, 8388607
  %v2244 = vor.u32 %v2243, 8388608
  %v2245 = vsub.s32 0, %v2244
  %v2246 = vadd.s32 %v2241, 1
  %vm2247 = vcmp.gt.s32.totalorder %v2246, 0
  %v2248 = vsel %vm2247, %v2246, 0
  %v2249 = vshrl.u32 %v2248, 5
  %v2250 = vand.u32 %v2248, 31
  %v2251 = vsub.s32 32, %v2250
  %v2252 = vshrl.u32 683565275, %v2251
  %v2253 = vshll.u32 683565275, %v2250
  %v2254 = vshrl.u32 2475754826, %v2251
  %v2255 = vor.u32 %v2253, %v2254
  %v2256 = vshll.u32 2475754826, %v2250
  %v2257 = vshrl.u32 2131351028, %v2251
  %v2258 = vor.u32 %v2256, %v2257
  %v2259 = vshll.u32 2131351028, %v2250
  %v2260 = vshrl.u32 2102212464, %v2251
  %v2261 = vor.u32 %v2259, %v2260
  %v2262 = vshll.u32 2102212464, %v2250
  %v2263 = vshrl.u32 920167782, %v2251
  %v2264 = vor.u32 %v2262, %v2263
  %v2265 = vshll.u32 920167782, %v2250
  %v2266 = vshrl.u32 1326507024, %v2251
  %v2267 = vor.u32 %v2265, %v2266
  %vm2268 = vcmp.lt.s32.totalorder %v2249, 1
  %vm2269 = vcmp.lt.s32.totalorder %v2249, 2
  %vm2270 = vcmp.lt.s32.totalorder %v2249, 3
  %vm2271 = vcmp.lt.s32.totalorder %v2249, 4
  %v2272 = vsel %vm2268, %v2252, %v2255
  %v2273 = vsel %vm2271, %v2261, 2102212464
  %v2274 = vsel %vm2270, %v2258, %v2273
  %v2275 = vsel %vm2269, %v2272, %v2274
  %v2276 = vsel %vm2268, %v2255, %v2258
  %v2277 = vsel %vm2271, %v2264, 920167782
  %v2278 = vsel %vm2270, %v2261, %v2277
  %v2279 = vsel %vm2269, %v2276, %v2278
  %v2280 = vsel %vm2268, %v2258, %v2261
  %v2281 = vsel %vm2271, %v2267, 1326507024
  %v2282 = vsel %vm2270, %v2264, %v2281
  %v2283 = vsel %vm2269, %v2280, %v2282
  %v2284 = vshll.u32 %v2244, 8
  %v2285 = vmul.u32.u64.compose %v2284, %v2283
  %v2286 = vextract.low.u32 %v2285
  %v2287 = vextract.high.u32 %v2285
  %v2288 = vmul.u32.u64.compose %v2284, %v2279
  %v2289 = vextract.low.u32 %v2288
  %v2290 = vextract.high.u32 %v2288
  %v2291 = vmul.u32 %v2284, %v2275
  %v2292 = vadd.s32 %v2287, %v2289
  %vm2293 = vc.u32 %v2287, %v2289
  %v2294 = vadd.s32 %v2290, 1
  %v2295 = vsel %vm2293, %v2294, %v2290
  %v2296 = vadd.s32 %v2291, %v2295
  %v2297 = vadd.s32 %v2296, 536870912
  %v2298 = vshrl.u32 %v2297, 30
  %v2299 = vshll.u32 %v2298, 30
  %v2300 = vsub.s32 %v2296, %v2299
  %vm2301 = vcmp.lt.s32.totalorder %v2300, 0
  %v2302 = vsub.s32 0, %v2300
  %v2303 = vsel %vm2301, %v2302, %v2300
  %v2304 = vclz %v2303
  %v2305 = vsub.s32 %v2304, 2
  %vm2306 = vcmp.gt.s32.totalorder 0, %v2305
  %v2307 = vsel %vm2306, 0, %v2305
  %v2308 = vsub.s32 32, %v2307
  %v2309 = vshll.u32 %v2300, %v2307
  %v2310 = vshrl.u32 %v2292, %v2308
  %v2311 = vor.u32 %v2309, %v2310
  %v2312 = vsub.s32 4294967266, %v2307
  %v2313 = vadd.s32 %v2312, 127
  %v2314 = vshll.u32 %v2313, 23
  %v2315 = vor.u32 4788187, %v2314
  %v2316 = vand.u32 2147483647, %v2315
  %v2318 = vcvt.s32.f32 %v2311
  %v2319 = vmul.f32 %v2318, %v2316
  %v2320 = vxor.u32 %v2319, 2147483648
  %v2321 = vsel %vm2238, %v2320, %v2319
  %v2322 = vsub.s32 4, %v2298
  %v2323 = vsel %vm2238, %v2322, %v2298
  %v2324 = vsel %vm2237, %v1861, %v2321
  %v2325 = vsel %vm2237, 0, %v2323
  %v2326 = vcosq.f32.pop %v2324
  %v2327 = vsinq.f32.pop %v2324
  %vm2328 = vweird.f32 %v1861
  %v2329 = vadd.s32 %v2325, 3
  %v2330 = vand.u32 %v2329, 3
  %vm2331 = vcmp.lt.s32.totalorder %v2330, 2
  %vm2332 = vcmp.eq.s32.totalorder %v2330, 0
  %v2333 = vxor.u32 %v2327, 2147483648
  %v2334 = vsel %vm2332, %v2326, %v2333
  %vm2335 = vcmp.eq.s32.totalorder %v2330, 2
  %v2336 = vxor.u32 %v2326, 2147483648
  %v2337 = vsel %vm2335, %v2336, %v2327
  %v2338 = vsel %vm2331, %v2334, %v2337
  %v2339 = vsel %vm2328, nan, %v2338
  %v2340 = vand.u32 2147483647, %v1866
  %vm2341 = vcmp.le.f32.partialorder %v2340, 0.7853982
  %vm2342 = vcmp.lt.s32.totalorder %v1866, 0
  %v2343 = vand.u32 %v1866, 2139095040
  %v2344 = vshrl.u32 %v2343, 23
  %v2345 = vsub.s32 %v2344, 127
  %v2346 = vand.u32 2147483647, %v1866
  %v2347 = vand.u32 %v2346, 8388607
  %v2348 = vor.u32 %v2347, 8388608
  %v2349 = vsub.s32 0, %v2348
  %v2350 = vadd.s32 %v2345, 1
  %vm2351 = vcmp.gt.s32.totalorder %v2350, 0
  %v2352 = vsel %vm2351, %v2350, 0
  %v2353 = vshrl.u32 %v2352, 5
  %v2354 = vand.u32 %v2352, 31
  %v2355 = vsub.s32 32, %v2354
  %v2356 = vshrl.u32 683565275, %v2355
  %v2357 = vshll.u32 683565275, %v2354
  %v2358 = vshrl.u32 2475754826, %v2355
  %v2359 = vor.u32 %v2357, %v2358
  %v2360 = vshll.u32 2475754826, %v2354
  %v2361 = vshrl.u32 2131351028, %v2355
  %v2362 = vor.u32 %v2360, %v2361
  %v2363 = vshll.u32 2131351028, %v2354
  %v2364 = vshrl.u32 2102212464, %v2355
  %v2365 = vor.u32 %v2363, %v2364
  %v2366 = vshll.u32 2102212464, %v2354
  %v2367 = vshrl.u32 920167782, %v2355
  %v2368 = vor.u32 %v2366, %v2367
  %v2369 = vshll.u32 920167782, %v2354
  %v2370 = vshrl.u32 1326507024, %v2355
  %v2371 = vor.u32 %v2369, %v2370
  %vm2372 = vcmp.lt.s32.totalorder %v2353, 1
  %vm2373 = vcmp.lt.s32.totalorder %v2353, 2
  %vm2374 = vcmp.lt.s32.totalorder %v2353, 3
  %vm2375 = vcmp.lt.s32.totalorder %v2353, 4
  %v2376 = vsel %vm2372, %v2356, %v2359
  %v2377 = vsel %vm2375, %v2365, 2102212464
  %v2378 = vsel %vm2374, %v2362, %v2377
  %v2379 = vsel %vm2373, %v2376, %v2378
  %v2380 = vsel %vm2372, %v2359, %v2362
  %v2381 = vsel %vm2375, %v2368, 920167782
  %v2382 = vsel %vm2374, %v2365, %v2381
  %v2383 = vsel %vm2373, %v2380, %v2382
  %v2384 = vsel %vm2372, %v2362, %v2365
  %v2385 = vsel %vm2375, %v2371, 1326507024
  %v2386 = vsel %vm2374, %v2368, %v2385
  %v2387 = vsel %vm2373, %v2384, %v2386
  %v2388 = vshll.u32 %v2348, 8
  %v2389 = vmul.u32.u64.compose %v2388, %v2387
  %v2390 = vextract.low.u32 %v2389
  %v2391 = vextract.high.u32 %v2389
  %v2392 = vmul.u32.u64.compose %v2388, %v2383
  %v2393 = vextract.low.u32 %v2392
  %v2394 = vextract.high.u32 %v2392
  %v2395 = vmul.u32 %v2388, %v2379
  %v2396 = vadd.s32 %v2391, %v2393
  %vm2397 = vc.u32 %v2391, %v2393
  %v2398 = vadd.s32 %v2394, 1
  %v2399 = vsel %vm2397, %v2398, %v2394
  %v2400 = vadd.s32 %v2395, %v2399
  %v2401 = vadd.s32 %v2400, 536870912
  %v2402 = vshrl.u32 %v2401, 30
  %v2403 = vshll.u32 %v2402, 30
  %v2404 = vsub.s32 %v2400, %v2403
  %vm2405 = vcmp.lt.s32.totalorder %v2404, 0
  %v2406 = vsub.s32 0, %v2404
  %v2407 = vsel %vm2405, %v2406, %v2404
  %v2408 = vclz %v2407
  %v2409 = vsub.s32 %v2408, 2
  %vm2410 = vcmp.gt.s32.totalorder 0, %v2409
  %v2411 = vsel %vm2410, 0, %v2409
  %v2412 = vsub.s32 32, %v2411
  %v2413 = vshll.u32 %v2404, %v2411
  %v2414 = vshrl.u32 %v2396, %v2412
  %v2415 = vor.u32 %v2413, %v2414
  %v2416 = vsub.s32 4294967266, %v2411
  %v2417 = vadd.s32 %v2416, 127
  %v2418 = vshll.u32 %v2417, 23
  %v2419 = vor.u32 4788187, %v2418
  %v2420 = vand.u32 2147483647, %v2419
  %v2422 = vcvt.s32.f32 %v2415
  %v2423 = vmul.f32 %v2422, %v2420
  %v2424 = vxor.u32 %v2423, 2147483648
  %v2425 = vsel %vm2342, %v2424, %v2423
  %v2426 = vsub.s32 4, %v2402
  %v2427 = vsel %vm2342, %v2426, %v2402
  %v2428 = vsel %vm2341, %v1866, %v2425
  %v2429 = vsel %vm2341, 0, %v2427
  %v2430 = vcosq.f32.pop %v2428
  %v2431 = vsinq.f32.pop %v2428
  %vm2432 = vweird.f32 %v1866
  %v2433 = vadd.s32 %v2429, 3
  %v2434 = vand.u32 %v2433, 3
  %vm2435 = vcmp.lt.s32.totalorder %v2434, 2
  %vm2436 = vcmp.eq.s32.totalorder %v2434, 0
  %v2437 = vxor.u32 %v2431, 2147483648
  %v2438 = vsel %vm2436, %v2430, %v2437
  %vm2439 = vcmp.eq.s32.totalorder %v2434, 2
  %v2440 = vxor.u32 %v2430, 2147483648
  %v2441 = vsel %vm2439, %v2440, %v2431
  %v2442 = vsel %vm2435, %v2438, %v2441
  %v2443 = vsel %vm2432, nan, %v2442
  %v2444 = vand.u32 2147483647, %v1871
  %vm2445 = vcmp.le.f32.partialorder %v2444, 0.7853982
  %vm2446 = vcmp.lt.s32.totalorder %v1871, 0
  %v2447 = vand.u32 %v1871, 2139095040
  %v2448 = vshrl.u32 %v2447, 23
  %v2449 = vsub.s32 %v2448, 127
  %v2450 = vand.u32 2147483647, %v1871
  %v2451 = vand.u32 %v2450, 8388607
  %v2452 = vor.u32 %v2451, 8388608
  %v2453 = vsub.s32 0, %v2452
  %v2454 = vadd.s32 %v2449, 1
  %vm2455 = vcmp.gt.s32.totalorder %v2454, 0
  %v2456 = vsel %vm2455, %v2454, 0
  %v2457 = vshrl.u32 %v2456, 5
  %v2458 = vand.u32 %v2456, 31
  %v2459 = vsub.s32 32, %v2458
  %v2460 = vshrl.u32 683565275, %v2459
  %v2461 = vshll.u32 683565275, %v2458
  %v2462 = vshrl.u32 2475754826, %v2459
  %v2463 = vor.u32 %v2461, %v2462
  %v2464 = vshll.u32 2475754826, %v2458
  %v2465 = vshrl.u32 2131351028, %v2459
  %v2466 = vor.u32 %v2464, %v2465
  %v2467 = vshll.u32 2131351028, %v2458
  %v2468 = vshrl.u32 2102212464, %v2459
  %v2469 = vor.u32 %v2467, %v2468
  %v2470 = vshll.u32 2102212464, %v2458
  %v2471 = vshrl.u32 920167782, %v2459
  %v2472 = vor.u32 %v2470, %v2471
  %v2473 = vshll.u32 920167782, %v2458
  %v2474 = vshrl.u32 1326507024, %v2459
  %v2475 = vor.u32 %v2473, %v2474
  %vm2476 = vcmp.lt.s32.totalorder %v2457, 1
  %vm2477 = vcmp.lt.s32.totalorder %v2457, 2
  %vm2478 = vcmp.lt.s32.totalorder %v2457, 3
  %vm2479 = vcmp.lt.s32.totalorder %v2457, 4
  %v2480 = vsel %vm2476, %v2460, %v2463
  %v2481 = vsel %vm2479, %v2469, 2102212464
  %v2482 = vsel %vm2478, %v2466, %v2481
  %v2483 = vsel %vm2477, %v2480, %v2482
  %v2484 = vsel %vm2476, %v2463, %v2466
  %v2485 = vsel %vm2479, %v2472, 920167782
  %v2486 = vsel %vm2478, %v2469, %v2485
  %v2487 = vsel %vm2477, %v2484, %v2486
  %v2488 = vsel %vm2476, %v2466, %v2469
  %v2489 = vsel %vm2479, %v2475, 1326507024
  %v2490 = vsel %vm2478, %v2472, %v2489
  %v2491 = vsel %vm2477, %v2488, %v2490
  %v2492 = vshll.u32 %v2452, 8
  %v2493 = vmul.u32.u64.compose %v2492, %v2491
  %v2494 = vextract.low.u32 %v2493
  %v2495 = vextract.high.u32 %v2493
  %v2496 = vmul.u32.u64.compose %v2492, %v2487
  %v2497 = vextract.low.u32 %v2496
  %v2498 = vextract.high.u32 %v2496
  %v2499 = vmul.u32 %v2492, %v2483
  %v2500 = vadd.s32 %v2495, %v2497
  %vm2501 = vc.u32 %v2495, %v2497
  %v2502 = vadd.s32 %v2498, 1
  %v2503 = vsel %vm2501, %v2502, %v2498
  %v2504 = vadd.s32 %v2499, %v2503
  %v2505 = vadd.s32 %v2504, 536870912
  %v2506 = vshrl.u32 %v2505, 30
  %v2507 = vshll.u32 %v2506, 30
  %v2508 = vsub.s32 %v2504, %v2507
  %vm2509 = vcmp.lt.s32.totalorder %v2508, 0
  %v2510 = vsub.s32 0, %v2508
  %v2511 = vsel %vm2509, %v2510, %v2508
  %v2512 = vclz %v2511
  %v2513 = vsub.s32 %v2512, 2
  %vm2514 = vcmp.gt.s32.totalorder 0, %v2513
  %v2515 = vsel %vm2514, 0, %v2513
  %v2516 = vsub.s32 32, %v2515
  %v2517 = vshll.u32 %v2508, %v2515
  %v2518 = vshrl.u32 %v2500, %v2516
  %v2519 = vor.u32 %v2517, %v2518
  %v2520 = vsub.s32 4294967266, %v2515
  %v2521 = vadd.s32 %v2520, 127
  %v2522 = vshll.u32 %v2521, 23
  %v2523 = vor.u32 4788187, %v2522
  %v2524 = vand.u32 2147483647, %v2523
  %v2526 = vcvt.s32.f32 %v2519
  %v2527 = vmul.f32 %v2526, %v2524
  %v2528 = vxor.u32 %v2527, 2147483648
  %v2529 = vsel %vm2446, %v2528, %v2527
  %v2530 = vsub.s32 4, %v2506
  %v2531 = vsel %vm2446, %v2530, %v2506
  %v2532 = vsel %vm2445, %v1871, %v2529
  %v2533 = vsel %vm2445, 0, %v2531
  %v2534 = vcosq.f32.pop %v2532
  %v2535 = vsinq.f32.pop %v2532
  %vm2536 = vweird.f32 %v1871
  %v2537 = vadd.s32 %v2533, 3
  %v2538 = vand.u32 %v2537, 3
  %vm2539 = vcmp.lt.s32.totalorder %v2538, 2
  %vm2540 = vcmp.eq.s32.totalorder %v2538, 0
  %v2541 = vxor.u32 %v2535, 2147483648
  %v2542 = vsel %vm2540, %v2534, %v2541
  %vm2543 = vcmp.eq.s32.totalorder %v2538, 2
  %v2544 = vxor.u32 %v2534, 2147483648
  %v2545 = vsel %vm2543, %v2544, %v2535
  %v2546 = vsel %vm2539, %v2542, %v2545
  %v2547 = vsel %vm2536, nan, %v2546
  %v2548 = vand.u32 2147483647, %v1876
  %vm2549 = vcmp.le.f32.partialorder %v2548, 0.7853982
  %vm2550 = vcmp.lt.s32.totalorder %v1876, 0
  %v2551 = vand.u32 %v1876, 2139095040
  %v2552 = vshrl.u32 %v2551, 23
  %v2553 = vsub.s32 %v2552, 127
  %v2554 = vand.u32 2147483647, %v1876
  %v2555 = vand.u32 %v2554, 8388607
  %v2556 = vor.u32 %v2555, 8388608
  %v2557 = vsub.s32 0, %v2556
  %v2558 = vadd.s32 %v2553, 1
  %vm2559 = vcmp.gt.s32.totalorder %v2558, 0
  %v2560 = vsel %vm2559, %v2558, 0
  %v2561 = vshrl.u32 %v2560, 5
  %v2562 = vand.u32 %v2560, 31
  %v2563 = vsub.s32 32, %v2562
  %v2564 = vshrl.u32 683565275, %v2563
  %v2565 = vshll.u32 683565275, %v2562
  %v2566 = vshrl.u32 2475754826, %v2563
  %v2567 = vor.u32 %v2565, %v2566
  %v2568 = vshll.u32 2475754826, %v2562
  %v2569 = vshrl.u32 2131351028, %v2563
  %v2570 = vor.u32 %v2568, %v2569
  %v2571 = vshll.u32 2131351028, %v2562
  %v2572 = vshrl.u32 2102212464, %v2563
  %v2573 = vor.u32 %v2571, %v2572
  %v2574 = vshll.u32 2102212464, %v2562
  %v2575 = vshrl.u32 920167782, %v2563
  %v2576 = vor.u32 %v2574, %v2575
  %v2577 = vshll.u32 920167782, %v2562
  %v2578 = vshrl.u32 1326507024, %v2563
  %v2579 = vor.u32 %v2577, %v2578
  %vm2580 = vcmp.lt.s32.totalorder %v2561, 1
  %vm2581 = vcmp.lt.s32.totalorder %v2561, 2
  %vm2582 = vcmp.lt.s32.totalorder %v2561, 3
  %vm2583 = vcmp.lt.s32.totalorder %v2561, 4
  %v2584 = vsel %vm2580, %v2564, %v2567
  %v2585 = vsel %vm2583, %v2573, 2102212464
  %v2586 = vsel %vm2582, %v2570, %v2585
  %v2587 = vsel %vm2581, %v2584, %v2586
  %v2588 = vsel %vm2580, %v2567, %v2570
  %v2589 = vsel %vm2583, %v2576, 920167782
  %v2590 = vsel %vm2582, %v2573, %v2589
  %v2591 = vsel %vm2581, %v2588, %v2590
  %v2592 = vsel %vm2580, %v2570, %v2573
  %v2593 = vsel %vm2583, %v2579, 1326507024
  %v2594 = vsel %vm2582, %v2576, %v2593
  %v2595 = vsel %vm2581, %v2592, %v2594
  %v2596 = vshll.u32 %v2556, 8
  %v2597 = vmul.u32.u64.compose %v2596, %v2595
  %v2598 = vextract.low.u32 %v2597
  %v2599 = vextract.high.u32 %v2597
  %v2600 = vmul.u32.u64.compose %v2596, %v2591
  %v2601 = vextract.low.u32 %v2600
  %v2602 = vextract.high.u32 %v2600
  %v2603 = vmul.u32 %v2596, %v2587
  %v2604 = vadd.s32 %v2599, %v2601
  %vm2605 = vc.u32 %v2599, %v2601
  %v2606 = vadd.s32 %v2602, 1
  %v2607 = vsel %vm2605, %v2606, %v2602
  %v2608 = vadd.s32 %v2603, %v2607
  %v2609 = vadd.s32 %v2608, 536870912
  %v2610 = vshrl.u32 %v2609, 30
  %v2611 = vshll.u32 %v2610, 30
  %v2612 = vsub.s32 %v2608, %v2611
  %vm2613 = vcmp.lt.s32.totalorder %v2612, 0
  %v2614 = vsub.s32 0, %v2612
  %v2615 = vsel %vm2613, %v2614, %v2612
  %v2616 = vclz %v2615
  %v2617 = vsub.s32 %v2616, 2
  %vm2618 = vcmp.gt.s32.totalorder 0, %v2617
  %v2619 = vsel %vm2618, 0, %v2617
  %v2620 = vsub.s32 32, %v2619
  %v2621 = vshll.u32 %v2612, %v2619
  %v2622 = vshrl.u32 %v2604, %v2620
  %v2623 = vor.u32 %v2621, %v2622
  %v2624 = vsub.s32 4294967266, %v2619
  %v2625 = vadd.s32 %v2624, 127
  %v2626 = vshll.u32 %v2625, 23
  %v2627 = vor.u32 4788187, %v2626
  %v2628 = vand.u32 2147483647, %v2627
  %v2630 = vcvt.s32.f32 %v2623
  %v2631 = vmul.f32 %v2630, %v2628
  %v2632 = vxor.u32 %v2631, 2147483648
  %v2633 = vsel %vm2550, %v2632, %v2631
  %v2634 = vsub.s32 4, %v2610
  %v2635 = vsel %vm2550, %v2634, %v2610
  %v2636 = vsel %vm2549, %v1876, %v2633
  %v2637 = vsel %vm2549, 0, %v2635
  %v2638 = vcosq.f32.pop %v2636
  %v2639 = vsinq.f32.pop %v2636
  %vm2640 = vweird.f32 %v1876
  %v2641 = vadd.s32 %v2637, 3
  %v2642 = vand.u32 %v2641, 3
  %vm2643 = vcmp.lt.s32.totalorder %v2642, 2
  %vm2644 = vcmp.eq.s32.totalorder %v2642, 0
  %v2645 = vxor.u32 %v2639, 2147483648
  %v2646 = vsel %vm2644, %v2638, %v2645
  %vm2647 = vcmp.eq.s32.totalorder %v2642, 2
  %v2648 = vxor.u32 %v2638, 2147483648
  %v2649 = vsel %vm2647, %v2648, %v2639
  %v2650 = vsel %vm2643, %v2646, %v2649
  %v2651 = vsel %vm2640, nan, %v2650
  %v2652 = vand.u32 2147483647, %v1881
  %vm2653 = vcmp.le.f32.partialorder %v2652, 0.7853982
  %vm2654 = vcmp.lt.s32.totalorder %v1881, 0
  %v2655 = vand.u32 %v1881, 2139095040
  %v2656 = vshrl.u32 %v2655, 23
  %v2657 = vsub.s32 %v2656, 127
  %v2658 = vand.u32 2147483647, %v1881
  %v2659 = vand.u32 %v2658, 8388607
  %v2660 = vor.u32 %v2659, 8388608
  %v2661 = vsub.s32 0, %v2660
  %v2662 = vadd.s32 %v2657, 1
  %vm2663 = vcmp.gt.s32.totalorder %v2662, 0
  %v2664 = vsel %vm2663, %v2662, 0
  %v2665 = vshrl.u32 %v2664, 5
  %v2666 = vand.u32 %v2664, 31
  %v2667 = vsub.s32 32, %v2666
  %v2668 = vshrl.u32 683565275, %v2667
  %v2669 = vshll.u32 683565275, %v2666
  %v2670 = vshrl.u32 2475754826, %v2667
  %v2671 = vor.u32 %v2669, %v2670
  %v2672 = vshll.u32 2475754826, %v2666
  %v2673 = vshrl.u32 2131351028, %v2667
  %v2674 = vor.u32 %v2672, %v2673
  %v2675 = vshll.u32 2131351028, %v2666
  %v2676 = vshrl.u32 2102212464, %v2667
  %v2677 = vor.u32 %v2675, %v2676
  %v2678 = vshll.u32 2102212464, %v2666
  %v2679 = vshrl.u32 920167782, %v2667
  %v2680 = vor.u32 %v2678, %v2679
  %v2681 = vshll.u32 920167782, %v2666
  %v2682 = vshrl.u32 1326507024, %v2667
  %v2683 = vor.u32 %v2681, %v2682
  %vm2684 = vcmp.lt.s32.totalorder %v2665, 1
  %vm2685 = vcmp.lt.s32.totalorder %v2665, 2
  %vm2686 = vcmp.lt.s32.totalorder %v2665, 3
  %vm2687 = vcmp.lt.s32.totalorder %v2665, 4
  %v2688 = vsel %vm2684, %v2668, %v2671
  %v2689 = vsel %vm2687, %v2677, 2102212464
  %v2690 = vsel %vm2686, %v2674, %v2689
  %v2691 = vsel %vm2685, %v2688, %v2690
  %v2692 = vsel %vm2684, %v2671, %v2674
  %v2693 = vsel %vm2687, %v2680, 920167782
  %v2694 = vsel %vm2686, %v2677, %v2693
  %v2695 = vsel %vm2685, %v2692, %v2694
  %v2696 = vsel %vm2684, %v2674, %v2677
  %v2697 = vsel %vm2687, %v2683, 1326507024
  %v2698 = vsel %vm2686, %v2680, %v2697
  %v2699 = vsel %vm2685, %v2696, %v2698
  %v2700 = vshll.u32 %v2660, 8
  %v2701 = vmul.u32.u64.compose %v2700, %v2699
  %v2702 = vextract.low.u32 %v2701
  %v2703 = vextract.high.u32 %v2701
  %v2704 = vmul.u32.u64.compose %v2700, %v2695
  %v2705 = vextract.low.u32 %v2704
  %v2706 = vextract.high.u32 %v2704
  %v2707 = vmul.u32 %v2700, %v2691
  %v2708 = vadd.s32 %v2703, %v2705
  %vm2709 = vc.u32 %v2703, %v2705
  %v2710 = vadd.s32 %v2706, 1
  %v2711 = vsel %vm2709, %v2710, %v2706
  %v2712 = vadd.s32 %v2707, %v2711
  %v2713 = vadd.s32 %v2712, 536870912
  %v2714 = vshrl.u32 %v2713, 30
  %v2715 = vshll.u32 %v2714, 30
  %v2716 = vsub.s32 %v2712, %v2715
  %vm2717 = vcmp.lt.s32.totalorder %v2716, 0
  %v2718 = vsub.s32 0, %v2716
  %v2719 = vsel %vm2717, %v2718, %v2716
  %v2720 = vclz %v2719
  %v2721 = vsub.s32 %v2720, 2
  %vm2722 = vcmp.gt.s32.totalorder 0, %v2721
  %v2723 = vsel %vm2722, 0, %v2721
  %v2724 = vsub.s32 32, %v2723
  %v2725 = vshll.u32 %v2716, %v2723
  %v2726 = vshrl.u32 %v2708, %v2724
  %v2727 = vor.u32 %v2725, %v2726
  %v2728 = vsub.s32 4294967266, %v2723
  %v2729 = vadd.s32 %v2728, 127
  %v2730 = vshll.u32 %v2729, 23
  %v2731 = vor.u32 4788187, %v2730
  %v2732 = vand.u32 2147483647, %v2731
  %v2734 = vcvt.s32.f32 %v2727
  %v2735 = vmul.f32 %v2734, %v2732
  %v2736 = vxor.u32 %v2735, 2147483648
  %v2737 = vsel %vm2654, %v2736, %v2735
  %v2738 = vsub.s32 4, %v2714
  %v2739 = vsel %vm2654, %v2738, %v2714
  %v2740 = vsel %vm2653, %v1881, %v2737
  %v2741 = vsel %vm2653, 0, %v2739
  %v2742 = vcosq.f32.pop %v2740
  %v2743 = vsinq.f32.pop %v2740
  %vm2744 = vweird.f32 %v1881
  %v2745 = vadd.s32 %v2741, 3
  %v2746 = vand.u32 %v2745, 3
  %vm2747 = vcmp.lt.s32.totalorder %v2746, 2
  %vm2748 = vcmp.eq.s32.totalorder %v2746, 0
  %v2749 = vxor.u32 %v2743, 2147483648
  %v2750 = vsel %vm2748, %v2742, %v2749
  %vm2751 = vcmp.eq.s32.totalorder %v2746, 2
  %v2752 = vxor.u32 %v2742, 2147483648
  %v2753 = vsel %vm2751, %v2752, %v2743
  %v2754 = vsel %vm2747, %v2750, %v2753
  %v2755 = vsel %vm2744, nan, %v2754
  %v2756 = vand.u32 2147483647, %v1886
  %vm2757 = vcmp.le.f32.partialorder %v2756, 0.7853982
  %vm2758 = vcmp.lt.s32.totalorder %v1886, 0
  %v2759 = vand.u32 %v1886, 2139095040
  %v2760 = vshrl.u32 %v2759, 23
  %v2761 = vsub.s32 %v2760, 127
  %v2762 = vand.u32 2147483647, %v1886
  %v2763 = vand.u32 %v2762, 8388607
  %v2764 = vor.u32 %v2763, 8388608
  %v2765 = vsub.s32 0, %v2764
  %v2766 = vadd.s32 %v2761, 1
  %vm2767 = vcmp.gt.s32.totalorder %v2766, 0
  %v2768 = vsel %vm2767, %v2766, 0
  %v2769 = vshrl.u32 %v2768, 5
  %v2770 = vand.u32 %v2768, 31
  %v2771 = vsub.s32 32, %v2770
  %v2772 = vshrl.u32 683565275, %v2771
  %v2773 = vshll.u32 683565275, %v2770
  %v2774 = vshrl.u32 2475754826, %v2771
  %v2775 = vor.u32 %v2773, %v2774
  %v2776 = vshll.u32 2475754826, %v2770
  %v2777 = vshrl.u32 2131351028, %v2771
  %v2778 = vor.u32 %v2776, %v2777
  %v2779 = vshll.u32 2131351028, %v2770
  %v2780 = vshrl.u32 2102212464, %v2771
  %v2781 = vor.u32 %v2779, %v2780
  %v2782 = vshll.u32 2102212464, %v2770
  %v2783 = vshrl.u32 920167782, %v2771
  %v2784 = vor.u32 %v2782, %v2783
  %v2785 = vshll.u32 920167782, %v2770
  %v2786 = vshrl.u32 1326507024, %v2771
  %v2787 = vor.u32 %v2785, %v2786
  %vm2788 = vcmp.lt.s32.totalorder %v2769, 1
  %vm2789 = vcmp.lt.s32.totalorder %v2769, 2
  %vm2790 = vcmp.lt.s32.totalorder %v2769, 3
  %vm2791 = vcmp.lt.s32.totalorder %v2769, 4
  %v2792 = vsel %vm2788, %v2772, %v2775
  %v2793 = vsel %vm2791, %v2781, 2102212464
  %v2794 = vsel %vm2790, %v2778, %v2793
  %v2795 = vsel %vm2789, %v2792, %v2794
  %v2796 = vsel %vm2788, %v2775, %v2778
  %v2797 = vsel %vm2791, %v2784, 920167782
  %v2798 = vsel %vm2790, %v2781, %v2797
  %v2799 = vsel %vm2789, %v2796, %v2798
  %v2800 = vsel %vm2788, %v2778, %v2781
  %v2801 = vsel %vm2791, %v2787, 1326507024
  %v2802 = vsel %vm2790, %v2784, %v2801
  %v2803 = vsel %vm2789, %v2800, %v2802
  %v2804 = vshll.u32 %v2764, 8
  %v2805 = vmul.u32.u64.compose %v2804, %v2803
  %v2806 = vextract.low.u32 %v2805
  %v2807 = vextract.high.u32 %v2805
  %v2808 = vmul.u32.u64.compose %v2804, %v2799
  %v2809 = vextract.low.u32 %v2808
  %v2810 = vextract.high.u32 %v2808
  %v2811 = vmul.u32 %v2804, %v2795
  %v2812 = vadd.s32 %v2807, %v2809
  %vm2813 = vc.u32 %v2807, %v2809
  %v2814 = vadd.s32 %v2810, 1
  %v2815 = vsel %vm2813, %v2814, %v2810
  %v2816 = vadd.s32 %v2811, %v2815
  %v2817 = vadd.s32 %v2816, 536870912
  %v2818 = vshrl.u32 %v2817, 30
  %v2819 = vshll.u32 %v2818, 30
  %v2820 = vsub.s32 %v2816, %v2819
  %vm2821 = vcmp.lt.s32.totalorder %v2820, 0
  %v2822 = vsub.s32 0, %v2820
  %v2823 = vsel %vm2821, %v2822, %v2820
  %v2824 = vclz %v2823
  %v2825 = vsub.s32 %v2824, 2
  %vm2826 = vcmp.gt.s32.totalorder 0, %v2825
  %v2827 = vsel %vm2826, 0, %v2825
  %v2828 = vsub.s32 32, %v2827
  %v2829 = vshll.u32 %v2820, %v2827
  %v2830 = vshrl.u32 %v2812, %v2828
  %v2831 = vor.u32 %v2829, %v2830
  %v2832 = vsub.s32 4294967266, %v2827
  %v2833 = vadd.s32 %v2832, 127
  %v2834 = vshll.u32 %v2833, 23
  %v2835 = vor.u32 4788187, %v2834
  %v2836 = vand.u32 2147483647, %v2835
  %v2838 = vcvt.s32.f32 %v2831
  %v2839 = vmul.f32 %v2838, %v2836
  %v2840 = vxor.u32 %v2839, 2147483648
  %v2841 = vsel %vm2758, %v2840, %v2839
  %v2842 = vsub.s32 4, %v2818
  %v2843 = vsel %vm2758, %v2842, %v2818
  %v2844 = vsel %vm2757, %v1886, %v2841
  %v2845 = vsel %vm2757, 0, %v2843
  %v2846 = vcosq.f32.pop %v2844
  %v2847 = vsinq.f32.pop %v2844
  %vm2848 = vweird.f32 %v1886
  %v2849 = vadd.s32 %v2845, 3
  %v2850 = vand.u32 %v2849, 3
  %vm2851 = vcmp.lt.s32.totalorder %v2850, 2
  %vm2852 = vcmp.eq.s32.totalorder %v2850, 0
  %v2853 = vxor.u32 %v2847, 2147483648
  %v2854 = vsel %vm2852, %v2846, %v2853
  %vm2855 = vcmp.eq.s32.totalorder %v2850, 2
  %v2856 = vxor.u32 %v2846, 2147483648
  %v2857 = vsel %vm2855, %v2856, %v2847
  %v2858 = vsel %vm2851, %v2854, %v2857
  %v2859 = vsel %vm2848, nan, %v2858
  %v2860 = vand.u32 2147483647, %v1891
  %vm2861 = vcmp.le.f32.partialorder %v2860, 0.7853982
  %vm2862 = vcmp.lt.s32.totalorder %v1891, 0
  %v2863 = vand.u32 %v1891, 2139095040
  %v2864 = vshrl.u32 %v2863, 23
  %v2865 = vsub.s32 %v2864, 127
  %v2866 = vand.u32 2147483647, %v1891
  %v2867 = vand.u32 %v2866, 8388607
  %v2868 = vor.u32 %v2867, 8388608
  %v2869 = vsub.s32 0, %v2868
  %v2870 = vadd.s32 %v2865, 1
  %vm2871 = vcmp.gt.s32.totalorder %v2870, 0
  %v2872 = vsel %vm2871, %v2870, 0
  %v2873 = vshrl.u32 %v2872, 5
  %v2874 = vand.u32 %v2872, 31
  %v2875 = vsub.s32 32, %v2874
  %v2876 = vshrl.u32 683565275, %v2875
  %v2877 = vshll.u32 683565275, %v2874
  %v2878 = vshrl.u32 2475754826, %v2875
  %v2879 = vor.u32 %v2877, %v2878
  %v2880 = vshll.u32 2475754826, %v2874
  %v2881 = vshrl.u32 2131351028, %v2875
  %v2882 = vor.u32 %v2880, %v2881
  %v2883 = vshll.u32 2131351028, %v2874
  %v2884 = vshrl.u32 2102212464, %v2875
  %v2885 = vor.u32 %v2883, %v2884
  %v2886 = vshll.u32 2102212464, %v2874
  %v2887 = vshrl.u32 920167782, %v2875
  %v2888 = vor.u32 %v2886, %v2887
  %v2889 = vshll.u32 920167782, %v2874
  %v2890 = vshrl.u32 1326507024, %v2875
  %v2891 = vor.u32 %v2889, %v2890
  %vm2892 = vcmp.lt.s32.totalorder %v2873, 1
  %vm2893 = vcmp.lt.s32.totalorder %v2873, 2
  %vm2894 = vcmp.lt.s32.totalorder %v2873, 3
  %vm2895 = vcmp.lt.s32.totalorder %v2873, 4
  %v2896 = vsel %vm2892, %v2876, %v2879
  %v2897 = vsel %vm2895, %v2885, 2102212464
  %v2898 = vsel %vm2894, %v2882, %v2897
  %v2899 = vsel %vm2893, %v2896, %v2898
  %v2900 = vsel %vm2892, %v2879, %v2882
  %v2901 = vsel %vm2895, %v2888, 920167782
  %v2902 = vsel %vm2894, %v2885, %v2901
  %v2903 = vsel %vm2893, %v2900, %v2902
  %v2904 = vsel %vm2892, %v2882, %v2885
  %v2905 = vsel %vm2895, %v2891, 1326507024
  %v2906 = vsel %vm2894, %v2888, %v2905
  %v2907 = vsel %vm2893, %v2904, %v2906
  %v2908 = vshll.u32 %v2868, 8
  %v2909 = vmul.u32.u64.compose %v2908, %v2907
  %v2910 = vextract.low.u32 %v2909
  %v2911 = vextract.high.u32 %v2909
  %v2912 = vmul.u32.u64.compose %v2908, %v2903
  %v2913 = vextract.low.u32 %v2912
  %v2914 = vextract.high.u32 %v2912
  %v2915 = vmul.u32 %v2908, %v2899
  %v2916 = vadd.s32 %v2911, %v2913
  %vm2917 = vc.u32 %v2911, %v2913
  %v2918 = vadd.s32 %v2914, 1
  %v2919 = vsel %vm2917, %v2918, %v2914
  %v2920 = vadd.s32 %v2915, %v2919
  %v2921 = vadd.s32 %v2920, 536870912
  %v2922 = vshrl.u32 %v2921, 30
  %v2923 = vshll.u32 %v2922, 30
  %v2924 = vsub.s32 %v2920, %v2923
  %vm2925 = vcmp.lt.s32.totalorder %v2924, 0
  %v2926 = vsub.s32 0, %v2924
  %v2927 = vsel %vm2925, %v2926, %v2924
  %v2928 = vclz %v2927
  %v2929 = vsub.s32 %v2928, 2
  %vm2930 = vcmp.gt.s32.totalorder 0, %v2929
  %v2931 = vsel %vm2930, 0, %v2929
  %v2932 = vsub.s32 32, %v2931
  %v2933 = vshll.u32 %v2924, %v2931
  %v2934 = vshrl.u32 %v2916, %v2932
  %v2935 = vor.u32 %v2933, %v2934
  %v2936 = vsub.s32 4294967266, %v2931
  %v2937 = vadd.s32 %v2936, 127
  %v2938 = vshll.u32 %v2937, 23
  %v2939 = vor.u32 4788187, %v2938
  %v2940 = vand.u32 2147483647, %v2939
  %v2942 = vcvt.s32.f32 %v2935
  %v2943 = vmul.f32 %v2942, %v2940
  %v2944 = vxor.u32 %v2943, 2147483648
  %v2945 = vsel %vm2862, %v2944, %v2943
  %v2946 = vsub.s32 4, %v2922
  %v2947 = vsel %vm2862, %v2946, %v2922
  %v2948 = vsel %vm2861, %v1891, %v2945
  %v2949 = vsel %vm2861, 0, %v2947
  %v2950 = vcosq.f32.pop %v2948
  %v2951 = vsinq.f32.pop %v2948
  %vm2952 = vweird.f32 %v1891
  %v2953 = vadd.s32 %v2949, 3
  %v2954 = vand.u32 %v2953, 3
  %vm2955 = vcmp.lt.s32.totalorder %v2954, 2
  %vm2956 = vcmp.eq.s32.totalorder %v2954, 0
  %v2957 = vxor.u32 %v2951, 2147483648
  %v2958 = vsel %vm2956, %v2950, %v2957
  %vm2959 = vcmp.eq.s32.totalorder %v2954, 2
  %v2960 = vxor.u32 %v2950, 2147483648
  %v2961 = vsel %vm2959, %v2960, %v2951
  %v2962 = vsel %vm2955, %v2958, %v2961
  %v2963 = vsel %vm2952, nan, %v2962
  %v2964 = vand.u32 2147483647, %v1896
  %vm2965 = vcmp.le.f32.partialorder %v2964, 0.7853982
  %vm2966 = vcmp.lt.s32.totalorder %v1896, 0
  %v2967 = vand.u32 %v1896, 2139095040
  %v2968 = vshrl.u32 %v2967, 23
  %v2969 = vsub.s32 %v2968, 127
  %v2970 = vand.u32 2147483647, %v1896
  %v2971 = vand.u32 %v2970, 8388607
  %v2972 = vor.u32 %v2971, 8388608
  %v2973 = vsub.s32 0, %v2972
  %v2974 = vadd.s32 %v2969, 1
  %vm2975 = vcmp.gt.s32.totalorder %v2974, 0
  %v2976 = vsel %vm2975, %v2974, 0
  %v2977 = vshrl.u32 %v2976, 5
  %v2978 = vand.u32 %v2976, 31
  %v2979 = vsub.s32 32, %v2978
  %v2980 = vshrl.u32 683565275, %v2979
  %v2981 = vshll.u32 683565275, %v2978
  %v2982 = vshrl.u32 2475754826, %v2979
  %v2983 = vor.u32 %v2981, %v2982
  %v2984 = vshll.u32 2475754826, %v2978
  %v2985 = vshrl.u32 2131351028, %v2979
  %v2986 = vor.u32 %v2984, %v2985
  %v2987 = vshll.u32 2131351028, %v2978
  %v2988 = vshrl.u32 2102212464, %v2979
  %v2989 = vor.u32 %v2987, %v2988
  %v2990 = vshll.u32 2102212464, %v2978
  %v2991 = vshrl.u32 920167782, %v2979
  %v2992 = vor.u32 %v2990, %v2991
  %v2993 = vshll.u32 920167782, %v2978
  %v2994 = vshrl.u32 1326507024, %v2979
  %v2995 = vor.u32 %v2993, %v2994
  %vm2996 = vcmp.lt.s32.totalorder %v2977, 1
  %vm2997 = vcmp.lt.s32.totalorder %v2977, 2
  %vm2998 = vcmp.lt.s32.totalorder %v2977, 3
  %vm2999 = vcmp.lt.s32.totalorder %v2977, 4
  %v3000 = vsel %vm2996, %v2980, %v2983
  %v3001 = vsel %vm2999, %v2989, 2102212464
  %v3002 = vsel %vm2998, %v2986, %v3001
  %v3003 = vsel %vm2997, %v3000, %v3002
  %v3004 = vsel %vm2996, %v2983, %v2986
  %v3005 = vsel %vm2999, %v2992, 920167782
  %v3006 = vsel %vm2998, %v2989, %v3005
  %v3007 = vsel %vm2997, %v3004, %v3006
  %v3008 = vsel %vm2996, %v2986, %v2989
  %v3009 = vsel %vm2999, %v2995, 1326507024
  %v3010 = vsel %vm2998, %v2992, %v3009
  %v3011 = vsel %vm2997, %v3008, %v3010
  %v3012 = vshll.u32 %v2972, 8
  %v3013 = vmul.u32.u64.compose %v3012, %v3011
  %v3014 = vextract.low.u32 %v3013
  %v3015 = vextract.high.u32 %v3013
  %v3016 = vmul.u32.u64.compose %v3012, %v3007
  %v3017 = vextract.low.u32 %v3016
  %v3018 = vextract.high.u32 %v3016
  %v3019 = vmul.u32 %v3012, %v3003
  %v3020 = vadd.s32 %v3015, %v3017
  %vm3021 = vc.u32 %v3015, %v3017
  %v3022 = vadd.s32 %v3018, 1
  %v3023 = vsel %vm3021, %v3022, %v3018
  %v3024 = vadd.s32 %v3019, %v3023
  %v3025 = vadd.s32 %v3024, 536870912
  %v3026 = vshrl.u32 %v3025, 30
  %v3027 = vshll.u32 %v3026, 30
  %v3028 = vsub.s32 %v3024, %v3027
  %vm3029 = vcmp.lt.s32.totalorder %v3028, 0
  %v3030 = vsub.s32 0, %v3028
  %v3031 = vsel %vm3029, %v3030, %v3028
  %v3032 = vclz %v3031
  %v3033 = vsub.s32 %v3032, 2
  %vm3034 = vcmp.gt.s32.totalorder 0, %v3033
  %v3035 = vsel %vm3034, 0, %v3033
  %v3036 = vsub.s32 32, %v3035
  %v3037 = vshll.u32 %v3028, %v3035
  %v3038 = vshrl.u32 %v3020, %v3036
  %v3039 = vor.u32 %v3037, %v3038
  %v3040 = vsub.s32 4294967266, %v3035
  %v3041 = vadd.s32 %v3040, 127
  %v3042 = vshll.u32 %v3041, 23
  %v3043 = vor.u32 4788187, %v3042
  %v3044 = vand.u32 2147483647, %v3043
  %v3046 = vcvt.s32.f32 %v3039
  %v3047 = vmul.f32 %v3046, %v3044
  %v3048 = vxor.u32 %v3047, 2147483648
  %v3049 = vsel %vm2966, %v3048, %v3047
  %v3050 = vsub.s32 4, %v3026
  %v3051 = vsel %vm2966, %v3050, %v3026
  %v3052 = vsel %vm2965, %v1896, %v3049
  %v3053 = vsel %vm2965, 0, %v3051
  %v3054 = vcosq.f32.pop %v3052
  %v3055 = vsinq.f32.pop %v3052
  %vm3056 = vweird.f32 %v1896
  %v3057 = vadd.s32 %v3053, 3
  %v3058 = vand.u32 %v3057, 3
  %vm3059 = vcmp.lt.s32.totalorder %v3058, 2
  %vm3060 = vcmp.eq.s32.totalorder %v3058, 0
  %v3061 = vxor.u32 %v3055, 2147483648
  %v3062 = vsel %vm3060, %v3054, %v3061
  %vm3063 = vcmp.eq.s32.totalorder %v3058, 2
  %v3064 = vxor.u32 %v3054, 2147483648
  %v3065 = vsel %vm3063, %v3064, %v3055
  %v3066 = vsel %vm3059, %v3062, %v3065
  %v3067 = vsel %vm3056, nan, %v3066
  %v3068 = vand.u32 2147483647, %v1901
  %vm3069 = vcmp.le.f32.partialorder %v3068, 0.7853982
  %vm3070 = vcmp.lt.s32.totalorder %v1901, 0
  %v3071 = vand.u32 %v1901, 2139095040
  %v3072 = vshrl.u32 %v3071, 23
  %v3073 = vsub.s32 %v3072, 127
  %v3074 = vand.u32 2147483647, %v1901
  %v3075 = vand.u32 %v3074, 8388607
  %v3076 = vor.u32 %v3075, 8388608
  %v3077 = vsub.s32 0, %v3076
  %v3078 = vadd.s32 %v3073, 1
  %vm3079 = vcmp.gt.s32.totalorder %v3078, 0
  %v3080 = vsel %vm3079, %v3078, 0
  %v3081 = vshrl.u32 %v3080, 5
  %v3082 = vand.u32 %v3080, 31
  %v3083 = vsub.s32 32, %v3082
  %v3084 = vshrl.u32 683565275, %v3083
  %v3085 = vshll.u32 683565275, %v3082
  %v3086 = vshrl.u32 2475754826, %v3083
  %v3087 = vor.u32 %v3085, %v3086
  %v3088 = vshll.u32 2475754826, %v3082
  %v3089 = vshrl.u32 2131351028, %v3083
  %v3090 = vor.u32 %v3088, %v3089
  %v3091 = vshll.u32 2131351028, %v3082
  %v3092 = vshrl.u32 2102212464, %v3083
  %v3093 = vor.u32 %v3091, %v3092
  %v3094 = vshll.u32 2102212464, %v3082
  %v3095 = vshrl.u32 920167782, %v3083
  %v3096 = vor.u32 %v3094, %v3095
  %v3097 = vshll.u32 920167782, %v3082
  %v3098 = vshrl.u32 1326507024, %v3083
  %v3099 = vor.u32 %v3097, %v3098
  %vm3100 = vcmp.lt.s32.totalorder %v3081, 1
  %vm3101 = vcmp.lt.s32.totalorder %v3081, 2
  %vm3102 = vcmp.lt.s32.totalorder %v3081, 3
  %vm3103 = vcmp.lt.s32.totalorder %v3081, 4
  %v3104 = vsel %vm3100, %v3084, %v3087
  %v3105 = vsel %vm3103, %v3093, 2102212464
  %v3106 = vsel %vm3102, %v3090, %v3105
  %v3107 = vsel %vm3101, %v3104, %v3106
  %v3108 = vsel %vm3100, %v3087, %v3090
  %v3109 = vsel %vm3103, %v3096, 920167782
  %v3110 = vsel %vm3102, %v3093, %v3109
  %v3111 = vsel %vm3101, %v3108, %v3110
  %v3112 = vsel %vm3100, %v3090, %v3093
  %v3113 = vsel %vm3103, %v3099, 1326507024
  %v3114 = vsel %vm3102, %v3096, %v3113
  %v3115 = vsel %vm3101, %v3112, %v3114
  %v3116 = vshll.u32 %v3076, 8
  %v3117 = vmul.u32.u64.compose %v3116, %v3115
  %v3118 = vextract.low.u32 %v3117
  %v3119 = vextract.high.u32 %v3117
  %v3120 = vmul.u32.u64.compose %v3116, %v3111
  %v3121 = vextract.low.u32 %v3120
  %v3122 = vextract.high.u32 %v3120
  %v3123 = vmul.u32 %v3116, %v3107
  %v3124 = vadd.s32 %v3119, %v3121
  %vm3125 = vc.u32 %v3119, %v3121
  %v3126 = vadd.s32 %v3122, 1
  %v3127 = vsel %vm3125, %v3126, %v3122
  %v3128 = vadd.s32 %v3123, %v3127
  %v3129 = vadd.s32 %v3128, 536870912
  %v3130 = vshrl.u32 %v3129, 30
  %v3131 = vshll.u32 %v3130, 30
  %v3132 = vsub.s32 %v3128, %v3131
  %vm3133 = vcmp.lt.s32.totalorder %v3132, 0
  %v3134 = vsub.s32 0, %v3132
  %v3135 = vsel %vm3133, %v3134, %v3132
  %v3136 = vclz %v3135
  %v3137 = vsub.s32 %v3136, 2
  %vm3138 = vcmp.gt.s32.totalorder 0, %v3137
  %v3139 = vsel %vm3138, 0, %v3137
  %v3140 = vsub.s32 32, %v3139
  %v3141 = vshll.u32 %v3132, %v3139
  %v3142 = vshrl.u32 %v3124, %v3140
  %v3143 = vor.u32 %v3141, %v3142
  %v3144 = vsub.s32 4294967266, %v3139
  %v3145 = vadd.s32 %v3144, 127
  %v3146 = vshll.u32 %v3145, 23
  %v3147 = vor.u32 4788187, %v3146
  %v3148 = vand.u32 2147483647, %v3147
  %v3150 = vcvt.s32.f32 %v3143
  %v3151 = vmul.f32 %v3150, %v3148
  %v3152 = vxor.u32 %v3151, 2147483648
  %v3153 = vsel %vm3070, %v3152, %v3151
  %v3154 = vsub.s32 4, %v3130
  %v3155 = vsel %vm3070, %v3154, %v3130
  %v3156 = vsel %vm3069, %v1901, %v3153
  %v3157 = vsel %vm3069, 0, %v3155
  %v3158 = vcosq.f32.pop %v3156
  %v3159 = vsinq.f32.pop %v3156
  %vm3160 = vweird.f32 %v1901
  %v3161 = vadd.s32 %v3157, 3
  %v3162 = vand.u32 %v3161, 3
  %vm3163 = vcmp.lt.s32.totalorder %v3162, 2
  %vm3164 = vcmp.eq.s32.totalorder %v3162, 0
  %v3165 = vxor.u32 %v3159, 2147483648
  %v3166 = vsel %vm3164, %v3158, %v3165
  %vm3167 = vcmp.eq.s32.totalorder %v3162, 2
  %v3168 = vxor.u32 %v3158, 2147483648
  %v3169 = vsel %vm3167, %v3168, %v3159
  %v3170 = vsel %vm3163, %v3166, %v3169
  %v3171 = vsel %vm3160, nan, %v3170
  %v3172 = vand.u32 2147483647, %v1906
  %vm3173 = vcmp.le.f32.partialorder %v3172, 0.7853982
  %vm3174 = vcmp.lt.s32.totalorder %v1906, 0
  %v3175 = vand.u32 %v1906, 2139095040
  %v3176 = vshrl.u32 %v3175, 23
  %v3177 = vsub.s32 %v3176, 127
  %v3178 = vand.u32 2147483647, %v1906
  %v3179 = vand.u32 %v3178, 8388607
  %v3180 = vor.u32 %v3179, 8388608
  %v3181 = vsub.s32 0, %v3180
  %v3182 = vadd.s32 %v3177, 1
  %vm3183 = vcmp.gt.s32.totalorder %v3182, 0
  %v3184 = vsel %vm3183, %v3182, 0
  %v3185 = vshrl.u32 %v3184, 5
  %v3186 = vand.u32 %v3184, 31
  %v3187 = vsub.s32 32, %v3186
  %v3188 = vshrl.u32 683565275, %v3187
  %v3189 = vshll.u32 683565275, %v3186
  %v3190 = vshrl.u32 2475754826, %v3187
  %v3191 = vor.u32 %v3189, %v3190
  %v3192 = vshll.u32 2475754826, %v3186
  %v3193 = vshrl.u32 2131351028, %v3187
  %v3194 = vor.u32 %v3192, %v3193
  %v3195 = vshll.u32 2131351028, %v3186
  %v3196 = vshrl.u32 2102212464, %v3187
  %v3197 = vor.u32 %v3195, %v3196
  %v3198 = vshll.u32 2102212464, %v3186
  %v3199 = vshrl.u32 920167782, %v3187
  %v3200 = vor.u32 %v3198, %v3199
  %v3201 = vshll.u32 920167782, %v3186
  %v3202 = vshrl.u32 1326507024, %v3187
  %v3203 = vor.u32 %v3201, %v3202
  %vm3204 = vcmp.lt.s32.totalorder %v3185, 1
  %vm3205 = vcmp.lt.s32.totalorder %v3185, 2
  %vm3206 = vcmp.lt.s32.totalorder %v3185, 3
  %vm3207 = vcmp.lt.s32.totalorder %v3185, 4
  %v3208 = vsel %vm3204, %v3188, %v3191
  %v3209 = vsel %vm3207, %v3197, 2102212464
  %v3210 = vsel %vm3206, %v3194, %v3209
  %v3211 = vsel %vm3205, %v3208, %v3210
  %v3212 = vsel %vm3204, %v3191, %v3194
  %v3213 = vsel %vm3207, %v3200, 920167782
  %v3214 = vsel %vm3206, %v3197, %v3213
  %v3215 = vsel %vm3205, %v3212, %v3214
  %v3216 = vsel %vm3204, %v3194, %v3197
  %v3217 = vsel %vm3207, %v3203, 1326507024
  %v3218 = vsel %vm3206, %v3200, %v3217
  %v3219 = vsel %vm3205, %v3216, %v3218
  %v3220 = vshll.u32 %v3180, 8
  %v3221 = vmul.u32.u64.compose %v3220, %v3219
  %v3222 = vextract.low.u32 %v3221
  %v3223 = vextract.high.u32 %v3221
  %v3224 = vmul.u32.u64.compose %v3220, %v3215
  %v3225 = vextract.low.u32 %v3224
  %v3226 = vextract.high.u32 %v3224
  %v3227 = vmul.u32 %v3220, %v3211
  %v3228 = vadd.s32 %v3223, %v3225
  %vm3229 = vc.u32 %v3223, %v3225
  %v3230 = vadd.s32 %v3226, 1
  %v3231 = vsel %vm3229, %v3230, %v3226
  %v3232 = vadd.s32 %v3227, %v3231
  %v3233 = vadd.s32 %v3232, 536870912
  %v3234 = vshrl.u32 %v3233, 30
  %v3235 = vshll.u32 %v3234, 30
  %v3236 = vsub.s32 %v3232, %v3235
  %vm3237 = vcmp.lt.s32.totalorder %v3236, 0
  %v3238 = vsub.s32 0, %v3236
  %v3239 = vsel %vm3237, %v3238, %v3236
  %v3240 = vclz %v3239
  %v3241 = vsub.s32 %v3240, 2
  %vm3242 = vcmp.gt.s32.totalorder 0, %v3241
  %v3243 = vsel %vm3242, 0, %v3241
  %v3244 = vsub.s32 32, %v3243
  %v3245 = vshll.u32 %v3236, %v3243
  %v3246 = vshrl.u32 %v3228, %v3244
  %v3247 = vor.u32 %v3245, %v3246
  %v3248 = vsub.s32 4294967266, %v3243
  %v3249 = vadd.s32 %v3248, 127
  %v3250 = vshll.u32 %v3249, 23
  %v3251 = vor.u32 4788187, %v3250
  %v3252 = vand.u32 2147483647, %v3251
  %v3254 = vcvt.s32.f32 %v3247
  %v3255 = vmul.f32 %v3254, %v3252
  %v3256 = vxor.u32 %v3255, 2147483648
  %v3257 = vsel %vm3174, %v3256, %v3255
  %v3258 = vsub.s32 4, %v3234
  %v3259 = vsel %vm3174, %v3258, %v3234
  %v3260 = vsel %vm3173, %v1906, %v3257
  %v3261 = vsel %vm3173, 0, %v3259
  %v3262 = vcosq.f32.pop %v3260
  %v3263 = vsinq.f32.pop %v3260
  %vm3264 = vweird.f32 %v1906
  %v3265 = vadd.s32 %v3261, 3
  %v3266 = vand.u32 %v3265, 3
  %vm3267 = vcmp.lt.s32.totalorder %v3266, 2
  %vm3268 = vcmp.eq.s32.totalorder %v3266, 0
  %v3269 = vxor.u32 %v3263, 2147483648
  %v3270 = vsel %vm3268, %v3262, %v3269
  %vm3271 = vcmp.eq.s32.totalorder %v3266, 2
  %v3272 = vxor.u32 %v3262, 2147483648
  %v3273 = vsel %vm3271, %v3272, %v3263
  %v3274 = vsel %vm3267, %v3270, %v3273
  %v3275 = vsel %vm3264, nan, %v3274
  %v3276 = vand.u32 2147483647, %v1911
  %vm3277 = vcmp.le.f32.partialorder %v3276, 0.7853982
  %vm3278 = vcmp.lt.s32.totalorder %v1911, 0
  %v3279 = vand.u32 %v1911, 2139095040
  %v3280 = vshrl.u32 %v3279, 23
  %v3281 = vsub.s32 %v3280, 127
  %v3282 = vand.u32 2147483647, %v1911
  %v3283 = vand.u32 %v3282, 8388607
  %v3284 = vor.u32 %v3283, 8388608
  %v3285 = vsub.s32 0, %v3284
  %v3286 = vadd.s32 %v3281, 1
  %vm3287 = vcmp.gt.s32.totalorder %v3286, 0
  %v3288 = vsel %vm3287, %v3286, 0
  %v3289 = vshrl.u32 %v3288, 5
  %v3290 = vand.u32 %v3288, 31
  %v3291 = vsub.s32 32, %v3290
  %v3292 = vshrl.u32 683565275, %v3291
  %v3293 = vshll.u32 683565275, %v3290
  %v3294 = vshrl.u32 2475754826, %v3291
  %v3295 = vor.u32 %v3293, %v3294
  %v3296 = vshll.u32 2475754826, %v3290
  %v3297 = vshrl.u32 2131351028, %v3291
  %v3298 = vor.u32 %v3296, %v3297
  %v3299 = vshll.u32 2131351028, %v3290
  %v3300 = vshrl.u32 2102212464, %v3291
  %v3301 = vor.u32 %v3299, %v3300
  %v3302 = vshll.u32 2102212464, %v3290
  %v3303 = vshrl.u32 920167782, %v3291
  %v3304 = vor.u32 %v3302, %v3303
  %v3305 = vshll.u32 920167782, %v3290
  %v3306 = vshrl.u32 1326507024, %v3291
  %v3307 = vor.u32 %v3305, %v3306
  %vm3308 = vcmp.lt.s32.totalorder %v3289, 1
  %vm3309 = vcmp.lt.s32.totalorder %v3289, 2
  %vm3310 = vcmp.lt.s32.totalorder %v3289, 3
  %vm3311 = vcmp.lt.s32.totalorder %v3289, 4
  %v3312 = vsel %vm3308, %v3292, %v3295
  %v3313 = vsel %vm3311, %v3301, 2102212464
  %v3314 = vsel %vm3310, %v3298, %v3313
  %v3315 = vsel %vm3309, %v3312, %v3314
  %v3316 = vsel %vm3308, %v3295, %v3298
  %v3317 = vsel %vm3311, %v3304, 920167782
  %v3318 = vsel %vm3310, %v3301, %v3317
  %v3319 = vsel %vm3309, %v3316, %v3318
  %v3320 = vsel %vm3308, %v3298, %v3301
  %v3321 = vsel %vm3311, %v3307, 1326507024
  %v3322 = vsel %vm3310, %v3304, %v3321
  %v3323 = vsel %vm3309, %v3320, %v3322
  %v3324 = vshll.u32 %v3284, 8
  %v3325 = vmul.u32.u64.compose %v3324, %v3323
  %v3326 = vextract.low.u32 %v3325
  %v3327 = vextract.high.u32 %v3325
  %v3328 = vmul.u32.u64.compose %v3324, %v3319
  %v3329 = vextract.low.u32 %v3328
  %v3330 = vextract.high.u32 %v3328
  %v3331 = vmul.u32 %v3324, %v3315
  %v3332 = vadd.s32 %v3327, %v3329
  %vm3333 = vc.u32 %v3327, %v3329
  %v3334 = vadd.s32 %v3330, 1
  %v3335 = vsel %vm3333, %v3334, %v3330
  %v3336 = vadd.s32 %v3331, %v3335
  %v3337 = vadd.s32 %v3336, 536870912
  %v3338 = vshrl.u32 %v3337, 30
  %v3339 = vshll.u32 %v3338, 30
  %v3340 = vsub.s32 %v3336, %v3339
  %vm3341 = vcmp.lt.s32.totalorder %v3340, 0
  %v3342 = vsub.s32 0, %v3340
  %v3343 = vsel %vm3341, %v3342, %v3340
  %v3344 = vclz %v3343
  %v3345 = vsub.s32 %v3344, 2
  %vm3346 = vcmp.gt.s32.totalorder 0, %v3345
  %v3347 = vsel %vm3346, 0, %v3345
  %v3348 = vsub.s32 32, %v3347
  %v3349 = vshll.u32 %v3340, %v3347
  %v3350 = vshrl.u32 %v3332, %v3348
  %v3351 = vor.u32 %v3349, %v3350
  %v3352 = vsub.s32 4294967266, %v3347
  %v3353 = vadd.s32 %v3352, 127
  %v3354 = vshll.u32 %v3353, 23
  %v3355 = vor.u32 4788187, %v3354
  %v3356 = vand.u32 2147483647, %v3355
  %v3358 = vcvt.s32.f32 %v3351
  %v3359 = vmul.f32 %v3358, %v3356
  %v3360 = vxor.u32 %v3359, 2147483648
  %v3361 = vsel %vm3278, %v3360, %v3359
  %v3362 = vsub.s32 4, %v3338
  %v3363 = vsel %vm3278, %v3362, %v3338
  %v3364 = vsel %vm3277, %v1911, %v3361
  %v3365 = vsel %vm3277, 0, %v3363
  %v3366 = vcosq.f32.pop %v3364
  %v3367 = vsinq.f32.pop %v3364
  %vm3368 = vweird.f32 %v1911
  %v3369 = vadd.s32 %v3365, 3
  %v3370 = vand.u32 %v3369, 3
  %vm3371 = vcmp.lt.s32.totalorder %v3370, 2
  %vm3372 = vcmp.eq.s32.totalorder %v3370, 0
  %v3373 = vxor.u32 %v3367, 2147483648
  %v3374 = vsel %vm3372, %v3366, %v3373
  %vm3375 = vcmp.eq.s32.totalorder %v3370, 2
  %v3376 = vxor.u32 %v3366, 2147483648
  %v3377 = vsel %vm3375, %v3376, %v3367
  %v3378 = vsel %vm3371, %v3374, %v3377
  %v3379 = vsel %vm3368, nan, %v3378
  %v3380 = vand.u32 2147483647, %v1916
  %vm3381 = vcmp.le.f32.partialorder %v3380, 0.7853982
  %vm3382 = vcmp.lt.s32.totalorder %v1916, 0
  %v3383 = vand.u32 %v1916, 2139095040
  %v3384 = vshrl.u32 %v3383, 23
  %v3385 = vsub.s32 %v3384, 127
  %v3386 = vand.u32 2147483647, %v1916
  %v3387 = vand.u32 %v3386, 8388607
  %v3388 = vor.u32 %v3387, 8388608
  %v3389 = vsub.s32 0, %v3388
  %v3390 = vadd.s32 %v3385, 1
  %vm3391 = vcmp.gt.s32.totalorder %v3390, 0
  %v3392 = vsel %vm3391, %v3390, 0
  %v3393 = vshrl.u32 %v3392, 5
  %v3394 = vand.u32 %v3392, 31
  %v3395 = vsub.s32 32, %v3394
  %v3396 = vshrl.u32 683565275, %v3395
  %v3397 = vshll.u32 683565275, %v3394
  %v3398 = vshrl.u32 2475754826, %v3395
  %v3399 = vor.u32 %v3397, %v3398
  %v3400 = vshll.u32 2475754826, %v3394
  %v3401 = vshrl.u32 2131351028, %v3395
  %v3402 = vor.u32 %v3400, %v3401
  %v3403 = vshll.u32 2131351028, %v3394
  %v3404 = vshrl.u32 2102212464, %v3395
  %v3405 = vor.u32 %v3403, %v3404
  %v3406 = vshll.u32 2102212464, %v3394
  %v3407 = vshrl.u32 920167782, %v3395
  %v3408 = vor.u32 %v3406, %v3407
  %v3409 = vshll.u32 920167782, %v3394
  %v3410 = vshrl.u32 1326507024, %v3395
  %v3411 = vor.u32 %v3409, %v3410
  %vm3412 = vcmp.lt.s32.totalorder %v3393, 1
  %vm3413 = vcmp.lt.s32.totalorder %v3393, 2
  %vm3414 = vcmp.lt.s32.totalorder %v3393, 3
  %vm3415 = vcmp.lt.s32.totalorder %v3393, 4
  %v3416 = vsel %vm3412, %v3396, %v3399
  %v3417 = vsel %vm3415, %v3405, 2102212464
  %v3418 = vsel %vm3414, %v3402, %v3417
  %v3419 = vsel %vm3413, %v3416, %v3418
  %v3420 = vsel %vm3412, %v3399, %v3402
  %v3421 = vsel %vm3415, %v3408, 920167782
  %v3422 = vsel %vm3414, %v3405, %v3421
  %v3423 = vsel %vm3413, %v3420, %v3422
  %v3424 = vsel %vm3412, %v3402, %v3405
  %v3425 = vsel %vm3415, %v3411, 1326507024
  %v3426 = vsel %vm3414, %v3408, %v3425
  %v3427 = vsel %vm3413, %v3424, %v3426
  %v3428 = vshll.u32 %v3388, 8
  %v3429 = vmul.u32.u64.compose %v3428, %v3427
  %v3430 = vextract.low.u32 %v3429
  %v3431 = vextract.high.u32 %v3429
  %v3432 = vmul.u32.u64.compose %v3428, %v3423
  %v3433 = vextract.low.u32 %v3432
  %v3434 = vextract.high.u32 %v3432
  %v3435 = vmul.u32 %v3428, %v3419
  %v3436 = vadd.s32 %v3431, %v3433
  %vm3437 = vc.u32 %v3431, %v3433
  %v3438 = vadd.s32 %v3434, 1
  %v3439 = vsel %vm3437, %v3438, %v3434
  %v3440 = vadd.s32 %v3435, %v3439
  %v3441 = vadd.s32 %v3440, 536870912
  %v3442 = vshrl.u32 %v3441, 30
  %v3443 = vshll.u32 %v3442, 30
  %v3444 = vsub.s32 %v3440, %v3443
  %vm3445 = vcmp.lt.s32.totalorder %v3444, 0
  %v3446 = vsub.s32 0, %v3444
  %v3447 = vsel %vm3445, %v3446, %v3444
  %v3448 = vclz %v3447
  %v3449 = vsub.s32 %v3448, 2
  %vm3450 = vcmp.gt.s32.totalorder 0, %v3449
  %v3451 = vsel %vm3450, 0, %v3449
  %v3452 = vsub.s32 32, %v3451
  %v3453 = vshll.u32 %v3444, %v3451
  %v3454 = vshrl.u32 %v3436, %v3452
  %v3455 = vor.u32 %v3453, %v3454
  %v3456 = vsub.s32 4294967266, %v3451
  %v3457 = vadd.s32 %v3456, 127
  %v3458 = vshll.u32 %v3457, 23
  %v3459 = vor.u32 4788187, %v3458
  %v3460 = vand.u32 2147483647, %v3459
  %v3462 = vcvt.s32.f32 %v3455
  %v3463 = vmul.f32 %v3462, %v3460
  %v3464 = vxor.u32 %v3463, 2147483648
  %v3465 = vsel %vm3382, %v3464, %v3463
  %v3466 = vsub.s32 4, %v3442
  %v3467 = vsel %vm3382, %v3466, %v3442
  %v3468 = vsel %vm3381, %v1916, %v3465
  %v3469 = vsel %vm3381, 0, %v3467
  %v3470 = vcosq.f32.pop %v3468
  %v3471 = vsinq.f32.pop %v3468
  %vm3472 = vweird.f32 %v1916
  %v3473 = vadd.s32 %v3469, 3
  %v3474 = vand.u32 %v3473, 3
  %vm3475 = vcmp.lt.s32.totalorder %v3474, 2
  %vm3476 = vcmp.eq.s32.totalorder %v3474, 0
  %v3477 = vxor.u32 %v3471, 2147483648
  %v3478 = vsel %vm3476, %v3470, %v3477
  %vm3479 = vcmp.eq.s32.totalorder %v3474, 2
  %v3480 = vxor.u32 %v3470, 2147483648
  %v3481 = vsel %vm3479, %v3480, %v3471
  %v3482 = vsel %vm3475, %v3478, %v3481
  %v3483 = vsel %vm3472, nan, %v3482
  %v3484 = vand.u32 2147483647, %v1921
  %vm3485 = vcmp.le.f32.partialorder %v3484, 0.7853982
  %vm3486 = vcmp.lt.s32.totalorder %v1921, 0
  %v3487 = vand.u32 %v1921, 2139095040
  %v3488 = vshrl.u32 %v3487, 23
  %v3489 = vsub.s32 %v3488, 127
  %v3490 = vand.u32 2147483647, %v1921
  %v3491 = vand.u32 %v3490, 8388607
  %v3492 = vor.u32 %v3491, 8388608
  %v3493 = vsub.s32 0, %v3492
  %v3494 = vadd.s32 %v3489, 1
  %vm3495 = vcmp.gt.s32.totalorder %v3494, 0
  %v3496 = vsel %vm3495, %v3494, 0
  %v3497 = vshrl.u32 %v3496, 5
  %v3498 = vand.u32 %v3496, 31
  %v3499 = vsub.s32 32, %v3498
  %v3500 = vshrl.u32 683565275, %v3499
  %v3501 = vshll.u32 683565275, %v3498
  %v3502 = vshrl.u32 2475754826, %v3499
  %v3503 = vor.u32 %v3501, %v3502
  %v3504 = vshll.u32 2475754826, %v3498
  %v3505 = vshrl.u32 2131351028, %v3499
  %v3506 = vor.u32 %v3504, %v3505
  %v3507 = vshll.u32 2131351028, %v3498
  %v3508 = vshrl.u32 2102212464, %v3499
  %v3509 = vor.u32 %v3507, %v3508
  %v3510 = vshll.u32 2102212464, %v3498
  %v3511 = vshrl.u32 920167782, %v3499
  %v3512 = vor.u32 %v3510, %v3511
  %v3513 = vshll.u32 920167782, %v3498
  %v3514 = vshrl.u32 1326507024, %v3499
  %v3515 = vor.u32 %v3513, %v3514
  %vm3516 = vcmp.lt.s32.totalorder %v3497, 1
  %vm3517 = vcmp.lt.s32.totalorder %v3497, 2
  %vm3518 = vcmp.lt.s32.totalorder %v3497, 3
  %vm3519 = vcmp.lt.s32.totalorder %v3497, 4
  %v3520 = vsel %vm3516, %v3500, %v3503
  %v3521 = vsel %vm3519, %v3509, 2102212464
  %v3522 = vsel %vm3518, %v3506, %v3521
  %v3523 = vsel %vm3517, %v3520, %v3522
  %v3524 = vsel %vm3516, %v3503, %v3506
  %v3525 = vsel %vm3519, %v3512, 920167782
  %v3526 = vsel %vm3518, %v3509, %v3525
  %v3527 = vsel %vm3517, %v3524, %v3526
  %v3528 = vsel %vm3516, %v3506, %v3509
  %v3529 = vsel %vm3519, %v3515, 1326507024
  %v3530 = vsel %vm3518, %v3512, %v3529
  %v3531 = vsel %vm3517, %v3528, %v3530
  %v3532 = vshll.u32 %v3492, 8
  %v3533 = vmul.u32.u64.compose %v3532, %v3531
  %v3534 = vextract.low.u32 %v3533
  %v3535 = vextract.high.u32 %v3533
  %v3536 = vmul.u32.u64.compose %v3532, %v3527
  %v3537 = vextract.low.u32 %v3536
  %v3538 = vextract.high.u32 %v3536
  %v3539 = vmul.u32 %v3532, %v3523
  %v3540 = vadd.s32 %v3535, %v3537
  %vm3541 = vc.u32 %v3535, %v3537
  %v3542 = vadd.s32 %v3538, 1
  %v3543 = vsel %vm3541, %v3542, %v3538
  %v3544 = vadd.s32 %v3539, %v3543
  %v3545 = vadd.s32 %v3544, 536870912
  %v3546 = vshrl.u32 %v3545, 30
  %v3547 = vshll.u32 %v3546, 30
  %v3548 = vsub.s32 %v3544, %v3547
  %vm3549 = vcmp.lt.s32.totalorder %v3548, 0
  %v3550 = vsub.s32 0, %v3548
  %v3551 = vsel %vm3549, %v3550, %v3548
  %v3552 = vclz %v3551
  %v3553 = vsub.s32 %v3552, 2
  %vm3554 = vcmp.gt.s32.totalorder 0, %v3553
  %v3555 = vsel %vm3554, 0, %v3553
  %v3556 = vsub.s32 32, %v3555
  %v3557 = vshll.u32 %v3548, %v3555
  %v3558 = vshrl.u32 %v3540, %v3556
  %v3559 = vor.u32 %v3557, %v3558
  %v3560 = vsub.s32 4294967266, %v3555
  %v3561 = vadd.s32 %v3560, 127
  %v3562 = vshll.u32 %v3561, 23
  %v3563 = vor.u32 4788187, %v3562
  %v3564 = vand.u32 2147483647, %v3563
  %v3566 = vcvt.s32.f32 %v3559
  %v3567 = vmul.f32 %v3566, %v3564
  %v3568 = vxor.u32 %v3567, 2147483648
  %v3569 = vsel %vm3486, %v3568, %v3567
  %v3570 = vsub.s32 4, %v3546
  %v3571 = vsel %vm3486, %v3570, %v3546
  %v3572 = vsel %vm3485, %v1921, %v3569
  %v3573 = vsel %vm3485, 0, %v3571
  %v3574 = vcosq.f32.pop %v3572
  %v3575 = vsinq.f32.pop %v3572
  %vm3576 = vweird.f32 %v1921
  %v3577 = vadd.s32 %v3573, 3
  %v3578 = vand.u32 %v3577, 3
  %vm3579 = vcmp.lt.s32.totalorder %v3578, 2
  %vm3580 = vcmp.eq.s32.totalorder %v3578, 0
  %v3581 = vxor.u32 %v3575, 2147483648
  %v3582 = vsel %vm3580, %v3574, %v3581
  %vm3583 = vcmp.eq.s32.totalorder %v3578, 2
  %v3584 = vxor.u32 %v3574, 2147483648
  %v3585 = vsel %vm3583, %v3584, %v3575
  %v3586 = vsel %vm3579, %v3582, %v3585
  %v3587 = vsel %vm3576, nan, %v3586
  %v3588 = vmul.f32 %v2027, %v2027
  %v3589 = vmul.f32 %v2131, %v2131
  %v3590 = vmul.f32 %v2235, %v2235
  %v3591 = vmul.f32 %v2339, %v2339
  %v3592 = vmul.f32 %v2443, %v2443
  %v3593 = vmul.f32 %v2547, %v2547
  %v3594 = vmul.f32 %v2651, %v2651
  %v3595 = vmul.f32 %v2755, %v2755
  %v3596 = vmul.f32 %v2859, %v2859
  %v3597 = vmul.f32 %v2963, %v2963
  %v3598 = vmul.f32 %v3067, %v3067
  %v3599 = vmul.f32 %v3171, %v3171
  %v3600 = vmul.f32 %v3275, %v3275
  %v3601 = vmul.f32 %v3379, %v3379
  %v3602 = vmul.f32 %v3483, %v3483
  %v3603 = vmul.f32 %v3587, %v3587
  %v3604 = vadd.f32 %v1846, %v3588
  %v3605 = vadd.f32 %v1851, %v3589
  %v3606 = vadd.f32 %v1856, %v3590
  %v3607 = vadd.f32 %v1861, %v3591
  %v3608 = vadd.f32 %v1866, %v3592
  %v3609 = vadd.f32 %v1871, %v3593
  %v3610 = vadd.f32 %v1876, %v3594
  %v3611 = vadd.f32 %v1881, %v3595
  %v3612 = vadd.f32 %v1886, %v3596
  %v3613 = vadd.f32 %v1891, %v3597
  %v3614 = vadd.f32 %v1896, %v3598
  %v3615 = vadd.f32 %v1901, %v3599
  %v3616 = vadd.f32 %v1906, %v3600
  %v3617 = vadd.f32 %v1911, %v3601
  %v3618 = vadd.f32 %v1916, %v3602
  %v3619 = vadd.f32 %v1921, %v3603
  %v3620 = vld [vmem:[%s4] sm:$0xff]
  %v3621 = vld [vmem:[%s4 + $0x8] sm:$0xff]
  %v3622 = vld [vmem:[%s4 + $0x10] sm:$0xff]
  %v3623 = vld [vmem:[%s4 + $0x18] sm:$0xff]
  %v3624 = vld [vmem:[%s4 + $0x20] sm:$0xff]
  %v3625 = vld [vmem:[%s4 + $0x28] sm:$0xff]
  %v3626 = vld [vmem:[%s4 + $0x30] sm:$0xff]
  %v3627 = vld [vmem:[%s4 + $0x38] sm:$0xff]
  %v3628 = vld [vmem:[%s7 + $0xe0] sm:$0xff]
  %v3629 = vld [vmem:[%s7 + $0xe8] sm:$0xff]
  %v3630 = vld [vmem:[%s7 + $0xf0] sm:$0xff]
  %v3631 = vld [vmem:[%s7 + $0xf8] sm:$0xff]
  %v3632 = vld [vmem:[%s7 + $0x100] sm:$0xff]
  %v3633 = vld [vmem:[%s7 + $0x108] sm:$0xff]
  %v3634 = vld [vmem:[%s7 + $0x110] sm:$0xff]
  %v3635 = vld [vmem:[%s7 + $0x118] sm:$0xff]
  %3637 = vset.pattern.permute.xlu0 0
  %3638 = vperm.xlu0 %3637, %v3628
  %v3639 = vpop.permute.xlu0 %3638
  %3642 = vset.pattern.permute.xlu0 0
  %3643 = vperm.xlu0 %3642, %v3629
  %v3644 = vpop.permute.xlu0 %3643
  %3647 = vset.pattern.permute.xlu0 0
  %3648 = vperm.xlu0 %3647, %v3630
  %v3649 = vpop.permute.xlu0 %3648
  %3652 = vset.pattern.permute.xlu0 0
  %3653 = vperm.xlu0 %3652, %v3631
  %v3654 = vpop.permute.xlu0 %3653
  %3657 = vset.pattern.permute.xlu0 0
  %3658 = vperm.xlu0 %3657, %v3632
  %v3659 = vpop.permute.xlu0 %3658
  %3662 = vset.pattern.permute.xlu0 0
  %3663 = vperm.xlu0 %3662, %v3633
  %v3664 = vpop.permute.xlu0 %3663
  %3667 = vset.pattern.permute.xlu0 0
  %3668 = vperm.xlu0 %3667, %v3634
  %v3669 = vpop.permute.xlu0 %3668
  %3672 = vset.pattern.permute.xlu0 0
  %3673 = vperm.xlu0 %3672, %v3635
  %v3674 = vpop.permute.xlu0 %3673
  %3676 = vmatprep.subr.mxu0 0.0
  %3677 = vmatpush1.msra.mxu0 %v3619
  %3678 = vmatprep.subr.mxu0 0.0
  %3679 = vmatpush1.msra.mxu0 %v3618
  %3680 = vmatprep.subr.mxu0 0.0
  %3681 = vmatpush1.msra.mxu0 %v3617
  %3682 = vmatprep.subr.mxu0 0.0
  %3683 = vmatpush1.msra.mxu0 %v3616
  %3684 = vmatprep.subr.mxu0 0.0
  %3685 = vmatpush1.msra.mxu0 %v3615
  %3686 = vmatprep.subr.mxu0 0.0
  %3687 = vmatpush1.msra.mxu0 %v3614
  %3688 = vmatprep.subr.mxu0 0.0
  %3689 = vmatpush1.msra.mxu0 %v3613
  %3690 = vmatprep.subr.mxu0 0.0
  %3691 = vmatpush1.msra.mxu0 %v3612
  %3692 = vmatprep.subr.mxu0 0.0
  %3693 = vmatpush1.msra.mxu0 %v3611
  %3694 = vmatprep.subr.mxu0 0.0
  %3695 = vmatpush1.msra.mxu0 %v3610
  %3696 = vmatprep.subr.mxu0 0.0
  %3697 = vmatpush1.msra.mxu0 %v3609
  %3698 = vmatprep.subr.mxu0 0.0
  %3699 = vmatpush1.msra.mxu0 %v3608
  %3700 = vmatprep.subr.mxu0 0.0
  %3701 = vmatpush1.msra.mxu0 %v3607
  %3702 = vmatprep.subr.mxu0 0.0
  %3703 = vmatpush1.msra.mxu0 %v3606
  %3704 = vmatprep.subr.mxu0 0.0
  %3705 = vmatpush1.msra.mxu0 %v3605
  %3706 = vmatprep.subr.mxu0 0.0
  %3707 = vmatpush1.msra.mxu0 %v3604
  %3708 = vmatprep.subr.mxu0 0.0
  %3709 = vmatpush2.msra.mxu0 0.0
  %3710 = vmatprep.subr.mxu0 0.0
  %3711 = vmatpush2.msra.mxu0 0.0
  %3712 = vmatprep.subr.mxu0 0.0
  %3713 = vmatpush2.msra.mxu0 0.0
  %3714 = vmatprep.subr.mxu0 0.0
  %3715 = vmatpush2.msra.mxu0 0.0
  %3716 = vmatprep.subr.mxu0 0.0
  %3717 = vmatpush2.msra.mxu0 0.0
  %3718 = vmatprep.subr.mxu0 0.0
  %3719 = vmatpush2.msra.mxu0 0.0
  %3720 = vmatprep.subr.mxu0 0.0
  %3721 = vmatpush2.msra.mxu0 0.0
  %3722 = vmatprep.subr.mxu0 0.0
  %3723 = vmatpush2.msra.mxu0 0.0
  %3724 = vmatprep.subr.mxu0 0.0
  %3725 = vmatpush2.msra.mxu0 0.0
  %3726 = vmatprep.subr.mxu0 0.0
  %3727 = vmatpush2.msra.mxu0 0.0
  %3728 = vmatprep.subr.mxu0 0.0
  %3729 = vmatpush2.msra.mxu0 0.0
  %3730 = vmatprep.subr.mxu0 0.0
  %3731 = vmatpush2.msra.mxu0 0.0
  %3732 = vmatprep.subr.mxu0 0.0
  %3733 = vmatpush2.msra.mxu0 0.0
  %3734 = vmatprep.subr.mxu0 0.0
  %3735 = vmatpush2.msra.mxu0 0.0
  %3736 = vmatprep.subr.mxu0 0.0
  %3737 = vmatpush2.msra.mxu0 0.0
  %3738 = vmatprep.subr.mxu0 0.0
  %3739 = vmatpush2.msra.mxu0 0.0
  %3740 = vmatprep.mubr.f32.mxu0 0.0
  %3741 = vmatmul.mubr.f32.gmra.mxu0 %v3620
  %v3742 = vpop.f32.mrf.mxu0
  %v3743 = vadd.f32 %v3639, %v3742
  %v3744 = vpop.f32.mrf.mxu0
  %3745 = vmatprep.mubr.f32.mxu0 0.0
  %3746 = vmatmul.mubr.f32.gmra.mxu0 %v3621
  %v3747 = vpop.f32.mrf.mxu0
  %v3748 = vadd.f32 %v3644, %v3747
  %v3749 = vpop.f32.mrf.mxu0
  %3750 = vmatprep.mubr.f32.mxu0 0.0
  %3751 = vmatmul.mubr.f32.gmra.mxu0 %v3622
  %v3752 = vpop.f32.mrf.mxu0
  %v3753 = vadd.f32 %v3649, %v3752
  %v3754 = vpop.f32.mrf.mxu0
  %3755 = vmatprep.mubr.f32.mxu0 0.0
  %3756 = vmatmul.mubr.f32.gmra.mxu0 %v3623
  %v3757 = vpop.f32.mrf.mxu0
  %v3758 = vadd.f32 %v3654, %v3757
  %v3759 = vpop.f32.mrf.mxu0
  %3760 = vmatprep.mubr.f32.mxu0 0.0
  %3761 = vmatmul.mubr.f32.gmra.mxu0 %v3624
  %v3762 = vpop.f32.mrf.mxu0
  %v3763 = vadd.f32 %v3659, %v3762
  %v3764 = vpop.f32.mrf.mxu0
  %3765 = vmatprep.mubr.f32.mxu0 0.0
  %3766 = vmatmul.mubr.f32.gmra.mxu0 %v3625
  %v3767 = vpop.f32.mrf.mxu0
  %v3768 = vadd.f32 %v3664, %v3767
  %v3769 = vpop.f32.mrf.mxu0
  %3770 = vmatprep.mubr.f32.mxu0 0.0
  %3771 = vmatmul.mubr.f32.gmra.mxu0 %v3626
  %v3772 = vpop.f32.mrf.mxu0
  %v3773 = vadd.f32 %v3669, %v3772
  %v3774 = vpop.f32.mrf.mxu0
  %3775 = vmatprep.mubr.f32.mxu0 0.0
  %3776 = vmatmul.mubr.f32.gmra.mxu0 %v3627
  %v3777 = vpop.f32.mrf.mxu0
  %v3778 = vadd.f32 %v3674, %v3777
  %v3779 = vpop.f32.mrf.mxu0
  %3780 = vdwg.mxu0
  %v3781 = vand.u32 2147483647, %v3743
  %vm3782 = vcmp.le.f32.partialorder %v3781, 0.7853982
  %vm3783 = vcmp.lt.s32.totalorder %v3743, 0
  %v3784 = vand.u32 %v3743, 2139095040
  %v3785 = vshrl.u32 %v3784, 23
  %v3786 = vsub.s32 %v3785, 127
  %v3787 = vand.u32 2147483647, %v3743
  %v3788 = vand.u32 %v3787, 8388607
  %v3789 = vor.u32 %v3788, 8388608
  %v3790 = vsub.s32 0, %v3789
  %v3791 = vadd.s32 %v3786, 1
  %vm3792 = vcmp.gt.s32.totalorder %v3791, 0
  %v3793 = vsel %vm3792, %v3791, 0
  %v3794 = vshrl.u32 %v3793, 5
  %v3795 = vand.u32 %v3793, 31
  %v3796 = vsub.s32 32, %v3795
  %v3797 = vshrl.u32 683565275, %v3796
  %v3798 = vshll.u32 683565275, %v3795
  %v3799 = vshrl.u32 2475754826, %v3796
  %v3800 = vor.u32 %v3798, %v3799
  %v3801 = vshll.u32 2475754826, %v3795
  %v3802 = vshrl.u32 2131351028, %v3796
  %v3803 = vor.u32 %v3801, %v3802
  %v3804 = vshll.u32 2131351028, %v3795
  %v3805 = vshrl.u32 2102212464, %v3796
  %v3806 = vor.u32 %v3804, %v3805
  %v3807 = vshll.u32 2102212464, %v3795
  %v3808 = vshrl.u32 920167782, %v3796
  %v3809 = vor.u32 %v3807, %v3808
  %v3810 = vshll.u32 920167782, %v3795
  %v3811 = vshrl.u32 1326507024, %v3796
  %v3812 = vor.u32 %v3810, %v3811
  %vm3813 = vcmp.lt.s32.totalorder %v3794, 1
  %vm3814 = vcmp.lt.s32.totalorder %v3794, 2
  %vm3815 = vcmp.lt.s32.totalorder %v3794, 3
  %vm3816 = vcmp.lt.s32.totalorder %v3794, 4
  %v3817 = vsel %vm3813, %v3797, %v3800
  %v3818 = vsel %vm3816, %v3806, 2102212464
  %v3819 = vsel %vm3815, %v3803, %v3818
  %v3820 = vsel %vm3814, %v3817, %v3819
  %v3821 = vsel %vm3813, %v3800, %v3803
  %v3822 = vsel %vm3816, %v3809, 920167782
  %v3823 = vsel %vm3815, %v3806, %v3822
  %v3824 = vsel %vm3814, %v3821, %v3823
  %v3825 = vsel %vm3813, %v3803, %v3806
  %v3826 = vsel %vm3816, %v3812, 1326507024
  %v3827 = vsel %vm3815, %v3809, %v3826
  %v3828 = vsel %vm3814, %v3825, %v3827
  %v3829 = vshll.u32 %v3789, 8
  %v3830 = vmul.u32.u64.compose %v3829, %v3828
  %v3831 = vextract.low.u32 %v3830
  %v3832 = vextract.high.u32 %v3830
  %v3833 = vmul.u32.u64.compose %v3829, %v3824
  %v3834 = vextract.low.u32 %v3833
  %v3835 = vextract.high.u32 %v3833
  %v3836 = vmul.u32 %v3829, %v3820
  %v3837 = vadd.s32 %v3832, %v3834
  %vm3838 = vc.u32 %v3832, %v3834
  %v3839 = vadd.s32 %v3835, 1
  %v3840 = vsel %vm3838, %v3839, %v3835
  %v3841 = vadd.s32 %v3836, %v3840
  %v3842 = vadd.s32 %v3841, 536870912
  %v3843 = vshrl.u32 %v3842, 30
  %v3844 = vshll.u32 %v3843, 30
  %v3845 = vsub.s32 %v3841, %v3844
  %vm3846 = vcmp.lt.s32.totalorder %v3845, 0
  %v3847 = vsub.s32 0, %v3845
  %v3848 = vsel %vm3846, %v3847, %v3845
  %v3849 = vclz %v3848
  %v3850 = vsub.s32 %v3849, 2
  %vm3851 = vcmp.gt.s32.totalorder 0, %v3850
  %v3852 = vsel %vm3851, 0, %v3850
  %v3853 = vsub.s32 32, %v3852
  %v3854 = vshll.u32 %v3845, %v3852
  %v3855 = vshrl.u32 %v3837, %v3853
  %v3856 = vor.u32 %v3854, %v3855
  %v3857 = vsub.s32 4294967266, %v3852
  %v3858 = vadd.s32 %v3857, 127
  %v3859 = vshll.u32 %v3858, 23
  %v3860 = vor.u32 4788187, %v3859
  %v3861 = vand.u32 2147483647, %v3860
  %v3863 = vcvt.s32.f32 %v3856
  %v3864 = vmul.f32 %v3863, %v3861
  %v3865 = vxor.u32 %v3864, 2147483648
  %v3866 = vsel %vm3783, %v3865, %v3864
  %v3867 = vsub.s32 4, %v3843
  %v3868 = vsel %vm3783, %v3867, %v3843
  %v3869 = vsel %vm3782, %v3743, %v3866
  %v3870 = vsel %vm3782, 0, %v3868
  %v3871 = vcosq.f32.pop %v3869
  %v3872 = vsinq.f32.pop %v3869
  %vm3873 = vweird.f32 %v3743
  %v3874 = vadd.s32 %v3870, 3
  %v3875 = vand.u32 %v3874, 3
  %vm3876 = vcmp.lt.s32.totalorder %v3875, 2
  %vm3877 = vcmp.eq.s32.totalorder %v3875, 0
  %v3878 = vxor.u32 %v3872, 2147483648
  %v3879 = vsel %vm3877, %v3871, %v3878
  %vm3880 = vcmp.eq.s32.totalorder %v3875, 2
  %v3881 = vxor.u32 %v3871, 2147483648
  %v3882 = vsel %vm3880, %v3881, %v3872
  %v3883 = vsel %vm3876, %v3879, %v3882
  %v3884 = vsel %vm3873, nan, %v3883
  %v3885 = vand.u32 2147483647, %v3748
  %vm3886 = vcmp.le.f32.partialorder %v3885, 0.7853982
  %vm3887 = vcmp.lt.s32.totalorder %v3748, 0
  %v3888 = vand.u32 %v3748, 2139095040
  %v3889 = vshrl.u32 %v3888, 23
  %v3890 = vsub.s32 %v3889, 127
  %v3891 = vand.u32 2147483647, %v3748
  %v3892 = vand.u32 %v3891, 8388607
  %v3893 = vor.u32 %v3892, 8388608
  %v3894 = vsub.s32 0, %v3893
  %v3895 = vadd.s32 %v3890, 1
  %vm3896 = vcmp.gt.s32.totalorder %v3895, 0
  %v3897 = vsel %vm3896, %v3895, 0
  %v3898 = vshrl.u32 %v3897, 5
  %v3899 = vand.u32 %v3897, 31
  %v3900 = vsub.s32 32, %v3899
  %v3901 = vshrl.u32 683565275, %v3900
  %v3902 = vshll.u32 683565275, %v3899
  %v3903 = vshrl.u32 2475754826, %v3900
  %v3904 = vor.u32 %v3902, %v3903
  %v3905 = vshll.u32 2475754826, %v3899
  %v3906 = vshrl.u32 2131351028, %v3900
  %v3907 = vor.u32 %v3905, %v3906
  %v3908 = vshll.u32 2131351028, %v3899
  %v3909 = vshrl.u32 2102212464, %v3900
  %v3910 = vor.u32 %v3908, %v3909
  %v3911 = vshll.u32 2102212464, %v3899
  %v3912 = vshrl.u32 920167782, %v3900
  %v3913 = vor.u32 %v3911, %v3912
  %v3914 = vshll.u32 920167782, %v3899
  %v3915 = vshrl.u32 1326507024, %v3900
  %v3916 = vor.u32 %v3914, %v3915
  %vm3917 = vcmp.lt.s32.totalorder %v3898, 1
  %vm3918 = vcmp.lt.s32.totalorder %v3898, 2
  %vm3919 = vcmp.lt.s32.totalorder %v3898, 3
  %vm3920 = vcmp.lt.s32.totalorder %v3898, 4
  %v3921 = vsel %vm3917, %v3901, %v3904
  %v3922 = vsel %vm3920, %v3910, 2102212464
  %v3923 = vsel %vm3919, %v3907, %v3922
  %v3924 = vsel %vm3918, %v3921, %v3923
  %v3925 = vsel %vm3917, %v3904, %v3907
  %v3926 = vsel %vm3920, %v3913, 920167782
  %v3927 = vsel %vm3919, %v3910, %v3926
  %v3928 = vsel %vm3918, %v3925, %v3927
  %v3929 = vsel %vm3917, %v3907, %v3910
  %v3930 = vsel %vm3920, %v3916, 1326507024
  %v3931 = vsel %vm3919, %v3913, %v3930
  %v3932 = vsel %vm3918, %v3929, %v3931
  %v3933 = vshll.u32 %v3893, 8
  %v3934 = vmul.u32.u64.compose %v3933, %v3932
  %v3935 = vextract.low.u32 %v3934
  %v3936 = vextract.high.u32 %v3934
  %v3937 = vmul.u32.u64.compose %v3933, %v3928
  %v3938 = vextract.low.u32 %v3937
  %v3939 = vextract.high.u32 %v3937
  %v3940 = vmul.u32 %v3933, %v3924
  %v3941 = vadd.s32 %v3936, %v3938
  %vm3942 = vc.u32 %v3936, %v3938
  %v3943 = vadd.s32 %v3939, 1
  %v3944 = vsel %vm3942, %v3943, %v3939
  %v3945 = vadd.s32 %v3940, %v3944
  %v3946 = vadd.s32 %v3945, 536870912
  %v3947 = vshrl.u32 %v3946, 30
  %v3948 = vshll.u32 %v3947, 30
  %v3949 = vsub.s32 %v3945, %v3948
  %vm3950 = vcmp.lt.s32.totalorder %v3949, 0
  %v3951 = vsub.s32 0, %v3949
  %v3952 = vsel %vm3950, %v3951, %v3949
  %v3953 = vclz %v3952
  %v3954 = vsub.s32 %v3953, 2
  %vm3955 = vcmp.gt.s32.totalorder 0, %v3954
  %v3956 = vsel %vm3955, 0, %v3954
  %v3957 = vsub.s32 32, %v3956
  %v3958 = vshll.u32 %v3949, %v3956
  %v3959 = vshrl.u32 %v3941, %v3957
  %v3960 = vor.u32 %v3958, %v3959
  %v3961 = vsub.s32 4294967266, %v3956
  %v3962 = vadd.s32 %v3961, 127
  %v3963 = vshll.u32 %v3962, 23
  %v3964 = vor.u32 4788187, %v3963
  %v3965 = vand.u32 2147483647, %v3964
  %v3967 = vcvt.s32.f32 %v3960
  %v3968 = vmul.f32 %v3967, %v3965
  %v3969 = vxor.u32 %v3968, 2147483648
  %v3970 = vsel %vm3887, %v3969, %v3968
  %v3971 = vsub.s32 4, %v3947
  %v3972 = vsel %vm3887, %v3971, %v3947
  %v3973 = vsel %vm3886, %v3748, %v3970
  %v3974 = vsel %vm3886, 0, %v3972
  %v3975 = vcosq.f32.pop %v3973
  %v3976 = vsinq.f32.pop %v3973
  %vm3977 = vweird.f32 %v3748
  %v3978 = vadd.s32 %v3974, 3
  %v3979 = vand.u32 %v3978, 3
  %vm3980 = vcmp.lt.s32.totalorder %v3979, 2
  %vm3981 = vcmp.eq.s32.totalorder %v3979, 0
  %v3982 = vxor.u32 %v3976, 2147483648
  %v3983 = vsel %vm3981, %v3975, %v3982
  %vm3984 = vcmp.eq.s32.totalorder %v3979, 2
  %v3985 = vxor.u32 %v3975, 2147483648
  %v3986 = vsel %vm3984, %v3985, %v3976
  %v3987 = vsel %vm3980, %v3983, %v3986
  %v3988 = vsel %vm3977, nan, %v3987
  %v3989 = vand.u32 2147483647, %v3753
  %vm3990 = vcmp.le.f32.partialorder %v3989, 0.7853982
  %vm3991 = vcmp.lt.s32.totalorder %v3753, 0
  %v3992 = vand.u32 %v3753, 2139095040
  %v3993 = vshrl.u32 %v3992, 23
  %v3994 = vsub.s32 %v3993, 127
  %v3995 = vand.u32 2147483647, %v3753
  %v3996 = vand.u32 %v3995, 8388607
  %v3997 = vor.u32 %v3996, 8388608
  %v3998 = vsub.s32 0, %v3997
  %v3999 = vadd.s32 %v3994, 1
  %vm4000 = vcmp.gt.s32.totalorder %v3999, 0
  %v4001 = vsel %vm4000, %v3999, 0
  %v4002 = vshrl.u32 %v4001, 5
  %v4003 = vand.u32 %v4001, 31
  %v4004 = vsub.s32 32, %v4003
  %v4005 = vshrl.u32 683565275, %v4004
  %v4006 = vshll.u32 683565275, %v4003
  %v4007 = vshrl.u32 2475754826, %v4004
  %v4008 = vor.u32 %v4006, %v4007
  %v4009 = vshll.u32 2475754826, %v4003
  %v4010 = vshrl.u32 2131351028, %v4004
  %v4011 = vor.u32 %v4009, %v4010
  %v4012 = vshll.u32 2131351028, %v4003
  %v4013 = vshrl.u32 2102212464, %v4004
  %v4014 = vor.u32 %v4012, %v4013
  %v4015 = vshll.u32 2102212464, %v4003
  %v4016 = vshrl.u32 920167782, %v4004
  %v4017 = vor.u32 %v4015, %v4016
  %v4018 = vshll.u32 920167782, %v4003
  %v4019 = vshrl.u32 1326507024, %v4004
  %v4020 = vor.u32 %v4018, %v4019
  %vm4021 = vcmp.lt.s32.totalorder %v4002, 1
  %vm4022 = vcmp.lt.s32.totalorder %v4002, 2
  %vm4023 = vcmp.lt.s32.totalorder %v4002, 3
  %vm4024 = vcmp.lt.s32.totalorder %v4002, 4
  %v4025 = vsel %vm4021, %v4005, %v4008
  %v4026 = vsel %vm4024, %v4014, 2102212464
  %v4027 = vsel %vm4023, %v4011, %v4026
  %v4028 = vsel %vm4022, %v4025, %v4027
  %v4029 = vsel %vm4021, %v4008, %v4011
  %v4030 = vsel %vm4024, %v4017, 920167782
  %v4031 = vsel %vm4023, %v4014, %v4030
  %v4032 = vsel %vm4022, %v4029, %v4031
  %v4033 = vsel %vm4021, %v4011, %v4014
  %v4034 = vsel %vm4024, %v4020, 1326507024
  %v4035 = vsel %vm4023, %v4017, %v4034
  %v4036 = vsel %vm4022, %v4033, %v4035
  %v4037 = vshll.u32 %v3997, 8
  %v4038 = vmul.u32.u64.compose %v4037, %v4036
  %v4039 = vextract.low.u32 %v4038
  %v4040 = vextract.high.u32 %v4038
  %v4041 = vmul.u32.u64.compose %v4037, %v4032
  %v4042 = vextract.low.u32 %v4041
  %v4043 = vextract.high.u32 %v4041
  %v4044 = vmul.u32 %v4037, %v4028
  %v4045 = vadd.s32 %v4040, %v4042
  %vm4046 = vc.u32 %v4040, %v4042
  %v4047 = vadd.s32 %v4043, 1
  %v4048 = vsel %vm4046, %v4047, %v4043
  %v4049 = vadd.s32 %v4044, %v4048
  %v4050 = vadd.s32 %v4049, 536870912
  %v4051 = vshrl.u32 %v4050, 30
  %v4052 = vshll.u32 %v4051, 30
  %v4053 = vsub.s32 %v4049, %v4052
  %vm4054 = vcmp.lt.s32.totalorder %v4053, 0
  %v4055 = vsub.s32 0, %v4053
  %v4056 = vsel %vm4054, %v4055, %v4053
  %v4057 = vclz %v4056
  %v4058 = vsub.s32 %v4057, 2
  %vm4059 = vcmp.gt.s32.totalorder 0, %v4058
  %v4060 = vsel %vm4059, 0, %v4058
  %v4061 = vsub.s32 32, %v4060
  %v4062 = vshll.u32 %v4053, %v4060
  %v4063 = vshrl.u32 %v4045, %v4061
  %v4064 = vor.u32 %v4062, %v4063
  %v4065 = vsub.s32 4294967266, %v4060
  %v4066 = vadd.s32 %v4065, 127
  %v4067 = vshll.u32 %v4066, 23
  %v4068 = vor.u32 4788187, %v4067
  %v4069 = vand.u32 2147483647, %v4068
  %v4071 = vcvt.s32.f32 %v4064
  %v4072 = vmul.f32 %v4071, %v4069
  %v4073 = vxor.u32 %v4072, 2147483648
  %v4074 = vsel %vm3991, %v4073, %v4072
  %v4075 = vsub.s32 4, %v4051
  %v4076 = vsel %vm3991, %v4075, %v4051
  %v4077 = vsel %vm3990, %v3753, %v4074
  %v4078 = vsel %vm3990, 0, %v4076
  %v4079 = vcosq.f32.pop %v4077
  %v4080 = vsinq.f32.pop %v4077
  %vm4081 = vweird.f32 %v3753
  %v4082 = vadd.s32 %v4078, 3
  %v4083 = vand.u32 %v4082, 3
  %vm4084 = vcmp.lt.s32.totalorder %v4083, 2
  %vm4085 = vcmp.eq.s32.totalorder %v4083, 0
  %v4086 = vxor.u32 %v4080, 2147483648
  %v4087 = vsel %vm4085, %v4079, %v4086
  %vm4088 = vcmp.eq.s32.totalorder %v4083, 2
  %v4089 = vxor.u32 %v4079, 2147483648
  %v4090 = vsel %vm4088, %v4089, %v4080
  %v4091 = vsel %vm4084, %v4087, %v4090
  %v4092 = vsel %vm4081, nan, %v4091
  %v4093 = vand.u32 2147483647, %v3758
  %vm4094 = vcmp.le.f32.partialorder %v4093, 0.7853982
  %vm4095 = vcmp.lt.s32.totalorder %v3758, 0
  %v4096 = vand.u32 %v3758, 2139095040
  %v4097 = vshrl.u32 %v4096, 23
  %v4098 = vsub.s32 %v4097, 127
  %v4099 = vand.u32 2147483647, %v3758
  %v4100 = vand.u32 %v4099, 8388607
  %v4101 = vor.u32 %v4100, 8388608
  %v4102 = vsub.s32 0, %v4101
  %v4103 = vadd.s32 %v4098, 1
  %vm4104 = vcmp.gt.s32.totalorder %v4103, 0
  %v4105 = vsel %vm4104, %v4103, 0
  %v4106 = vshrl.u32 %v4105, 5
  %v4107 = vand.u32 %v4105, 31
  %v4108 = vsub.s32 32, %v4107
  %v4109 = vshrl.u32 683565275, %v4108
  %v4110 = vshll.u32 683565275, %v4107
  %v4111 = vshrl.u32 2475754826, %v4108
  %v4112 = vor.u32 %v4110, %v4111
  %v4113 = vshll.u32 2475754826, %v4107
  %v4114 = vshrl.u32 2131351028, %v4108
  %v4115 = vor.u32 %v4113, %v4114
  %v4116 = vshll.u32 2131351028, %v4107
  %v4117 = vshrl.u32 2102212464, %v4108
  %v4118 = vor.u32 %v4116, %v4117
  %v4119 = vshll.u32 2102212464, %v4107
  %v4120 = vshrl.u32 920167782, %v4108
  %v4121 = vor.u32 %v4119, %v4120
  %v4122 = vshll.u32 920167782, %v4107
  %v4123 = vshrl.u32 1326507024, %v4108
  %v4124 = vor.u32 %v4122, %v4123
  %vm4125 = vcmp.lt.s32.totalorder %v4106, 1
  %vm4126 = vcmp.lt.s32.totalorder %v4106, 2
  %vm4127 = vcmp.lt.s32.totalorder %v4106, 3
  %vm4128 = vcmp.lt.s32.totalorder %v4106, 4
  %v4129 = vsel %vm4125, %v4109, %v4112
  %v4130 = vsel %vm4128, %v4118, 2102212464
  %v4131 = vsel %vm4127, %v4115, %v4130
  %v4132 = vsel %vm4126, %v4129, %v4131
  %v4133 = vsel %vm4125, %v4112, %v4115
  %v4134 = vsel %vm4128, %v4121, 920167782
  %v4135 = vsel %vm4127, %v4118, %v4134
  %v4136 = vsel %vm4126, %v4133, %v4135
  %v4137 = vsel %vm4125, %v4115, %v4118
  %v4138 = vsel %vm4128, %v4124, 1326507024
  %v4139 = vsel %vm4127, %v4121, %v4138
  %v4140 = vsel %vm4126, %v4137, %v4139
  %v4141 = vshll.u32 %v4101, 8
  %v4142 = vmul.u32.u64.compose %v4141, %v4140
  %v4143 = vextract.low.u32 %v4142
  %v4144 = vextract.high.u32 %v4142
  %v4145 = vmul.u32.u64.compose %v4141, %v4136
  %v4146 = vextract.low.u32 %v4145
  %v4147 = vextract.high.u32 %v4145
  %v4148 = vmul.u32 %v4141, %v4132
  %v4149 = vadd.s32 %v4144, %v4146
  %vm4150 = vc.u32 %v4144, %v4146
  %v4151 = vadd.s32 %v4147, 1
  %v4152 = vsel %vm4150, %v4151, %v4147
  %v4153 = vadd.s32 %v4148, %v4152
  %v4154 = vadd.s32 %v4153, 536870912
  %v4155 = vshrl.u32 %v4154, 30
  %v4156 = vshll.u32 %v4155, 30
  %v4157 = vsub.s32 %v4153, %v4156
  %vm4158 = vcmp.lt.s32.totalorder %v4157, 0
  %v4159 = vsub.s32 0, %v4157
  %v4160 = vsel %vm4158, %v4159, %v4157
  %v4161 = vclz %v4160
  %v4162 = vsub.s32 %v4161, 2
  %vm4163 = vcmp.gt.s32.totalorder 0, %v4162
  %v4164 = vsel %vm4163, 0, %v4162
  %v4165 = vsub.s32 32, %v4164
  %v4166 = vshll.u32 %v4157, %v4164
  %v4167 = vshrl.u32 %v4149, %v4165
  %v4168 = vor.u32 %v4166, %v4167
  %v4169 = vsub.s32 4294967266, %v4164
  %v4170 = vadd.s32 %v4169, 127
  %v4171 = vshll.u32 %v4170, 23
  %v4172 = vor.u32 4788187, %v4171
  %v4173 = vand.u32 2147483647, %v4172
  %v4175 = vcvt.s32.f32 %v4168
  %v4176 = vmul.f32 %v4175, %v4173
  %v4177 = vxor.u32 %v4176, 2147483648
  %v4178 = vsel %vm4095, %v4177, %v4176
  %v4179 = vsub.s32 4, %v4155
  %v4180 = vsel %vm4095, %v4179, %v4155
  %v4181 = vsel %vm4094, %v3758, %v4178
  %v4182 = vsel %vm4094, 0, %v4180
  %v4183 = vcosq.f32.pop %v4181
  %v4184 = vsinq.f32.pop %v4181
  %vm4185 = vweird.f32 %v3758
  %v4186 = vadd.s32 %v4182, 3
  %v4187 = vand.u32 %v4186, 3
  %vm4188 = vcmp.lt.s32.totalorder %v4187, 2
  %vm4189 = vcmp.eq.s32.totalorder %v4187, 0
  %v4190 = vxor.u32 %v4184, 2147483648
  %v4191 = vsel %vm4189, %v4183, %v4190
  %vm4192 = vcmp.eq.s32.totalorder %v4187, 2
  %v4193 = vxor.u32 %v4183, 2147483648
  %v4194 = vsel %vm4192, %v4193, %v4184
  %v4195 = vsel %vm4188, %v4191, %v4194
  %v4196 = vsel %vm4185, nan, %v4195
  %v4197 = vand.u32 2147483647, %v3763
  %vm4198 = vcmp.le.f32.partialorder %v4197, 0.7853982
  %vm4199 = vcmp.lt.s32.totalorder %v3763, 0
  %v4200 = vand.u32 %v3763, 2139095040
  %v4201 = vshrl.u32 %v4200, 23
  %v4202 = vsub.s32 %v4201, 127
  %v4203 = vand.u32 2147483647, %v3763
  %v4204 = vand.u32 %v4203, 8388607
  %v4205 = vor.u32 %v4204, 8388608
  %v4206 = vsub.s32 0, %v4205
  %v4207 = vadd.s32 %v4202, 1
  %vm4208 = vcmp.gt.s32.totalorder %v4207, 0
  %v4209 = vsel %vm4208, %v4207, 0
  %v4210 = vshrl.u32 %v4209, 5
  %v4211 = vand.u32 %v4209, 31
  %v4212 = vsub.s32 32, %v4211
  %v4213 = vshrl.u32 683565275, %v4212
  %v4214 = vshll.u32 683565275, %v4211
  %v4215 = vshrl.u32 2475754826, %v4212
  %v4216 = vor.u32 %v4214, %v4215
  %v4217 = vshll.u32 2475754826, %v4211
  %v4218 = vshrl.u32 2131351028, %v4212
  %v4219 = vor.u32 %v4217, %v4218
  %v4220 = vshll.u32 2131351028, %v4211
  %v4221 = vshrl.u32 2102212464, %v4212
  %v4222 = vor.u32 %v4220, %v4221
  %v4223 = vshll.u32 2102212464, %v4211
  %v4224 = vshrl.u32 920167782, %v4212
  %v4225 = vor.u32 %v4223, %v4224
  %v4226 = vshll.u32 920167782, %v4211
  %v4227 = vshrl.u32 1326507024, %v4212
  %v4228 = vor.u32 %v4226, %v4227
  %vm4229 = vcmp.lt.s32.totalorder %v4210, 1
  %vm4230 = vcmp.lt.s32.totalorder %v4210, 2
  %vm4231 = vcmp.lt.s32.totalorder %v4210, 3
  %vm4232 = vcmp.lt.s32.totalorder %v4210, 4
  %v4233 = vsel %vm4229, %v4213, %v4216
  %v4234 = vsel %vm4232, %v4222, 2102212464
  %v4235 = vsel %vm4231, %v4219, %v4234
  %v4236 = vsel %vm4230, %v4233, %v4235
  %v4237 = vsel %vm4229, %v4216, %v4219
  %v4238 = vsel %vm4232, %v4225, 920167782
  %v4239 = vsel %vm4231, %v4222, %v4238
  %v4240 = vsel %vm4230, %v4237, %v4239
  %v4241 = vsel %vm4229, %v4219, %v4222
  %v4242 = vsel %vm4232, %v4228, 1326507024
  %v4243 = vsel %vm4231, %v4225, %v4242
  %v4244 = vsel %vm4230, %v4241, %v4243
  %v4245 = vshll.u32 %v4205, 8
  %v4246 = vmul.u32.u64.compose %v4245, %v4244
  %v4247 = vextract.low.u32 %v4246
  %v4248 = vextract.high.u32 %v4246
  %v4249 = vmul.u32.u64.compose %v4245, %v4240
  %v4250 = vextract.low.u32 %v4249
  %v4251 = vextract.high.u32 %v4249
  %v4252 = vmul.u32 %v4245, %v4236
  %v4253 = vadd.s32 %v4248, %v4250
  %vm4254 = vc.u32 %v4248, %v4250
  %v4255 = vadd.s32 %v4251, 1
  %v4256 = vsel %vm4254, %v4255, %v4251
  %v4257 = vadd.s32 %v4252, %v4256
  %v4258 = vadd.s32 %v4257, 536870912
  %v4259 = vshrl.u32 %v4258, 30
  %v4260 = vshll.u32 %v4259, 30
  %v4261 = vsub.s32 %v4257, %v4260
  %vm4262 = vcmp.lt.s32.totalorder %v4261, 0
  %v4263 = vsub.s32 0, %v4261
  %v4264 = vsel %vm4262, %v4263, %v4261
  %v4265 = vclz %v4264
  %v4266 = vsub.s32 %v4265, 2
  %vm4267 = vcmp.gt.s32.totalorder 0, %v4266
  %v4268 = vsel %vm4267, 0, %v4266
  %v4269 = vsub.s32 32, %v4268
  %v4270 = vshll.u32 %v4261, %v4268
  %v4271 = vshrl.u32 %v4253, %v4269
  %v4272 = vor.u32 %v4270, %v4271
  %v4273 = vsub.s32 4294967266, %v4268
  %v4274 = vadd.s32 %v4273, 127
  %v4275 = vshll.u32 %v4274, 23
  %v4276 = vor.u32 4788187, %v4275
  %v4277 = vand.u32 2147483647, %v4276
  %v4279 = vcvt.s32.f32 %v4272
  %v4280 = vmul.f32 %v4279, %v4277
  %v4281 = vxor.u32 %v4280, 2147483648
  %v4282 = vsel %vm4199, %v4281, %v4280
  %v4283 = vsub.s32 4, %v4259
  %v4284 = vsel %vm4199, %v4283, %v4259
  %v4285 = vsel %vm4198, %v3763, %v4282
  %v4286 = vsel %vm4198, 0, %v4284
  %v4287 = vcosq.f32.pop %v4285
  %v4288 = vsinq.f32.pop %v4285
  %vm4289 = vweird.f32 %v3763
  %v4290 = vadd.s32 %v4286, 3
  %v4291 = vand.u32 %v4290, 3
  %vm4292 = vcmp.lt.s32.totalorder %v4291, 2
  %vm4293 = vcmp.eq.s32.totalorder %v4291, 0
  %v4294 = vxor.u32 %v4288, 2147483648
  %v4295 = vsel %vm4293, %v4287, %v4294
  %vm4296 = vcmp.eq.s32.totalorder %v4291, 2
  %v4297 = vxor.u32 %v4287, 2147483648
  %v4298 = vsel %vm4296, %v4297, %v4288
  %v4299 = vsel %vm4292, %v4295, %v4298
  %v4300 = vsel %vm4289, nan, %v4299
  %v4301 = vand.u32 2147483647, %v3768
  %vm4302 = vcmp.le.f32.partialorder %v4301, 0.7853982
  %vm4303 = vcmp.lt.s32.totalorder %v3768, 0
  %v4304 = vand.u32 %v3768, 2139095040
  %v4305 = vshrl.u32 %v4304, 23
  %v4306 = vsub.s32 %v4305, 127
  %v4307 = vand.u32 2147483647, %v3768
  %v4308 = vand.u32 %v4307, 8388607
  %v4309 = vor.u32 %v4308, 8388608
  %v4310 = vsub.s32 0, %v4309
  %v4311 = vadd.s32 %v4306, 1
  %vm4312 = vcmp.gt.s32.totalorder %v4311, 0
  %v4313 = vsel %vm4312, %v4311, 0
  %v4314 = vshrl.u32 %v4313, 5
  %v4315 = vand.u32 %v4313, 31
  %v4316 = vsub.s32 32, %v4315
  %v4317 = vshrl.u32 683565275, %v4316
  %v4318 = vshll.u32 683565275, %v4315
  %v4319 = vshrl.u32 2475754826, %v4316
  %v4320 = vor.u32 %v4318, %v4319
  %v4321 = vshll.u32 2475754826, %v4315
  %v4322 = vshrl.u32 2131351028, %v4316
  %v4323 = vor.u32 %v4321, %v4322
  %v4324 = vshll.u32 2131351028, %v4315
  %v4325 = vshrl.u32 2102212464, %v4316
  %v4326 = vor.u32 %v4324, %v4325
  %v4327 = vshll.u32 2102212464, %v4315
  %v4328 = vshrl.u32 920167782, %v4316
  %v4329 = vor.u32 %v4327, %v4328
  %v4330 = vshll.u32 920167782, %v4315
  %v4331 = vshrl.u32 1326507024, %v4316
  %v4332 = vor.u32 %v4330, %v4331
  %vm4333 = vcmp.lt.s32.totalorder %v4314, 1
  %vm4334 = vcmp.lt.s32.totalorder %v4314, 2
  %vm4335 = vcmp.lt.s32.totalorder %v4314, 3
  %vm4336 = vcmp.lt.s32.totalorder %v4314, 4
  %v4337 = vsel %vm4333, %v4317, %v4320
  %v4338 = vsel %vm4336, %v4326, 2102212464
  %v4339 = vsel %vm4335, %v4323, %v4338
  %v4340 = vsel %vm4334, %v4337, %v4339
  %v4341 = vsel %vm4333, %v4320, %v4323
  %v4342 = vsel %vm4336, %v4329, 920167782
  %v4343 = vsel %vm4335, %v4326, %v4342
  %v4344 = vsel %vm4334, %v4341, %v4343
  %v4345 = vsel %vm4333, %v4323, %v4326
  %v4346 = vsel %vm4336, %v4332, 1326507024
  %v4347 = vsel %vm4335, %v4329, %v4346
  %v4348 = vsel %vm4334, %v4345, %v4347
  %v4349 = vshll.u32 %v4309, 8
  %v4350 = vmul.u32.u64.compose %v4349, %v4348
  %v4351 = vextract.low.u32 %v4350
  %v4352 = vextract.high.u32 %v4350
  %v4353 = vmul.u32.u64.compose %v4349, %v4344
  %v4354 = vextract.low.u32 %v4353
  %v4355 = vextract.high.u32 %v4353
  %v4356 = vmul.u32 %v4349, %v4340
  %v4357 = vadd.s32 %v4352, %v4354
  %vm4358 = vc.u32 %v4352, %v4354
  %v4359 = vadd.s32 %v4355, 1
  %v4360 = vsel %vm4358, %v4359, %v4355
  %v4361 = vadd.s32 %v4356, %v4360
  %v4362 = vadd.s32 %v4361, 536870912
  %v4363 = vshrl.u32 %v4362, 30
  %v4364 = vshll.u32 %v4363, 30
  %v4365 = vsub.s32 %v4361, %v4364
  %vm4366 = vcmp.lt.s32.totalorder %v4365, 0
  %v4367 = vsub.s32 0, %v4365
  %v4368 = vsel %vm4366, %v4367, %v4365
  %v4369 = vclz %v4368
  %v4370 = vsub.s32 %v4369, 2
  %vm4371 = vcmp.gt.s32.totalorder 0, %v4370
  %v4372 = vsel %vm4371, 0, %v4370
  %v4373 = vsub.s32 32, %v4372
  %v4374 = vshll.u32 %v4365, %v4372
  %v4375 = vshrl.u32 %v4357, %v4373
  %v4376 = vor.u32 %v4374, %v4375
  %v4377 = vsub.s32 4294967266, %v4372
  %v4378 = vadd.s32 %v4377, 127
  %v4379 = vshll.u32 %v4378, 23
  %v4380 = vor.u32 4788187, %v4379
  %v4381 = vand.u32 2147483647, %v4380
  %v4383 = vcvt.s32.f32 %v4376
  %v4384 = vmul.f32 %v4383, %v4381
  %v4385 = vxor.u32 %v4384, 2147483648
  %v4386 = vsel %vm4303, %v4385, %v4384
  %v4387 = vsub.s32 4, %v4363
  %v4388 = vsel %vm4303, %v4387, %v4363
  %v4389 = vsel %vm4302, %v3768, %v4386
  %v4390 = vsel %vm4302, 0, %v4388
  %v4391 = vcosq.f32.pop %v4389
  %v4392 = vsinq.f32.pop %v4389
  %vm4393 = vweird.f32 %v3768
  %v4394 = vadd.s32 %v4390, 3
  %v4395 = vand.u32 %v4394, 3
  %vm4396 = vcmp.lt.s32.totalorder %v4395, 2
  %vm4397 = vcmp.eq.s32.totalorder %v4395, 0
  %v4398 = vxor.u32 %v4392, 2147483648
  %v4399 = vsel %vm4397, %v4391, %v4398
  %vm4400 = vcmp.eq.s32.totalorder %v4395, 2
  %v4401 = vxor.u32 %v4391, 2147483648
  %v4402 = vsel %vm4400, %v4401, %v4392
  %v4403 = vsel %vm4396, %v4399, %v4402
  %v4404 = vsel %vm4393, nan, %v4403
  %v4405 = vand.u32 2147483647, %v3773
  %vm4406 = vcmp.le.f32.partialorder %v4405, 0.7853982
  %vm4407 = vcmp.lt.s32.totalorder %v3773, 0
  %v4408 = vand.u32 %v3773, 2139095040
  %v4409 = vshrl.u32 %v4408, 23
  %v4410 = vsub.s32 %v4409, 127
  %v4411 = vand.u32 2147483647, %v3773
  %v4412 = vand.u32 %v4411, 8388607
  %v4413 = vor.u32 %v4412, 8388608
  %v4414 = vsub.s32 0, %v4413
  %v4415 = vadd.s32 %v4410, 1
  %vm4416 = vcmp.gt.s32.totalorder %v4415, 0
  %v4417 = vsel %vm4416, %v4415, 0
  %v4418 = vshrl.u32 %v4417, 5
  %v4419 = vand.u32 %v4417, 31
  %v4420 = vsub.s32 32, %v4419
  %v4421 = vshrl.u32 683565275, %v4420
  %v4422 = vshll.u32 683565275, %v4419
  %v4423 = vshrl.u32 2475754826, %v4420
  %v4424 = vor.u32 %v4422, %v4423
  %v4425 = vshll.u32 2475754826, %v4419
  %v4426 = vshrl.u32 2131351028, %v4420
  %v4427 = vor.u32 %v4425, %v4426
  %v4428 = vshll.u32 2131351028, %v4419
  %v4429 = vshrl.u32 2102212464, %v4420
  %v4430 = vor.u32 %v4428, %v4429
  %v4431 = vshll.u32 2102212464, %v4419
  %v4432 = vshrl.u32 920167782, %v4420
  %v4433 = vor.u32 %v4431, %v4432
  %v4434 = vshll.u32 920167782, %v4419
  %v4435 = vshrl.u32 1326507024, %v4420
  %v4436 = vor.u32 %v4434, %v4435
  %vm4437 = vcmp.lt.s32.totalorder %v4418, 1
  %vm4438 = vcmp.lt.s32.totalorder %v4418, 2
  %vm4439 = vcmp.lt.s32.totalorder %v4418, 3
  %vm4440 = vcmp.lt.s32.totalorder %v4418, 4
  %v4441 = vsel %vm4437, %v4421, %v4424
  %v4442 = vsel %vm4440, %v4430, 2102212464
  %v4443 = vsel %vm4439, %v4427, %v4442
  %v4444 = vsel %vm4438, %v4441, %v4443
  %v4445 = vsel %vm4437, %v4424, %v4427
  %v4446 = vsel %vm4440, %v4433, 920167782
  %v4447 = vsel %vm4439, %v4430, %v4446
  %v4448 = vsel %vm4438, %v4445, %v4447
  %v4449 = vsel %vm4437, %v4427, %v4430
  %v4450 = vsel %vm4440, %v4436, 1326507024
  %v4451 = vsel %vm4439, %v4433, %v4450
  %v4452 = vsel %vm4438, %v4449, %v4451
  %v4453 = vshll.u32 %v4413, 8
  %v4454 = vmul.u32.u64.compose %v4453, %v4452
  %v4455 = vextract.low.u32 %v4454
  %v4456 = vextract.high.u32 %v4454
  %v4457 = vmul.u32.u64.compose %v4453, %v4448
  %v4458 = vextract.low.u32 %v4457
  %v4459 = vextract.high.u32 %v4457
  %v4460 = vmul.u32 %v4453, %v4444
  %v4461 = vadd.s32 %v4456, %v4458
  %vm4462 = vc.u32 %v4456, %v4458
  %v4463 = vadd.s32 %v4459, 1
  %v4464 = vsel %vm4462, %v4463, %v4459
  %v4465 = vadd.s32 %v4460, %v4464
  %v4466 = vadd.s32 %v4465, 536870912
  %v4467 = vshrl.u32 %v4466, 30
  %v4468 = vshll.u32 %v4467, 30
  %v4469 = vsub.s32 %v4465, %v4468
  %vm4470 = vcmp.lt.s32.totalorder %v4469, 0
  %v4471 = vsub.s32 0, %v4469
  %v4472 = vsel %vm4470, %v4471, %v4469
  %v4473 = vclz %v4472
  %v4474 = vsub.s32 %v4473, 2
  %vm4475 = vcmp.gt.s32.totalorder 0, %v4474
  %v4476 = vsel %vm4475, 0, %v4474
  %v4477 = vsub.s32 32, %v4476
  %v4478 = vshll.u32 %v4469, %v4476
  %v4479 = vshrl.u32 %v4461, %v4477
  %v4480 = vor.u32 %v4478, %v4479
  %v4481 = vsub.s32 4294967266, %v4476
  %v4482 = vadd.s32 %v4481, 127
  %v4483 = vshll.u32 %v4482, 23
  %v4484 = vor.u32 4788187, %v4483
  %v4485 = vand.u32 2147483647, %v4484
  %v4487 = vcvt.s32.f32 %v4480
  %v4488 = vmul.f32 %v4487, %v4485
  %v4489 = vxor.u32 %v4488, 2147483648
  %v4490 = vsel %vm4407, %v4489, %v4488
  %v4491 = vsub.s32 4, %v4467
  %v4492 = vsel %vm4407, %v4491, %v4467
  %v4493 = vsel %vm4406, %v3773, %v4490
  %v4494 = vsel %vm4406, 0, %v4492
  %v4495 = vcosq.f32.pop %v4493
  %v4496 = vsinq.f32.pop %v4493
  %vm4497 = vweird.f32 %v3773
  %v4498 = vadd.s32 %v4494, 3
  %v4499 = vand.u32 %v4498, 3
  %vm4500 = vcmp.lt.s32.totalorder %v4499, 2
  %vm4501 = vcmp.eq.s32.totalorder %v4499, 0
  %v4502 = vxor.u32 %v4496, 2147483648
  %v4503 = vsel %vm4501, %v4495, %v4502
  %vm4504 = vcmp.eq.s32.totalorder %v4499, 2
  %v4505 = vxor.u32 %v4495, 2147483648
  %v4506 = vsel %vm4504, %v4505, %v4496
  %v4507 = vsel %vm4500, %v4503, %v4506
  %v4508 = vsel %vm4497, nan, %v4507
  %v4509 = vand.u32 2147483647, %v3778
  %vm4510 = vcmp.le.f32.partialorder %v4509, 0.7853982
  %vm4511 = vcmp.lt.s32.totalorder %v3778, 0
  %v4512 = vand.u32 %v3778, 2139095040
  %v4513 = vshrl.u32 %v4512, 23
  %v4514 = vsub.s32 %v4513, 127
  %v4515 = vand.u32 2147483647, %v3778
  %v4516 = vand.u32 %v4515, 8388607
  %v4517 = vor.u32 %v4516, 8388608
  %v4518 = vsub.s32 0, %v4517
  %v4519 = vadd.s32 %v4514, 1
  %vm4520 = vcmp.gt.s32.totalorder %v4519, 0
  %v4521 = vsel %vm4520, %v4519, 0
  %v4522 = vshrl.u32 %v4521, 5
  %v4523 = vand.u32 %v4521, 31
  %v4524 = vsub.s32 32, %v4523
  %v4525 = vshrl.u32 683565275, %v4524
  %v4526 = vshll.u32 683565275, %v4523
  %v4527 = vshrl.u32 2475754826, %v4524
  %v4528 = vor.u32 %v4526, %v4527
  %v4529 = vshll.u32 2475754826, %v4523
  %v4530 = vshrl.u32 2131351028, %v4524
  %v4531 = vor.u32 %v4529, %v4530
  %v4532 = vshll.u32 2131351028, %v4523
  %v4533 = vshrl.u32 2102212464, %v4524
  %v4534 = vor.u32 %v4532, %v4533
  %v4535 = vshll.u32 2102212464, %v4523
  %v4536 = vshrl.u32 920167782, %v4524
  %v4537 = vor.u32 %v4535, %v4536
  %v4538 = vshll.u32 920167782, %v4523
  %v4539 = vshrl.u32 1326507024, %v4524
  %v4540 = vor.u32 %v4538, %v4539
  %vm4541 = vcmp.lt.s32.totalorder %v4522, 1
  %vm4542 = vcmp.lt.s32.totalorder %v4522, 2
  %vm4543 = vcmp.lt.s32.totalorder %v4522, 3
  %vm4544 = vcmp.lt.s32.totalorder %v4522, 4
  %v4545 = vsel %vm4541, %v4525, %v4528
  %v4546 = vsel %vm4544, %v4534, 2102212464
  %v4547 = vsel %vm4543, %v4531, %v4546
  %v4548 = vsel %vm4542, %v4545, %v4547
  %v4549 = vsel %vm4541, %v4528, %v4531
  %v4550 = vsel %vm4544, %v4537, 920167782
  %v4551 = vsel %vm4543, %v4534, %v4550
  %v4552 = vsel %vm4542, %v4549, %v4551
  %v4553 = vsel %vm4541, %v4531, %v4534
  %v4554 = vsel %vm4544, %v4540, 1326507024
  %v4555 = vsel %vm4543, %v4537, %v4554
  %v4556 = vsel %vm4542, %v4553, %v4555
  %v4557 = vshll.u32 %v4517, 8
  %v4558 = vmul.u32.u64.compose %v4557, %v4556
  %v4559 = vextract.low.u32 %v4558
  %v4560 = vextract.high.u32 %v4558
  %v4561 = vmul.u32.u64.compose %v4557, %v4552
  %v4562 = vextract.low.u32 %v4561
  %v4563 = vextract.high.u32 %v4561
  %v4564 = vmul.u32 %v4557, %v4548
  %v4565 = vadd.s32 %v4560, %v4562
  %vm4566 = vc.u32 %v4560, %v4562
  %v4567 = vadd.s32 %v4563, 1
  %v4568 = vsel %vm4566, %v4567, %v4563
  %v4569 = vadd.s32 %v4564, %v4568
  %v4570 = vadd.s32 %v4569, 536870912
  %v4571 = vshrl.u32 %v4570, 30
  %v4572 = vshll.u32 %v4571, 30
  %v4573 = vsub.s32 %v4569, %v4572
  %vm4574 = vcmp.lt.s32.totalorder %v4573, 0
  %v4575 = vsub.s32 0, %v4573
  %v4576 = vsel %vm4574, %v4575, %v4573
  %v4577 = vclz %v4576
  %v4578 = vsub.s32 %v4577, 2
  %vm4579 = vcmp.gt.s32.totalorder 0, %v4578
  %v4580 = vsel %vm4579, 0, %v4578
  %v4581 = vsub.s32 32, %v4580
  %v4582 = vshll.u32 %v4573, %v4580
  %v4583 = vshrl.u32 %v4565, %v4581
  %v4584 = vor.u32 %v4582, %v4583
  %v4585 = vsub.s32 4294967266, %v4580
  %v4586 = vadd.s32 %v4585, 127
  %v4587 = vshll.u32 %v4586, 23
  %v4588 = vor.u32 4788187, %v4587
  %v4589 = vand.u32 2147483647, %v4588
  %v4591 = vcvt.s32.f32 %v4584
  %v4592 = vmul.f32 %v4591, %v4589
  %v4593 = vxor.u32 %v4592, 2147483648
  %v4594 = vsel %vm4511, %v4593, %v4592
  %v4595 = vsub.s32 4, %v4571
  %v4596 = vsel %vm4511, %v4595, %v4571
  %v4597 = vsel %vm4510, %v3778, %v4594
  %v4598 = vsel %vm4510, 0, %v4596
  %v4599 = vcosq.f32.pop %v4597
  %v4600 = vsinq.f32.pop %v4597
  %vm4601 = vweird.f32 %v3778
  %v4602 = vadd.s32 %v4598, 3
  %v4603 = vand.u32 %v4602, 3
  %vm4604 = vcmp.lt.s32.totalorder %v4603, 2
  %vm4605 = vcmp.eq.s32.totalorder %v4603, 0
  %v4606 = vxor.u32 %v4600, 2147483648
  %v4607 = vsel %vm4605, %v4599, %v4606
  %vm4608 = vcmp.eq.s32.totalorder %v4603, 2
  %v4609 = vxor.u32 %v4599, 2147483648
  %v4610 = vsel %vm4608, %v4609, %v4600
  %v4611 = vsel %vm4604, %v4607, %v4610
  %v4612 = vsel %vm4601, nan, %v4611
  %v4613 = vmul.f32 %v3884, %v3884
  %v4614 = vmul.f32 %v3988, %v3988
  %v4615 = vmul.f32 %v4092, %v4092
  %v4616 = vmul.f32 %v4196, %v4196
  %v4617 = vmul.f32 %v4300, %v4300
  %v4618 = vmul.f32 %v4404, %v4404
  %v4619 = vmul.f32 %v4508, %v4508
  %v4620 = vmul.f32 %v4612, %v4612
  %v4621 = vadd.f32 %v3743, %v4613
  %v4622 = vadd.f32 %v3748, %v4614
  %v4623 = vadd.f32 %v3753, %v4615
  %v4624 = vadd.f32 %v3758, %v4616
  %v4625 = vadd.f32 %v3763, %v4617
  %v4626 = vadd.f32 %v3768, %v4618
  %v4627 = vadd.f32 %v3773, %v4619
  %v4628 = vadd.f32 %v3778, %v4620
  %v4629 = vld [vmem:[%s5] sm:$0xff]
  %v4630 = vld [vmem:[%s5 + $0x8] sm:$0xff]
  %v4631 = vld [vmem:[%s5 + $0x10] sm:$0xff]
  %v4632 = vld [vmem:[%s5 + $0x18] sm:$0xff]
  %v4633 = vld [vmem:[%s7 + $0x120] sm:$0xff]
  %v4634 = vld [vmem:[%s7 + $0x128] sm:$0xff]
  %v4635 = vld [vmem:[%s7 + $0x130] sm:$0xff]
  %v4636 = vld [vmem:[%s7 + $0x138] sm:$0xff]
  %4638 = vset.pattern.permute.xlu0 0
  %4639 = vperm.xlu0 %4638, %v4633
  %v4640 = vpop.permute.xlu0 %4639
  %4643 = vset.pattern.permute.xlu0 0
  %4644 = vperm.xlu0 %4643, %v4634
  %v4645 = vpop.permute.xlu0 %4644
  %4648 = vset.pattern.permute.xlu0 0
  %4649 = vperm.xlu0 %4648, %v4635
  %v4650 = vpop.permute.xlu0 %4649
  %4653 = vset.pattern.permute.xlu0 0
  %4654 = vperm.xlu0 %4653, %v4636
  %v4655 = vpop.permute.xlu0 %4654
  %v4658 = vsel %vm1730, %v4629, 0
  %v4661 = vsel %vm1730, %v4630, 0
  %v4664 = vsel %vm1730, %v4631, 0
  %v4667 = vsel %vm1730, %v4632, 0
  %4669 = vmatprep.subr.mxu0 0.0
  %4670 = vmatpush1.msra.mxu0 0.0
  %4671 = vmatprep.subr.mxu0 0.0
  %4672 = vmatpush1.msra.mxu0 0.0
  %4673 = vmatprep.subr.mxu0 0.0
  %4674 = vmatpush1.msra.mxu0 0.0
  %4675 = vmatprep.subr.mxu0 0.0
  %4676 = vmatpush1.msra.mxu0 0.0
  %4677 = vmatprep.subr.mxu0 0.0
  %4678 = vmatpush1.msra.mxu0 0.0
  %4679 = vmatprep.subr.mxu0 0.0
  %4680 = vmatpush1.msra.mxu0 0.0
  %4681 = vmatprep.subr.mxu0 0.0
  %4682 = vmatpush1.msra.mxu0 0.0
  %4683 = vmatprep.subr.mxu0 0.0
  %4684 = vmatpush1.msra.mxu0 0.0
  %4685 = vmatprep.subr.mxu0 0.0
  %4686 = vmatpush1.msra.mxu0 %v4628
  %4687 = vmatprep.subr.mxu0 0.0
  %4688 = vmatpush1.msra.mxu0 %v4627
  %4689 = vmatprep.subr.mxu0 0.0
  %4690 = vmatpush1.msra.mxu0 %v4626
  %4691 = vmatprep.subr.mxu0 0.0
  %4692 = vmatpush1.msra.mxu0 %v4625
  %4693 = vmatprep.subr.mxu0 0.0
  %4694 = vmatpush1.msra.mxu0 %v4624
  %4695 = vmatprep.subr.mxu0 0.0
  %4696 = vmatpush1.msra.mxu0 %v4623
  %4697 = vmatprep.subr.mxu0 0.0
  %4698 = vmatpush1.msra.mxu0 %v4622
  %4699 = vmatprep.subr.mxu0 0.0
  %4700 = vmatpush1.msra.mxu0 %v4621
  %4701 = vmatprep.subr.mxu0 0.0
  %4702 = vmatpush2.msra.mxu0 0.0
  %4703 = vmatprep.subr.mxu0 0.0
  %4704 = vmatpush2.msra.mxu0 0.0
  %4705 = vmatprep.subr.mxu0 0.0
  %4706 = vmatpush2.msra.mxu0 0.0
  %4707 = vmatprep.subr.mxu0 0.0
  %4708 = vmatpush2.msra.mxu0 0.0
  %4709 = vmatprep.subr.mxu0 0.0
  %4710 = vmatpush2.msra.mxu0 0.0
  %4711 = vmatprep.subr.mxu0 0.0
  %4712 = vmatpush2.msra.mxu0 0.0
  %4713 = vmatprep.subr.mxu0 0.0
  %4714 = vmatpush2.msra.mxu0 0.0
  %4715 = vmatprep.subr.mxu0 0.0
  %4716 = vmatpush2.msra.mxu0 0.0
  %4717 = vmatprep.subr.mxu0 0.0
  %4718 = vmatpush2.msra.mxu0 0.0
  %4719 = vmatprep.subr.mxu0 0.0
  %4720 = vmatpush2.msra.mxu0 0.0
  %4721 = vmatprep.subr.mxu0 0.0
  %4722 = vmatpush2.msra.mxu0 0.0
  %4723 = vmatprep.subr.mxu0 0.0
  %4724 = vmatpush2.msra.mxu0 0.0
  %4725 = vmatprep.subr.mxu0 0.0
  %4726 = vmatpush2.msra.mxu0 0.0
  %4727 = vmatprep.subr.mxu0 0.0
  %4728 = vmatpush2.msra.mxu0 0.0
  %4729 = vmatprep.subr.mxu0 0.0
  %4730 = vmatpush2.msra.mxu0 0.0
  %4731 = vmatprep.subr.mxu0 0.0
  %4732 = vmatpush2.msra.mxu0 0.0
  %4733 = vmatprep.mubr.f32.mxu0 0.0
  %4734 = vmatmul.mubr.f32.gmra.mxu0 %v4658
  %v4735 = vpop.f32.mrf.mxu0
  %v4736 = vadd.f32 %v4640, %v4735
  %v4737 = vpop.f32.mrf.mxu0
  %4738 = vmatprep.mubr.f32.mxu0 0.0
  %4739 = vmatmul.mubr.f32.gmra.mxu0 %v4661
  %v4740 = vpop.f32.mrf.mxu0
  %v4741 = vadd.f32 %v4645, %v4740
  %v4742 = vpop.f32.mrf.mxu0
  %4743 = vmatprep.mubr.f32.mxu0 0.0
  %4744 = vmatmul.mubr.f32.gmra.mxu0 %v4664
  %v4745 = vpop.f32.mrf.mxu0
  %v4746 = vadd.f32 %v4650, %v4745
  %v4747 = vpop.f32.mrf.mxu0
  %4748 = vmatprep.mubr.f32.mxu0 0.0
  %4749 = vmatmul.mubr.f32.gmra.mxu0 %v4667
  %v4750 = vpop.f32.mrf.mxu0
  %v4751 = vadd.f32 %v4655, %v4750
  %v4752 = vpop.f32.mrf.mxu0
  %4753 = vdwg.mxu0
  %v4754 = vand.u32 2147483647, %v4736
  %vm4755 = vcmp.le.f32.partialorder %v4754, 0.7853982
  %vm4756 = vcmp.lt.s32.totalorder %v4736, 0
  %v4757 = vand.u32 %v4736, 2139095040
  %v4758 = vshrl.u32 %v4757, 23
  %v4759 = vsub.s32 %v4758, 127
  %v4760 = vand.u32 2147483647, %v4736
  %v4761 = vand.u32 %v4760, 8388607
  %v4762 = vor.u32 %v4761, 8388608
  %v4763 = vsub.s32 0, %v4762
  %v4764 = vadd.s32 %v4759, 1
  %vm4765 = vcmp.gt.s32.totalorder %v4764, 0
  %v4766 = vsel %vm4765, %v4764, 0
  %v4767 = vshrl.u32 %v4766, 5
  %v4768 = vand.u32 %v4766, 31
  %v4769 = vsub.s32 32, %v4768
  %v4770 = vshrl.u32 683565275, %v4769
  %v4771 = vshll.u32 683565275, %v4768
  %v4772 = vshrl.u32 2475754826, %v4769
  %v4773 = vor.u32 %v4771, %v4772
  %v4774 = vshll.u32 2475754826, %v4768
  %v4775 = vshrl.u32 2131351028, %v4769
  %v4776 = vor.u32 %v4774, %v4775
  %v4777 = vshll.u32 2131351028, %v4768
  %v4778 = vshrl.u32 2102212464, %v4769
  %v4779 = vor.u32 %v4777, %v4778
  %v4780 = vshll.u32 2102212464, %v4768
  %v4781 = vshrl.u32 920167782, %v4769
  %v4782 = vor.u32 %v4780, %v4781
  %v4783 = vshll.u32 920167782, %v4768
  %v4784 = vshrl.u32 1326507024, %v4769
  %v4785 = vor.u32 %v4783, %v4784
  %vm4786 = vcmp.lt.s32.totalorder %v4767, 1
  %vm4787 = vcmp.lt.s32.totalorder %v4767, 2
  %vm4788 = vcmp.lt.s32.totalorder %v4767, 3
  %vm4789 = vcmp.lt.s32.totalorder %v4767, 4
  %v4790 = vsel %vm4786, %v4770, %v4773
  %v4791 = vsel %vm4789, %v4779, 2102212464
  %v4792 = vsel %vm4788, %v4776, %v4791
  %v4793 = vsel %vm4787, %v4790, %v4792
  %v4794 = vsel %vm4786, %v4773, %v4776
  %v4795 = vsel %vm4789, %v4782, 920167782
  %v4796 = vsel %vm4788, %v4779, %v4795
  %v4797 = vsel %vm4787, %v4794, %v4796
  %v4798 = vsel %vm4786, %v4776, %v4779
  %v4799 = vsel %vm4789, %v4785, 1326507024
  %v4800 = vsel %vm4788, %v4782, %v4799
  %v4801 = vsel %vm4787, %v4798, %v4800
  %v4802 = vshll.u32 %v4762, 8
  %v4803 = vmul.u32.u64.compose %v4802, %v4801
  %v4804 = vextract.low.u32 %v4803
  %v4805 = vextract.high.u32 %v4803
  %v4806 = vmul.u32.u64.compose %v4802, %v4797
  %v4807 = vextract.low.u32 %v4806
  %v4808 = vextract.high.u32 %v4806
  %v4809 = vmul.u32 %v4802, %v4793
  %v4810 = vadd.s32 %v4805, %v4807
  %vm4811 = vc.u32 %v4805, %v4807
  %v4812 = vadd.s32 %v4808, 1
  %v4813 = vsel %vm4811, %v4812, %v4808
  %v4814 = vadd.s32 %v4809, %v4813
  %v4815 = vadd.s32 %v4814, 536870912
  %v4816 = vshrl.u32 %v4815, 30
  %v4817 = vshll.u32 %v4816, 30
  %v4818 = vsub.s32 %v4814, %v4817
  %vm4819 = vcmp.lt.s32.totalorder %v4818, 0
  %v4820 = vsub.s32 0, %v4818
  %v4821 = vsel %vm4819, %v4820, %v4818
  %v4822 = vclz %v4821
  %v4823 = vsub.s32 %v4822, 2
  %vm4824 = vcmp.gt.s32.totalorder 0, %v4823
  %v4825 = vsel %vm4824, 0, %v4823
  %v4826 = vsub.s32 32, %v4825
  %v4827 = vshll.u32 %v4818, %v4825
  %v4828 = vshrl.u32 %v4810, %v4826
  %v4829 = vor.u32 %v4827, %v4828
  %v4830 = vsub.s32 4294967266, %v4825
  %v4831 = vadd.s32 %v4830, 127
  %v4832 = vshll.u32 %v4831, 23
  %v4833 = vor.u32 4788187, %v4832
  %v4834 = vand.u32 2147483647, %v4833
  %v4836 = vcvt.s32.f32 %v4829
  %v4837 = vmul.f32 %v4836, %v4834
  %v4838 = vxor.u32 %v4837, 2147483648
  %v4839 = vsel %vm4756, %v4838, %v4837
  %v4840 = vsub.s32 4, %v4816
  %v4841 = vsel %vm4756, %v4840, %v4816
  %v4842 = vsel %vm4755, %v4736, %v4839
  %v4843 = vsel %vm4755, 0, %v4841
  %v4844 = vcosq.f32.pop %v4842
  %v4845 = vsinq.f32.pop %v4842
  %vm4846 = vweird.f32 %v4736
  %v4847 = vadd.s32 %v4843, 3
  %v4848 = vand.u32 %v4847, 3
  %vm4849 = vcmp.lt.s32.totalorder %v4848, 2
  %vm4850 = vcmp.eq.s32.totalorder %v4848, 0
  %v4851 = vxor.u32 %v4845, 2147483648
  %v4852 = vsel %vm4850, %v4844, %v4851
  %vm4853 = vcmp.eq.s32.totalorder %v4848, 2
  %v4854 = vxor.u32 %v4844, 2147483648
  %v4855 = vsel %vm4853, %v4854, %v4845
  %v4856 = vsel %vm4849, %v4852, %v4855
  %v4857 = vsel %vm4846, nan, %v4856
  %v4858 = vand.u32 2147483647, %v4741
  %vm4859 = vcmp.le.f32.partialorder %v4858, 0.7853982
  %vm4860 = vcmp.lt.s32.totalorder %v4741, 0
  %v4861 = vand.u32 %v4741, 2139095040
  %v4862 = vshrl.u32 %v4861, 23
  %v4863 = vsub.s32 %v4862, 127
  %v4864 = vand.u32 2147483647, %v4741
  %v4865 = vand.u32 %v4864, 8388607
  %v4866 = vor.u32 %v4865, 8388608
  %v4867 = vsub.s32 0, %v4866
  %v4868 = vadd.s32 %v4863, 1
  %vm4869 = vcmp.gt.s32.totalorder %v4868, 0
  %v4870 = vsel %vm4869, %v4868, 0
  %v4871 = vshrl.u32 %v4870, 5
  %v4872 = vand.u32 %v4870, 31
  %v4873 = vsub.s32 32, %v4872
  %v4874 = vshrl.u32 683565275, %v4873
  %v4875 = vshll.u32 683565275, %v4872
  %v4876 = vshrl.u32 2475754826, %v4873
  %v4877 = vor.u32 %v4875, %v4876
  %v4878 = vshll.u32 2475754826, %v4872
  %v4879 = vshrl.u32 2131351028, %v4873
  %v4880 = vor.u32 %v4878, %v4879
  %v4881 = vshll.u32 2131351028, %v4872
  %v4882 = vshrl.u32 2102212464, %v4873
  %v4883 = vor.u32 %v4881, %v4882
  %v4884 = vshll.u32 2102212464, %v4872
  %v4885 = vshrl.u32 920167782, %v4873
  %v4886 = vor.u32 %v4884, %v4885
  %v4887 = vshll.u32 920167782, %v4872
  %v4888 = vshrl.u32 1326507024, %v4873
  %v4889 = vor.u32 %v4887, %v4888
  %vm4890 = vcmp.lt.s32.totalorder %v4871, 1
  %vm4891 = vcmp.lt.s32.totalorder %v4871, 2
  %vm4892 = vcmp.lt.s32.totalorder %v4871, 3
  %vm4893 = vcmp.lt.s32.totalorder %v4871, 4
  %v4894 = vsel %vm4890, %v4874, %v4877
  %v4895 = vsel %vm4893, %v4883, 2102212464
  %v4896 = vsel %vm4892, %v4880, %v4895
  %v4897 = vsel %vm4891, %v4894, %v4896
  %v4898 = vsel %vm4890, %v4877, %v4880
  %v4899 = vsel %vm4893, %v4886, 920167782
  %v4900 = vsel %vm4892, %v4883, %v4899
  %v4901 = vsel %vm4891, %v4898, %v4900
  %v4902 = vsel %vm4890, %v4880, %v4883
  %v4903 = vsel %vm4893, %v4889, 1326507024
  %v4904 = vsel %vm4892, %v4886, %v4903
  %v4905 = vsel %vm4891, %v4902, %v4904
  %v4906 = vshll.u32 %v4866, 8
  %v4907 = vmul.u32.u64.compose %v4906, %v4905
  %v4908 = vextract.low.u32 %v4907
  %v4909 = vextract.high.u32 %v4907
  %v4910 = vmul.u32.u64.compose %v4906, %v4901
  %v4911 = vextract.low.u32 %v4910
  %v4912 = vextract.high.u32 %v4910
  %v4913 = vmul.u32 %v4906, %v4897
  %v4914 = vadd.s32 %v4909, %v4911
  %vm4915 = vc.u32 %v4909, %v4911
  %v4916 = vadd.s32 %v4912, 1
  %v4917 = vsel %vm4915, %v4916, %v4912
  %v4918 = vadd.s32 %v4913, %v4917
  %v4919 = vadd.s32 %v4918, 536870912
  %v4920 = vshrl.u32 %v4919, 30
  %v4921 = vshll.u32 %v4920, 30
  %v4922 = vsub.s32 %v4918, %v4921
  %vm4923 = vcmp.lt.s32.totalorder %v4922, 0
  %v4924 = vsub.s32 0, %v4922
  %v4925 = vsel %vm4923, %v4924, %v4922
  %v4926 = vclz %v4925
  %v4927 = vsub.s32 %v4926, 2
  %vm4928 = vcmp.gt.s32.totalorder 0, %v4927
  %v4929 = vsel %vm4928, 0, %v4927
  %v4930 = vsub.s32 32, %v4929
  %v4931 = vshll.u32 %v4922, %v4929
  %v4932 = vshrl.u32 %v4914, %v4930
  %v4933 = vor.u32 %v4931, %v4932
  %v4934 = vsub.s32 4294967266, %v4929
  %v4935 = vadd.s32 %v4934, 127
  %v4936 = vshll.u32 %v4935, 23
  %v4937 = vor.u32 4788187, %v4936
  %v4938 = vand.u32 2147483647, %v4937
  %v4940 = vcvt.s32.f32 %v4933
  %v4941 = vmul.f32 %v4940, %v4938
  %v4942 = vxor.u32 %v4941, 2147483648
  %v4943 = vsel %vm4860, %v4942, %v4941
  %v4944 = vsub.s32 4, %v4920
  %v4945 = vsel %vm4860, %v4944, %v4920
  %v4946 = vsel %vm4859, %v4741, %v4943
  %v4947 = vsel %vm4859, 0, %v4945
  %v4948 = vcosq.f32.pop %v4946
  %v4949 = vsinq.f32.pop %v4946
  %vm4950 = vweird.f32 %v4741
  %v4951 = vadd.s32 %v4947, 3
  %v4952 = vand.u32 %v4951, 3
  %vm4953 = vcmp.lt.s32.totalorder %v4952, 2
  %vm4954 = vcmp.eq.s32.totalorder %v4952, 0
  %v4955 = vxor.u32 %v4949, 2147483648
  %v4956 = vsel %vm4954, %v4948, %v4955
  %vm4957 = vcmp.eq.s32.totalorder %v4952, 2
  %v4958 = vxor.u32 %v4948, 2147483648
  %v4959 = vsel %vm4957, %v4958, %v4949
  %v4960 = vsel %vm4953, %v4956, %v4959
  %v4961 = vsel %vm4950, nan, %v4960
  %v4962 = vand.u32 2147483647, %v4746
  %vm4963 = vcmp.le.f32.partialorder %v4962, 0.7853982
  %vm4964 = vcmp.lt.s32.totalorder %v4746, 0
  %v4965 = vand.u32 %v4746, 2139095040
  %v4966 = vshrl.u32 %v4965, 23
  %v4967 = vsub.s32 %v4966, 127
  %v4968 = vand.u32 2147483647, %v4746
  %v4969 = vand.u32 %v4968, 8388607
  %v4970 = vor.u32 %v4969, 8388608
  %v4971 = vsub.s32 0, %v4970
  %v4972 = vadd.s32 %v4967, 1
  %vm4973 = vcmp.gt.s32.totalorder %v4972, 0
  %v4974 = vsel %vm4973, %v4972, 0
  %v4975 = vshrl.u32 %v4974, 5
  %v4976 = vand.u32 %v4974, 31
  %v4977 = vsub.s32 32, %v4976
  %v4978 = vshrl.u32 683565275, %v4977
  %v4979 = vshll.u32 683565275, %v4976
  %v4980 = vshrl.u32 2475754826, %v4977
  %v4981 = vor.u32 %v4979, %v4980
  %v4982 = vshll.u32 2475754826, %v4976
  %v4983 = vshrl.u32 2131351028, %v4977
  %v4984 = vor.u32 %v4982, %v4983
  %v4985 = vshll.u32 2131351028, %v4976
  %v4986 = vshrl.u32 2102212464, %v4977
  %v4987 = vor.u32 %v4985, %v4986
  %v4988 = vshll.u32 2102212464, %v4976
  %v4989 = vshrl.u32 920167782, %v4977
  %v4990 = vor.u32 %v4988, %v4989
  %v4991 = vshll.u32 920167782, %v4976
  %v4992 = vshrl.u32 1326507024, %v4977
  %v4993 = vor.u32 %v4991, %v4992
  %vm4994 = vcmp.lt.s32.totalorder %v4975, 1
  %vm4995 = vcmp.lt.s32.totalorder %v4975, 2
  %vm4996 = vcmp.lt.s32.totalorder %v4975, 3
  %vm4997 = vcmp.lt.s32.totalorder %v4975, 4
  %v4998 = vsel %vm4994, %v4978, %v4981
  %v4999 = vsel %vm4997, %v4987, 2102212464
  %v5000 = vsel %vm4996, %v4984, %v4999
  %v5001 = vsel %vm4995, %v4998, %v5000
  %v5002 = vsel %vm4994, %v4981, %v4984
  %v5003 = vsel %vm4997, %v4990, 920167782
  %v5004 = vsel %vm4996, %v4987, %v5003
  %v5005 = vsel %vm4995, %v5002, %v5004
  %v5006 = vsel %vm4994, %v4984, %v4987
  %v5007 = vsel %vm4997, %v4993, 1326507024
  %v5008 = vsel %vm4996, %v4990, %v5007
  %v5009 = vsel %vm4995, %v5006, %v5008
  %v5010 = vshll.u32 %v4970, 8
  %v5011 = vmul.u32.u64.compose %v5010, %v5009
  %v5012 = vextract.low.u32 %v5011
  %v5013 = vextract.high.u32 %v5011
  %v5014 = vmul.u32.u64.compose %v5010, %v5005
  %v5015 = vextract.low.u32 %v5014
  %v5016 = vextract.high.u32 %v5014
  %v5017 = vmul.u32 %v5010, %v5001
  %v5018 = vadd.s32 %v5013, %v5015
  %vm5019 = vc.u32 %v5013, %v5015
  %v5020 = vadd.s32 %v5016, 1
  %v5021 = vsel %vm5019, %v5020, %v5016
  %v5022 = vadd.s32 %v5017, %v5021
  %v5023 = vadd.s32 %v5022, 536870912
  %v5024 = vshrl.u32 %v5023, 30
  %v5025 = vshll.u32 %v5024, 30
  %v5026 = vsub.s32 %v5022, %v5025
  %vm5027 = vcmp.lt.s32.totalorder %v5026, 0
  %v5028 = vsub.s32 0, %v5026
  %v5029 = vsel %vm5027, %v5028, %v5026
  %v5030 = vclz %v5029
  %v5031 = vsub.s32 %v5030, 2
  %vm5032 = vcmp.gt.s32.totalorder 0, %v5031
  %v5033 = vsel %vm5032, 0, %v5031
  %v5034 = vsub.s32 32, %v5033
  %v5035 = vshll.u32 %v5026, %v5033
  %v5036 = vshrl.u32 %v5018, %v5034
  %v5037 = vor.u32 %v5035, %v5036
  %v5038 = vsub.s32 4294967266, %v5033
  %v5039 = vadd.s32 %v5038, 127
  %v5040 = vshll.u32 %v5039, 23
  %v5041 = vor.u32 4788187, %v5040
  %v5042 = vand.u32 2147483647, %v5041
  %v5044 = vcvt.s32.f32 %v5037
  %v5045 = vmul.f32 %v5044, %v5042
  %v5046 = vxor.u32 %v5045, 2147483648
  %v5047 = vsel %vm4964, %v5046, %v5045
  %v5048 = vsub.s32 4, %v5024
  %v5049 = vsel %vm4964, %v5048, %v5024
  %v5050 = vsel %vm4963, %v4746, %v5047
  %v5051 = vsel %vm4963, 0, %v5049
  %v5052 = vcosq.f32.pop %v5050
  %v5053 = vsinq.f32.pop %v5050
  %vm5054 = vweird.f32 %v4746
  %v5055 = vadd.s32 %v5051, 3
  %v5056 = vand.u32 %v5055, 3
  %vm5057 = vcmp.lt.s32.totalorder %v5056, 2
  %vm5058 = vcmp.eq.s32.totalorder %v5056, 0
  %v5059 = vxor.u32 %v5053, 2147483648
  %v5060 = vsel %vm5058, %v5052, %v5059
  %vm5061 = vcmp.eq.s32.totalorder %v5056, 2
  %v5062 = vxor.u32 %v5052, 2147483648
  %v5063 = vsel %vm5061, %v5062, %v5053
  %v5064 = vsel %vm5057, %v5060, %v5063
  %v5065 = vsel %vm5054, nan, %v5064
  %v5066 = vand.u32 2147483647, %v4751
  %vm5067 = vcmp.le.f32.partialorder %v5066, 0.7853982
  %vm5068 = vcmp.lt.s32.totalorder %v4751, 0
  %v5069 = vand.u32 %v4751, 2139095040
  %v5070 = vshrl.u32 %v5069, 23
  %v5071 = vsub.s32 %v5070, 127
  %v5072 = vand.u32 2147483647, %v4751
  %v5073 = vand.u32 %v5072, 8388607
  %v5074 = vor.u32 %v5073, 8388608
  %v5075 = vsub.s32 0, %v5074
  %v5076 = vadd.s32 %v5071, 1
  %vm5077 = vcmp.gt.s32.totalorder %v5076, 0
  %v5078 = vsel %vm5077, %v5076, 0
  %v5079 = vshrl.u32 %v5078, 5
  %v5080 = vand.u32 %v5078, 31
  %v5081 = vsub.s32 32, %v5080
  %v5082 = vshrl.u32 683565275, %v5081
  %v5083 = vshll.u32 683565275, %v5080
  %v5084 = vshrl.u32 2475754826, %v5081
  %v5085 = vor.u32 %v5083, %v5084
  %v5086 = vshll.u32 2475754826, %v5080
  %v5087 = vshrl.u32 2131351028, %v5081
  %v5088 = vor.u32 %v5086, %v5087
  %v5089 = vshll.u32 2131351028, %v5080
  %v5090 = vshrl.u32 2102212464, %v5081
  %v5091 = vor.u32 %v5089, %v5090
  %v5092 = vshll.u32 2102212464, %v5080
  %v5093 = vshrl.u32 920167782, %v5081
  %v5094 = vor.u32 %v5092, %v5093
  %v5095 = vshll.u32 920167782, %v5080
  %v5096 = vshrl.u32 1326507024, %v5081
  %v5097 = vor.u32 %v5095, %v5096
  %vm5098 = vcmp.lt.s32.totalorder %v5079, 1
  %vm5099 = vcmp.lt.s32.totalorder %v5079, 2
  %vm5100 = vcmp.lt.s32.totalorder %v5079, 3
  %vm5101 = vcmp.lt.s32.totalorder %v5079, 4
  %v5102 = vsel %vm5098, %v5082, %v5085
  %v5103 = vsel %vm5101, %v5091, 2102212464
  %v5104 = vsel %vm5100, %v5088, %v5103
  %v5105 = vsel %vm5099, %v5102, %v5104
  %v5106 = vsel %vm5098, %v5085, %v5088
  %v5107 = vsel %vm5101, %v5094, 920167782
  %v5108 = vsel %vm5100, %v5091, %v5107
  %v5109 = vsel %vm5099, %v5106, %v5108
  %v5110 = vsel %vm5098, %v5088, %v5091
  %v5111 = vsel %vm5101, %v5097, 1326507024
  %v5112 = vsel %vm5100, %v5094, %v5111
  %v5113 = vsel %vm5099, %v5110, %v5112
  %v5114 = vshll.u32 %v5074, 8
  %v5115 = vmul.u32.u64.compose %v5114, %v5113
  %v5116 = vextract.low.u32 %v5115
  %v5117 = vextract.high.u32 %v5115
  %v5118 = vmul.u32.u64.compose %v5114, %v5109
  %v5119 = vextract.low.u32 %v5118
  %v5120 = vextract.high.u32 %v5118
  %v5121 = vmul.u32 %v5114, %v5105
  %v5122 = vadd.s32 %v5117, %v5119
  %vm5123 = vc.u32 %v5117, %v5119
  %v5124 = vadd.s32 %v5120, 1
  %v5125 = vsel %vm5123, %v5124, %v5120
  %v5126 = vadd.s32 %v5121, %v5125
  %v5127 = vadd.s32 %v5126, 536870912
  %v5128 = vshrl.u32 %v5127, 30
  %v5129 = vshll.u32 %v5128, 30
  %v5130 = vsub.s32 %v5126, %v5129
  %vm5131 = vcmp.lt.s32.totalorder %v5130, 0
  %v5132 = vsub.s32 0, %v5130
  %v5133 = vsel %vm5131, %v5132, %v5130
  %v5134 = vclz %v5133
  %v5135 = vsub.s32 %v5134, 2
  %vm5136 = vcmp.gt.s32.totalorder 0, %v5135
  %v5137 = vsel %vm5136, 0, %v5135
  %v5138 = vsub.s32 32, %v5137
  %v5139 = vshll.u32 %v5130, %v5137
  %v5140 = vshrl.u32 %v5122, %v5138
  %v5141 = vor.u32 %v5139, %v5140
  %v5142 = vsub.s32 4294967266, %v5137
  %v5143 = vadd.s32 %v5142, 127
  %v5144 = vshll.u32 %v5143, 23
  %v5145 = vor.u32 4788187, %v5144
  %v5146 = vand.u32 2147483647, %v5145
  %v5148 = vcvt.s32.f32 %v5141
  %v5149 = vmul.f32 %v5148, %v5146
  %v5150 = vxor.u32 %v5149, 2147483648
  %v5151 = vsel %vm5068, %v5150, %v5149
  %v5152 = vsub.s32 4, %v5128
  %v5153 = vsel %vm5068, %v5152, %v5128
  %v5154 = vsel %vm5067, %v4751, %v5151
  %v5155 = vsel %vm5067, 0, %v5153
  %v5156 = vcosq.f32.pop %v5154
  %v5157 = vsinq.f32.pop %v5154
  %vm5158 = vweird.f32 %v4751
  %v5159 = vadd.s32 %v5155, 3
  %v5160 = vand.u32 %v5159, 3
  %vm5161 = vcmp.lt.s32.totalorder %v5160, 2
  %vm5162 = vcmp.eq.s32.totalorder %v5160, 0
  %v5163 = vxor.u32 %v5157, 2147483648
  %v5164 = vsel %vm5162, %v5156, %v5163
  %vm5165 = vcmp.eq.s32.totalorder %v5160, 2
  %v5166 = vxor.u32 %v5156, 2147483648
  %v5167 = vsel %vm5165, %v5166, %v5157
  %v5168 = vsel %vm5161, %v5164, %v5167
  %v5169 = vsel %vm5158, nan, %v5168
  %v5170 = vmul.f32 %v4857, %v4857
  %v5171 = vmul.f32 %v4961, %v4961
  %v5172 = vmul.f32 %v5065, %v5065
  %v5173 = vmul.f32 %v5169, %v5169
  %v5174 = vadd.f32 %v4736, %v5170
  %v5175 = vadd.f32 %v4741, %v5171
  %v5176 = vadd.f32 %v4746, %v5172
  %v5177 = vadd.f32 %v4751, %v5173
  %v5178 = vld [vmem:[%s6] sm:$0x1]
  %v5179 = vld [vmem:[%s7 + $0x140] sm:$0x1]
  %5181 = vset.pattern.permute.xlu0 0
  %5182 = vperm.xlu0 %5181, %v5179
  %v5183 = vpop.permute.xlu0 %5182
  %v5186 = vsel %vm640, %v5178, 0
  %5188 = vmatprep.subr.mxu0 0.0
  %5189 = vmatpush1.msra.mxu0 0.0
  %5190 = vmatprep.subr.mxu0 0.0
  %5191 = vmatpush1.msra.mxu0 0.0
  %5192 = vmatprep.subr.mxu0 0.0
  %5193 = vmatpush1.msra.mxu0 0.0
  %5194 = vmatprep.subr.mxu0 0.0
  %5195 = vmatpush1.msra.mxu0 0.0
  %5196 = vmatprep.subr.mxu0 0.0
  %5197 = vmatpush1.msra.mxu0 0.0
  %5198 = vmatprep.subr.mxu0 0.0
  %5199 = vmatpush1.msra.mxu0 0.0
  %5200 = vmatprep.subr.mxu0 0.0
  %5201 = vmatpush1.msra.mxu0 0.0
  %5202 = vmatprep.subr.mxu0 0.0
  %5203 = vmatpush1.msra.mxu0 0.0
  %5204 = vmatprep.subr.mxu0 0.0
  %5205 = vmatpush1.msra.mxu0 0.0
  %5206 = vmatprep.subr.mxu0 0.0
  %5207 = vmatpush1.msra.mxu0 0.0
  %5208 = vmatprep.subr.mxu0 0.0
  %5209 = vmatpush1.msra.mxu0 0.0
  %5210 = vmatprep.subr.mxu0 0.0
  %5211 = vmatpush1.msra.mxu0 0.0
  %5212 = vmatprep.subr.mxu0 0.0
  %5213 = vmatpush1.msra.mxu0 %v5177
  %5214 = vmatprep.subr.mxu0 0.0
  %5215 = vmatpush1.msra.mxu0 %v5176
  %5216 = vmatprep.subr.mxu0 0.0
  %5217 = vmatpush1.msra.mxu0 %v5175
  %5218 = vmatprep.subr.mxu0 0.0
  %5219 = vmatpush1.msra.mxu0 %v5174
  %5220 = vmatprep.subr.mxu0 0.0
  %5221 = vmatpush2.msra.mxu0 0.0
  %5222 = vmatprep.subr.mxu0 0.0
  %5223 = vmatpush2.msra.mxu0 0.0
  %5224 = vmatprep.subr.mxu0 0.0
  %5225 = vmatpush2.msra.mxu0 0.0
  %5226 = vmatprep.subr.mxu0 0.0
  %5227 = vmatpush2.msra.mxu0 0.0
  %5228 = vmatprep.subr.mxu0 0.0
  %5229 = vmatpush2.msra.mxu0 0.0
  %5230 = vmatprep.subr.mxu0 0.0
  %5231 = vmatpush2.msra.mxu0 0.0
  %5232 = vmatprep.subr.mxu0 0.0
  %5233 = vmatpush2.msra.mxu0 0.0
  %5234 = vmatprep.subr.mxu0 0.0
  %5235 = vmatpush2.msra.mxu0 0.0
  %5236 = vmatprep.subr.mxu0 0.0
  %5237 = vmatpush2.msra.mxu0 0.0
  %5238 = vmatprep.subr.mxu0 0.0
  %5239 = vmatpush2.msra.mxu0 0.0
  %5240 = vmatprep.subr.mxu0 0.0
  %5241 = vmatpush2.msra.mxu0 0.0
  %5242 = vmatprep.subr.mxu0 0.0
  %5243 = vmatpush2.msra.mxu0 0.0
  %5244 = vmatprep.subr.mxu0 0.0
  %5245 = vmatpush2.msra.mxu0 0.0
  %5246 = vmatprep.subr.mxu0 0.0
  %5247 = vmatpush2.msra.mxu0 0.0
  %5248 = vmatprep.subr.mxu0 0.0
  %5249 = vmatpush2.msra.mxu0 0.0
  %5250 = vmatprep.subr.mxu0 0.0
  %5251 = vmatpush2.msra.mxu0 0.0
  %5252 = vmatprep.mubr.f32.mxu0 0.0
  %5253 = vmatmul.mubr.f32.gmra.mxu0 %v5186
  %v5254 = vpop.f32.mrf.mxu0
  %v5255 = vadd.f32 %v5183, %v5254
  %v5256 = vpop.f32.mrf.mxu0
  %5257 = vdwg.mxu0
  %v5258 = vtanh.pop %v5255
  %v5259 = vmul.f32 %v5258, 3.1415927
  %5260 = vst [vmem:[%s8] sm:$0x1] %v5259
  // Predicated region
  $region34: #{neural_network_forward.1} parent=0 // pred_check
    _
  $region35: #{neural_network_forward.1} parent=0 // pred_check_branch
    %5262 = sbr.rel (0) target = $region37
  $region36: #{neural_network_forward.1} parent=0 // pred_region
    _
  $region37: #{neural_network_forward.1} parent=0 // pred_fallthru
    _
  // Predicated region
  $region38: #{neural_network_forward.1} parent=0 // pred_check
    _
  $region39: #{neural_network_forward.1} parent=0 // pred_check_branch
    %5264 = sbr.rel (0) target = $region41
  $region40: #{neural_network_forward.1} parent=0 // pred_region
    _
  $region41: #{neural_network_forward.1} parent=0 // pred_fallthru
    _

</llo_original>
